<compile_context>
chip_gen: v6e
topology: v6e:2x2x1
jax: 0.10.0
libtpu: 0.0.40
codegen_flags: <defaults>
</compile_context>

<pallas_src>
import functools

import jax
import jax.numpy as jnp
from jax.experimental import pallas as pl
from jax.experimental.pallas import tpu as pltpu

_LANE = 128
_SUBLANE = 8


def _round_up(n, m):
    return -(-n // m) * m


def _make_kernel(compute_dtype):
    exact = jnp.dtype(compute_dtype) == jnp.dtype(jnp.float32)
    precision = jax.lax.Precision.HIGHEST if exact else None

    def kernel(x_ref, w1_ref, b1_ref, w2_ref, b2_ref, o_ref):
        # In-kernel cast (f32 -> bf16 when compute_dtype is bf16); keeps the wrapper
        # free of an extra un-fused XLA pass over x.
        x = x_ref[...].astype(compute_dtype)
        # hidden = relu(x @ W1t + b1): MXU matmul with f32 accumulation, f32 epilogue.
        h = jnp.dot(x, w1_ref[...],
                    preferred_element_type=jnp.float32, precision=precision)
        h = jnp.maximum(h + b1_ref[...], 0.0)
        # out = hidden @ W2t + b2.  N is NOT lane-padded: 16-lane stores are masked,
        # but for this HBM-writeback-bound kernel fewer DMA bytes wins.
        o = jnp.dot(h.astype(w2_ref.dtype), w2_ref[...],
                    preferred_element_type=jnp.float32, precision=precision)
        o_ref[...] = (o + b2_ref[...]).astype(o_ref.dtype)

    return kernel


def prepare_mlp_params(w1, b1, w2, b2, compute_dtype=jnp.bfloat16):
    """One-time parameter preprocessing (hoisted out of the per-call path).

    torch.nn.Linear layout in: w1 (H, Kin), b1 (H,), w2 (N, H), b2 (N,).
    Returns transposed params; only the hidden dim is lane-padded:
      w1t (Kin, Hp) compute_dtype, b1 (1, Hp) f32,
      w2t (Hp, N)  compute_dtype, b2 (1, N)  f32.
    Padded b1 / W1t / W2t entries are exactly zero, so relu(0)=0 hidden columns
    contribute nothing to the second matmul -- semantics stay exact.
    """
    H, Kin = w1.shape
    N = w2.shape[0]
    Hp = _round_up(H, _LANE)

    w1f = jnp.asarray(w1, jnp.float32)
    w2f = jnp.asarray(w2, jnp.float32)
    w1t = jnp.zeros((Kin, Hp), compute_dtype).at[:, :H].set(
        w1f.T.astype(compute_dtype))
    b1r = jnp.zeros((1, Hp), jnp.float32).at[:, :H].set(
        jnp.asarray(b1, jnp.float32).reshape(1, H))
    w2t = jnp.zeros((Hp, N), compute_dtype).at[:H, :].set(
        w2f.T.astype(compute_dtype))
    b2r = jnp.asarray(b2, jnp.float32).reshape(1, N)
    return dict(w1t=w1t, b1=b1r, w2t=w2t, b2=b2r,
                compute_dtype=jnp.dtype(compute_dtype))


def mlp_forward(x, params, *, block_m=512, out_dtype=jnp.float32):
    """x: (M, input_dim) f32; params from prepare_mlp_params. Returns (M, output_dim)."""
    w1t, b1, w2t, b2 = params["w1t"], params["b1"], params["w2t"], params["b2"]
    compute_dtype = params["compute_dtype"]
    M, Kin = x.shape
    Hp = w1t.shape[1]
    N = w2t.shape[1]

    # Batch tile: multiple of 8 sublanes, capped so the grid has >=2 steps whenever
    # possible (v7x megacore needs >=2 "parallel" tiles to use both TensorCores);
    # large default block_m amortizes per-step overhead on single-TC v5e/v6e.
    if M > _SUBLANE:
        tm = min(block_m, _round_up(pl.cdiv(M, 2), _SUBLANE))
    else:
        tm = _round_up(M, _SUBLANE)
    grid = (pl.cdiv(M, tm),)  # partial last tile: OOB reads are discarded rows,
    # and OOB output stores are masked by Pallas' writeback.

    flops = 2 * M * (Kin * Hp + Hp * N)
    bytes_accessed = (
        x.size * x.dtype.itemsize
        + w1t.size * w1t.dtype.itemsize
        + w2t.size * w2t.dtype.itemsize
        + (b1.size + b2.size) * 4
        + M * N * jnp.dtype(out_dtype).itemsize)

    # TODO(synk): once input_dim/hidden_dim reach several hundred, add a K/H
    # reduction grid axis with an f32 VMEM accumulator and/or
    # pipeline_mode=pl.Buffered(1) on the resident weight specs so the
    # (double-buffered) weight footprint stays within v7x's 64 MiB VMEM.
    out = pl.pallas_call(
        _make_kernel(compute_dtype),
        out_shape=jax.ShapeDtypeStruct((M, N), out_dtype),
        grid_spec=pltpu.PrefetchScalarGridSpec(
            num_scalar_prefetch=0,
            grid=grid,
            in_specs=[
                pl.BlockSpec((tm, Kin), lambda i: (i, 0)),  # x tiles stream over M
                pl.BlockSpec((Kin, Hp), lambda i: (0, 0)),  # W1t resident in VMEM
                pl.BlockSpec((1, Hp), lambda i: (0, 0)),    # b1 resident
                pl.BlockSpec((Hp, N), lambda i: (0, 0)),    # W2t resident
                pl.BlockSpec((1, N), lambda i: (0, 0)),     # b2 resident
            ],
            out_specs=pl.BlockSpec((tm, N), lambda i: (i, 0)),
        ),
        compiler_params=pltpu.CompilerParams(
            dimension_semantics=("parallel",),  # M-tiles shard across v7x's 2 TCs
            vmem_limit_bytes=32 * 1024 * 1024,
        ),
        cost_estimate=pl.CostEstimate(
            flops=flops, transcendentals=0, bytes_accessed=bytes_accessed),
    )(x, w1t, b1, w2t, b2)
    return out


def _torch_linear_init(key, out_features, in_features, dtype=jnp.float32):
    """Deterministic init mirroring nn.Linear defaults."""
    kw, kb = jax.random.split(key)
    bound = 1.0 / jnp.sqrt(in_features)
    w = jax.random.uniform(kw, (out_features, in_features), dtype, -bound, bound)
    b = jax.random.uniform(kb, (out_features,), dtype, -bound, bound)
    return w, b


if __name__ == "__main__":
    # Shapes consistent with the module: batch=512 rows (2 grid steps),
    # input_dim=16, hidden_dim=32, output_dim=16.
    M, input_dim, hidden_dim, output_dim = 512, 16, 32, 16

    key = jax.random.PRNGKey(0)
    kx, k1, k2 = jax.random.split(key, 3)

    x = jax.random.normal(kx, (M, input_dim), jnp.float32)
    w1, b1 = _torch_linear_init(k1, hidden_dim, input_dim)
    w2, b2 = _torch_linear_init(k2, output_dim, hidden_dim)

    # Pure-JAX reference of the torch semantics at full f32 precision.
    dot_hi = functools.partial(jnp.matmul, precision=jax.lax.Precision.HIGHEST)
    ref = dot_hi(jnp.maximum(dot_hi(x, w1.T) + b1, 0.0), w2.T) + b2

    # 1) f32 compute path (precision=HIGHEST matmuls -> exact check).
    params_f32 = prepare_mlp_params(w1, b1, w2, b2, compute_dtype=jnp.float32)
    out_f32 = jax.block_until_ready(mlp_forward(x, params_f32))
    assert out_f32.shape == (M, output_dim)
    assert jnp.allclose(out_f32, ref, atol=1e-5, rtol=1e-5)

    # 2) bf16 MXU operands, f32 accumulation (production path).
    params_bf16 = prepare_mlp_params(w1, b1, w2, b2, compute_dtype=jnp.bfloat16)
    out_bf16 = jax.block_until_ready(mlp_forward(x, params_bf16))
    assert out_bf16.shape == (M, output_dim)
    assert jnp.allclose(out_bf16, ref, atol=3e-2, rtol=3e-2)

    # 3) bf16 output dtype (halves the dominant HBM writeback stream).
    out_bf16_o = jax.block_until_ready(
        mlp_forward(x, params_bf16, out_dtype=jnp.bfloat16))
    assert out_bf16_o.dtype == jnp.bfloat16
    assert jnp.allclose(out_bf16_o.astype(jnp.float32), ref, atol=5e-2, rtol=5e-2)

    # 4) M not divisible by the tile: exercises the cdiv grid / masked last tile.
    out_odd = jax.block_until_ready(mlp_forward(x[:300], params_f32))
    assert out_odd.shape == (300, output_dim)
    assert jnp.allclose(out_odd, ref[:300], atol=1e-5, rtol=1e-5)

    print("KERNEL_OK")
</pallas_src>

<mosaic_0001>
module attributes {stable_mosaic.version = 11 : i64} {
  func.func @kernel(%arg0: i32, %arg1: memref<256x16xf32, #tpu.memory_space<vmem>>, %arg2: memref<16x128xf32, #tpu.memory_space<vmem>>, %arg3: memref<1x128xf32, #tpu.memory_space<vmem>>, %arg4: memref<128x16xf32, #tpu.memory_space<vmem>>, %arg5: memref<1x16xf32, #tpu.memory_space<vmem>>, %arg6: memref<256x16xf32, #tpu.memory_space<vmem>>) attributes {dimension_semantics = [#tpu.dimension_semantics<parallel>], iteration_bounds = array<i64: 2>, scalar_prefetch = 0 : i64, scratch_operands = 0 : i64, tpu.core_type = #tpu.core_type<tc>, window_params = [{transform_indices = @transform_0, window_bounds = array<i64: 256, 16>}, {pipeline_mode = #tpu.pipeline_mode<synchronous>, transform_indices = @transform_1, window_bounds = array<i64: 16, 128>}, {pipeline_mode = #tpu.pipeline_mode<synchronous>, transform_indices = @transform_2, window_bounds = array<i64: 1, 128>}, {pipeline_mode = #tpu.pipeline_mode<synchronous>, transform_indices = @transform_3, window_bounds = array<i64: 128, 16>}, {pipeline_mode = #tpu.pipeline_mode<synchronous>, transform_indices = @transform_4, window_bounds = array<i64: 1, 16>}, {transform_indices = @transform_5, window_bounds = array<i64: 256, 16>}]} {
    %c0 = arith.constant 0 : index
    %c0_0 = arith.constant 0 : index
    %0 = vector.load %arg1[%c0, %c0_0] : memref<256x16xf32, #tpu.memory_space<vmem>>, vector<256x16xf32>
    %c0_1 = arith.constant 0 : index
    %c0_2 = arith.constant 0 : index
    %1 = vector.load %arg2[%c0_1, %c0_2] : memref<16x128xf32, #tpu.memory_space<vmem>>, vector<16x128xf32>
    %cst = arith.constant dense<0.000000e+00> : vector<256x128xf32>
    %2 = tpu.matmul %0, %1, %cst {dimension_numbers = #tpu.dot_dimension_numbers<[1], [0], [0], [1], [0, 0, 1, 1], [], []>, precision = #tpu.contract_precision<fp32>} : vector<256x16xf32>, vector<16x128xf32>, vector<256x128xf32> -> vector<256x128xf32>
    %c0_3 = arith.constant 0 : index
    %c0_4 = arith.constant 0 : index
    %3 = vector.load %arg3[%c0_3, %c0_4] : memref<1x128xf32, #tpu.memory_space<vmem>>, vector<1x128xf32>
    %4 = vector.broadcast %3 : vector<1x128xf32> to vector<256x128xf32>
    %5 = arith.addf %2, %4 : vector<256x128xf32>
    %cst_5 = arith.constant 0.000000e+00 : f32
    %6 = vector.broadcast %cst_5 : f32 to vector<256x128xf32>
    %7 = arith.maximumf %5, %6 : vector<256x128xf32>
    %c0_6 = arith.constant 0 : index
    %c0_7 = arith.constant 0 : index
    %8 = vector.load %arg4[%c0_6, %c0_7] : memref<128x16xf32, #tpu.memory_space<vmem>>, vector<128x16xf32>
    %cst_8 = arith.constant dense<0.000000e+00> : vector<256x16xf32>
    %9 = tpu.matmul %7, %8, %cst_8 {dimension_numbers = #tpu.dot_dimension_numbers<[1], [0], [0], [1], [0, 0, 1, 1], [], []>, precision = #tpu.contract_precision<fp32>} : vector<256x128xf32>, vector<128x16xf32>, vector<256x16xf32> -> vector<256x16xf32>
    %c0_9 = arith.constant 0 : index
    %c0_10 = arith.constant 0 : index
    %10 = vector.load %arg5[%c0_9, %c0_10] : memref<1x16xf32, #tpu.memory_space<vmem>>, vector<1x16xf32>
    %11 = vector.broadcast %10 : vector<1x16xf32> to vector<256x16xf32>
    %12 = arith.addf %9, %11 : vector<256x16xf32>
    %c0_11 = arith.constant 0 : index
    %c0_12 = arith.constant 0 : index
    %13 = vector.load %arg6[%c0_11, %c0_12] : memref<256x16xf32, #tpu.memory_space<vmem>>, vector<256x16xf32>
    tpu.vector_store %arg6[%c0_11, %c0_12], %12 {strides = array<i32>} : memref<256x16xf32, #tpu.memory_space<vmem>>, vector<256x16xf32>,
    return
  }
  func.func @transform_0(%arg0: i32) -> (i32, i32) {
    %c0_i32 = arith.constant 0 : i32
    %c0_i32_0 = arith.constant 0 : i32
    return %arg0, %c0_i32 : i32, i32
  }
  func.func @transform_1(%arg0: i32) -> (i32, i32) {
    %c0_i32 = arith.constant 0 : i32
    %c0_i32_0 = arith.constant 0 : i32
    %c0_i32_1 = arith.constant 0 : i32
    return %c0_i32, %c0_i32_0 : i32, i32
  }
  func.func @transform_2(%arg0: i32) -> (i32, i32) {
    %c0_i32 = arith.constant 0 : i32
    %c0_i32_0 = arith.constant 0 : i32
    %c0_i32_1 = arith.constant 0 : i32
    return %c0_i32, %c0_i32_0 : i32, i32
  }
  func.func @transform_3(%arg0: i32) -> (i32, i32) {
    %c0_i32 = arith.constant 0 : i32
    %c0_i32_0 = arith.constant 0 : i32
    %c0_i32_1 = arith.constant 0 : i32
    return %c0_i32, %c0_i32_0 : i32, i32
  }
  func.func @transform_4(%arg0: i32) -> (i32, i32) {
    %c0_i32 = arith.constant 0 : i32
    %c0_i32_0 = arith.constant 0 : i32
    %c0_i32_1 = arith.constant 0 : i32
    return %c0_i32, %c0_i32_0 : i32, i32
  }
  func.func @transform_5(%arg0: i32) -> (i32, i32) {
    %c0_i32 = arith.constant 0 : i32
    %c0_i32_0 = arith.constant 0 : i32
    return %arg0, %c0_i32 : i32, i32
  }
}

</mosaic_0001>

<llo_original>
// kernel: tpu_custom_call.1
$region0: #{tpu_custom_call.1}
  #allocation0 [shape = 'u32[]', space=smem, size = 0x4, offset = 0x4, fixed_abs, tag = 'smem constant byte address 0x4 - core index']
  #allocation1 [shape = 'u32[144,128]{1,0:T(1,128)}', space=vmem, size = 0x12000, scoped, tag = 'internal scratch']
  %s0 = inlined_call_operand.vmem [shape: f32[512,16], index: 0, kind: input, shape index: {}]
  %s1 = inlined_call_operand.vmem [shape: f32[16,128], index: 1, kind: input, shape index: {}]
  %s2 = inlined_call_operand.vmem [shape: f32[1,128], index: 2, kind: input, shape index: {}]
  %s3 = inlined_call_operand.vmem [shape: f32[128,16], index: 3, kind: input, shape index: {}]
  %s4 = inlined_call_operand.vmem [shape: f32[1,16], index: 4, kind: input, shape index: {}]
  %s5 = inlined_call_operand.vmem [shape: f32[512,16], index: 5, kind: output, shape index: {}]
  %s6 = sld [smem:[#allocation0]]
  $region53: #{tpu_custom_call.1} parent=0
    _
  %s8 = ssub.s32 1, %s6
  %s9 = scalar_select 0, %s8, %s6
  loop: start=0, step=1, limit=4
  $region2: #{tpu_custom_call.1} parent=0 // loop_pre_header
    _
  $region3: #{tpu_custom_call.1} parent=0 // loop_header
    %s11 = sphi 0, %s15
    %p12 = scmp.ge.s32.totalorder %s11, 4
    %s21 = sphi 0, %s23
    %s24 = sphi 0, %s21
    %s25 = sphi 0, %s24
    %s41 = sphi 0, %s25
    %s45 = sphi 0, %s45
    %s47 = sphi 0, %s45
    %s48 = sphi 0, %s47
    %s62 = sphi 0, %s48
    %s66 = sphi 0, %s66
    %s68 = sphi 0, %s66
    %s69 = sphi 0, %s68
    %s83 = sphi 0, %s69
    %s87 = sphi 0, %s87
    %s89 = sphi 0, %s87
    %s90 = sphi 0, %s89
    %s104 = sphi 0, %s90
    %s108 = sphi 0, %s108
    %s110 = sphi 0, %s108
    %s111 = sphi 0, %s110
    %s125 = sphi 0, %s111
    %s131 = sphi 0, %s133
    %s134 = sphi 0, %s131
    %s135 = sphi 0, %s134
    %s151 = sphi 0, %s135
  $region4: #{tpu_custom_call.1} parent=0 // loop_header_branch
    %14 = sbr.rel (%p12) target = $region8
  $region5: #{tpu_custom_call.1} parent=0 // loop_body
    %s16 = ssub.s32 %s11, 1
    %s17 = ssub.s32 %s11, 2
    %s18 = sadd.s32 %s11, 1
    %s19 = ssub.s32 %s11, %s18
    %p20 = scmp.eq.s32.totalorder %s19, 0
    %s22 = sadd.s32 %s21, 1
    %s23 = scalar_select %p20, %s21, %s22
    %p26 = pneg %p20
    %p27 = scmp.eq.s32.totalorder %s11, 1
    %p28 = por %p26, %p27
    %p29 = scmp.ne.s32.totalorder %s21, %s24
    %p30 = scmp.eq.s32.totalorder %s11, 0
    %p31 = por %p29, %p30
    %p32 = scmp.ne.s32.totalorder %s21, %s24
    %p33 = scmp.eq.s32.totalorder %s16, 1
    %p34 = por %p32, %p33
    %p35 = scmp.ne.s32.totalorder %s24, %s25
    %p36 = scmp.eq.s32.totalorder %s16, 0
    %p37 = por %p35, %p36
    %p38 = scmp.ne.s32.totalorder %s24, %s25
    %p39 = scmp.eq.s32.totalorder %s17, 1
    %p40 = por %p38, %p39
    %p42 = scmp.ne.s32.totalorder %s25, %s41
    %p43 = scmp.eq.s32.totalorder %s17, 0
    %p44 = por %p42, %p43
    %s46 = sadd.s32 %s45, 1
    %p49 = scmp.eq.s32.totalorder %s11, 1
    %p50 = scmp.ne.s32.totalorder %s45, %s47
    %p51 = scmp.eq.s32.totalorder %s11, 0
    %p52 = por %p50, %p51
    %p53 = scmp.ne.s32.totalorder %s45, %s47
    %p54 = scmp.eq.s32.totalorder %s16, 1
    %p55 = por %p53, %p54
    %p56 = scmp.ne.s32.totalorder %s47, %s48
    %p57 = scmp.eq.s32.totalorder %s16, 0
    %p58 = por %p56, %p57
    %p59 = scmp.ne.s32.totalorder %s47, %s48
    %p60 = scmp.eq.s32.totalorder %s17, 1
    %p61 = por %p59, %p60
    %p63 = scmp.ne.s32.totalorder %s48, %s62
    %p64 = scmp.eq.s32.totalorder %s17, 0
    %p65 = por %p63, %p64
    %s67 = sadd.s32 %s66, 1
    %p70 = scmp.eq.s32.totalorder %s11, 1
    %p71 = scmp.ne.s32.totalorder %s66, %s68
    %p72 = scmp.eq.s32.totalorder %s11, 0
    %p73 = por %p71, %p72
    %p74 = scmp.ne.s32.totalorder %s66, %s68
    %p75 = scmp.eq.s32.totalorder %s16, 1
    %p76 = por %p74, %p75
    %p77 = scmp.ne.s32.totalorder %s68, %s69
    %p78 = scmp.eq.s32.totalorder %s16, 0
    %p79 = por %p77, %p78
    %p80 = scmp.ne.s32.totalorder %s68, %s69
    %p81 = scmp.eq.s32.totalorder %s17, 1
    %p82 = por %p80, %p81
    %p84 = scmp.ne.s32.totalorder %s69, %s83
    %p85 = scmp.eq.s32.totalorder %s17, 0
    %p86 = por %p84, %p85
    %s88 = sadd.s32 %s87, 1
    %p91 = scmp.eq.s32.totalorder %s11, 1
    %p92 = scmp.ne.s32.totalorder %s87, %s89
    %p93 = scmp.eq.s32.totalorder %s11, 0
    %p94 = por %p92, %p93
    %p95 = scmp.ne.s32.totalorder %s87, %s89
    %p96 = scmp.eq.s32.totalorder %s16, 1
    %p97 = por %p95, %p96
    %p98 = scmp.ne.s32.totalorder %s89, %s90
    %p99 = scmp.eq.s32.totalorder %s16, 0
    %p100 = por %p98, %p99
    %p101 = scmp.ne.s32.totalorder %s89, %s90
    %p102 = scmp.eq.s32.totalorder %s17, 1
    %p103 = por %p101, %p102
    %p105 = scmp.ne.s32.totalorder %s90, %s104
    %p106 = scmp.eq.s32.totalorder %s17, 0
    %p107 = por %p105, %p106
    %s109 = sadd.s32 %s108, 1
    %p112 = scmp.eq.s32.totalorder %s11, 1
    %p113 = scmp.ne.s32.totalorder %s108, %s110
    %p114 = scmp.eq.s32.totalorder %s11, 0
    %p115 = por %p113, %p114
    %p116 = scmp.ne.s32.totalorder %s108, %s110
    %p117 = scmp.eq.s32.totalorder %s16, 1
    %p118 = por %p116, %p117
    %p119 = scmp.ne.s32.totalorder %s110, %s111
    %p120 = scmp.eq.s32.totalorder %s16, 0
    %p121 = por %p119, %p120
    %p122 = scmp.ne.s32.totalorder %s110, %s111
    %p123 = scmp.eq.s32.totalorder %s17, 1
    %p124 = por %p122, %p123
    %p126 = scmp.ne.s32.totalorder %s111, %s125
    %p127 = scmp.eq.s32.totalorder %s17, 0
    %p128 = por %p126, %p127
    %s129 = ssub.s32 %s11, %s18
    %p130 = scmp.eq.s32.totalorder %s129, 0
    %s132 = sadd.s32 %s131, 1
    %s133 = scalar_select %p130, %s131, %s132
    %p136 = pneg %p130
    %p137 = scmp.eq.s32.totalorder %s11, 1
    %p138 = por %p136, %p137
    %p139 = scmp.ne.s32.totalorder %s131, %s134
    %p140 = scmp.eq.s32.totalorder %s11, 0
    %p141 = por %p139, %p140
    %p142 = scmp.ne.s32.totalorder %s131, %s134
    %p143 = scmp.eq.s32.totalorder %s16, 1
    %p144 = por %p142, %p143
    %p145 = scmp.ne.s32.totalorder %s134, %s135
    %p146 = scmp.eq.s32.totalorder %s16, 0
    %p147 = por %p145, %p146
    %p148 = scmp.ne.s32.totalorder %s134, %s135
    %p149 = scmp.eq.s32.totalorder %s17, 1
    %p150 = por %p148, %p149
    %p152 = scmp.ne.s32.totalorder %s135, %s151
    %p153 = scmp.eq.s32.totalorder %s17, 0
    %p154 = por %p152, %p153
    %p155 = scmp.le.s32.totalorder 1, %s11
    %p156 = scmp.lt.s32.totalorder %s11, 3
    %p157 = pnand %p155, %p156
    %p158 = pneg %p157
    // Predicated region
    $region9: #{tpu_custom_call.1} parent=5 // pred_check
      _
    $region10: #{tpu_custom_call.1} parent=5 // pred_check_branch
      %160 = sbr.rel (%p157) target = $region12
    $region11: #{tpu_custom_call.1} parent=5 // pred_region
      %s161 = ssub.s32 %s11, 1
      // Predicated region
      $region13: #{tpu_custom_call.1} parent=11 // pred_check
        %p162 = pneg %p58
      $region14: #{tpu_custom_call.1} parent=11 // pred_check_branch
        %164 = sbr.rel (%p162) target = $region16
      $region15: #{tpu_custom_call.1} parent=11 // pred_region
        _
      $region16: #{tpu_custom_call.1} parent=11 // pred_fallthru
        _
      // Predicated region
      $region17: #{tpu_custom_call.1} parent=11 // pred_check
        %p165 = pneg %p79
      $region18: #{tpu_custom_call.1} parent=11 // pred_check_branch
        %167 = sbr.rel (%p165) target = $region20
      $region19: #{tpu_custom_call.1} parent=11 // pred_region
        _
      $region20: #{tpu_custom_call.1} parent=11 // pred_fallthru
        _
      // Predicated region
      $region21: #{tpu_custom_call.1} parent=11 // pred_check
        %p168 = pneg %p100
      $region22: #{tpu_custom_call.1} parent=11 // pred_check_branch
        %170 = sbr.rel (%p168) target = $region24
      $region23: #{tpu_custom_call.1} parent=11 // pred_region
        _
      $region24: #{tpu_custom_call.1} parent=11 // pred_fallthru
        _
      // Predicated region
      $region25: #{tpu_custom_call.1} parent=11 // pred_check
        %p171 = pneg %p121
      $region26: #{tpu_custom_call.1} parent=11 // pred_check_branch
        %173 = sbr.rel (%p171) target = $region28
      $region27: #{tpu_custom_call.1} parent=11 // pred_region
        _
      $region28: #{tpu_custom_call.1} parent=11 // pred_fallthru
        _
    $region12: #{tpu_custom_call.1} parent=5 // pred_fallthru
      _
    %p174 = scmp.lt.s32.totalorder %s11, 2
    // Predicated region
    $region29: #{tpu_custom_call.1} parent=5 // pred_check
      %p175 = pneg %p174
    $region30: #{tpu_custom_call.1} parent=5 // pred_check_branch
      %177 = sbr.rel (%p175) target = $region32
    $region31: #{tpu_custom_call.1} parent=5 // pred_region
      // Predicated region
      $region33: #{tpu_custom_call.1} parent=31 // pred_check
        %p178 = pneg %p31
      $region34: #{tpu_custom_call.1} parent=31 // pred_check_branch
        %180 = sbr.rel (%p178) target = $region36
      $region35: #{tpu_custom_call.1} parent=31 // pred_region
        %s181 = smul.u32 32, %s11
        %p182 = scmp.lt.s32.totalorder %s181, 63
        %s183 = scalar_select %p182, %s181, 63
        %s184 = smul.addr %s183, 8
        %s185 = scalar_lea.vmem %s0, %s184
        %s186 = smul.u32 32, %s11
      $region36: #{tpu_custom_call.1} parent=31 // pred_fallthru
        _
    $region32: #{tpu_custom_call.1} parent=5 // pred_fallthru
      _
    %p187 = scmp.le.s32.totalorder 1, %s11
    %p188 = scmp.lt.s32.totalorder %s11, 3
    %p189 = pnand %p187, %p188
    %p190 = pneg %p189
    // Predicated region
    $region37: #{tpu_custom_call.1} parent=5 // pred_check
      _
    $region38: #{tpu_custom_call.1} parent=5 // pred_check_branch
      %192 = sbr.rel (%p189) target = $region40
    $region39: #{tpu_custom_call.1} parent=5 // pred_region
      %s193 = ssub.s32 %s11, 1
      %s194 = smul.u32 32, %s16
      %p195 = scmp.lt.s32.totalorder %s194, 63
      %s196 = scalar_select %p195, %s194, 63
      %s197 = smul.addr %s196, 8
      %s198 = scalar_lea.vmem %s0, %s197
      %p199 = pneg %p37
      %p200 = pneg %p34
      %p201 = pneg %p58
      %p202 = pneg %p55
      %p203 = pneg %p79
      %p204 = pneg %p76
      %p205 = pneg %p100
      %p206 = pneg %p97
      %p207 = pneg %p121
      %p208 = pneg %p118
      %p209 = pneg %p147
      %p210 = pneg %p144
      %s211 = smul.u32 32, %s16
      %p212 = scmp.lt.s32.totalorder %s211, 63
      %s213 = scalar_select %p212, %s211, 63
      %s214 = smul.addr %s213, 8
      %s215 = scalar_lea.vmem %s5, %s214
      %s216 = smul.u32 32, %s16
      %p217 = scmp.lt.s32.totalorder %s216, 63
      %s218 = scalar_select %p217, %s216, 63
      %s219 = smul.addr %s218, 8
      %s220 = scalar_lea.vmem %s0, %s219
      %s221 = smul.u32 32, %s16
      %s222 = smul.u32 32, %s16
      %p223 = scmp.lt.s32.totalorder %s222, 63
      %s224 = scalar_select %p223, %s222, 63
      %s225 = smul.addr %s224, 8
      %s226 = scalar_lea.vmem %s5, %s225
      %s227 = smul.u32 32, %s16
      %v228 = vld [vmem:[%s220] sm:$0xff]
      %v229 = vld [vmem:[%s220 + $0x8] sm:$0xff]
      %v230 = vld [vmem:[%s220 + $0x10] sm:$0xff]
      %v231 = vld [vmem:[%s220 + $0x18] sm:$0xff]
      %v232 = vld [vmem:[%s220 + $0x20] sm:$0xff]
      %v233 = vld [vmem:[%s220 + $0x28] sm:$0xff]
      %v234 = vld [vmem:[%s220 + $0x30] sm:$0xff]
      %v235 = vld [vmem:[%s220 + $0x38] sm:$0xff]
      %v236 = vld [vmem:[%s220 + $0x40] sm:$0xff]
      %v237 = vld [vmem:[%s220 + $0x48] sm:$0xff]
      %v238 = vld [vmem:[%s220 + $0x50] sm:$0xff]
      %v239 = vld [vmem:[%s220 + $0x58] sm:$0xff]
      %v240 = vld [vmem:[%s220 + $0x60] sm:$0xff]
      %v241 = vld [vmem:[%s220 + $0x68] sm:$0xff]
      %v242 = vld [vmem:[%s220 + $0x70] sm:$0xff]
      %v243 = vld [vmem:[%s220 + $0x78] sm:$0xff]
      %v244 = vld [vmem:[%s220 + $0x80] sm:$0xff]
      %v245 = vld [vmem:[%s220 + $0x88] sm:$0xff]
      %v246 = vld [vmem:[%s220 + $0x90] sm:$0xff]
      %v247 = vld [vmem:[%s220 + $0x98] sm:$0xff]
      %v248 = vld [vmem:[%s220 + $0xa0] sm:$0xff]
      %v249 = vld [vmem:[%s220 + $0xa8] sm:$0xff]
      %v250 = vld [vmem:[%s220 + $0xb0] sm:$0xff]
      %v251 = vld [vmem:[%s220 + $0xb8] sm:$0xff]
      %v252 = vld [vmem:[%s220 + $0xc0] sm:$0xff]
      %v253 = vld [vmem:[%s220 + $0xc8] sm:$0xff]
      %v254 = vld [vmem:[%s220 + $0xd0] sm:$0xff]
      %v255 = vld [vmem:[%s220 + $0xd8] sm:$0xff]
      %v256 = vld [vmem:[%s220 + $0xe0] sm:$0xff]
      %v257 = vld [vmem:[%s220 + $0xe8] sm:$0xff]
      %v258 = vld [vmem:[%s220 + $0xf0] sm:$0xff]
      %v259 = vld [vmem:[%s220 + $0xf8] sm:$0xff]
      %v260 = vld [vmem:[%s1] sm:$0xff]
      %v261 = vld [vmem:[%s1 + $0x8] sm:$0xff]
      %v262 = vld [vmem:[%s2] sm:$0x1]
      %v264 = vlaneseq
      %v265 = vshrl.u32 %v264, 7
      %v266 = vsub.s32 0, %v265
      %v267 = vrot.slane %v262, %v266
      %vm269 = vcmask 130048
      %v271 = vsel %vm269, %v228, 0
      %v274 = vsel %vm269, %v229, 0
      %v277 = vsel %vm269, %v230, 0
      %v280 = vsel %vm269, %v231, 0
      %v283 = vsel %vm269, %v232, 0
      %v286 = vsel %vm269, %v233, 0
      %v289 = vsel %vm269, %v234, 0
      %v292 = vsel %vm269, %v235, 0
      %v295 = vsel %vm269, %v236, 0
      %v298 = vsel %vm269, %v237, 0
      %v301 = vsel %vm269, %v238, 0
      %v304 = vsel %vm269, %v239, 0
      %v307 = vsel %vm269, %v240, 0
      %v310 = vsel %vm269, %v241, 0
      %v313 = vsel %vm269, %v242, 0
      %v316 = vsel %vm269, %v243, 0
      %v319 = vsel %vm269, %v244, 0
      %v322 = vsel %vm269, %v245, 0
      %v325 = vsel %vm269, %v246, 0
      %v328 = vsel %vm269, %v247, 0
      %v331 = vsel %vm269, %v248, 0
      %v334 = vsel %vm269, %v249, 0
      %v337 = vsel %vm269, %v250, 0
      %v340 = vsel %vm269, %v251, 0
      %v343 = vsel %vm269, %v252, 0
      %v346 = vsel %vm269, %v253, 0
      %v349 = vsel %vm269, %v254, 0
      %v352 = vsel %vm269, %v255, 0
      %v355 = vsel %vm269, %v256, 0
      %v358 = vsel %vm269, %v257, 0
      %v361 = vsel %vm269, %v258, 0
      %v364 = vsel %vm269, %v259, 0
      %366 = vmatprep.subr.mxu0 0.0
      %367 = vmatpush1.msra.mxu0 0.0
      %368 = vmatprep.subr.mxu0 0.0
      %369 = vmatpush1.msra.mxu0 0.0
      %370 = vmatprep.subr.mxu0 0.0
      %371 = vmatpush1.msra.mxu0 0.0
      %372 = vmatprep.subr.mxu0 0.0
      %373 = vmatpush1.msra.mxu0 0.0
      %374 = vmatprep.subr.mxu0 0.0
      %375 = vmatpush1.msra.mxu0 0.0
      %376 = vmatprep.subr.mxu0 0.0
      %377 = vmatpush1.msra.mxu0 0.0
      %378 = vmatprep.subr.mxu0 0.0
      %379 = vmatpush1.msra.mxu0 0.0
      %380 = vmatprep.subr.mxu0 0.0
      %381 = vmatpush1.msra.mxu0 0.0
      %382 = vmatprep.subr.mxu0 0.0
      %383 = vmatpush1.msra.mxu0 0.0
      %384 = vmatprep.subr.mxu0 0.0
      %385 = vmatpush1.msra.mxu0 0.0
      %386 = vmatprep.subr.mxu0 0.0
      %387 = vmatpush1.msra.mxu0 0.0
      %388 = vmatprep.subr.mxu0 0.0
      %389 = vmatpush1.msra.mxu0 0.0
      %390 = vmatprep.subr.mxu0 0.0
      %391 = vmatpush1.msra.mxu0 0.0
      %392 = vmatprep.subr.mxu0 0.0
      %393 = vmatpush1.msra.mxu0 0.0
      %394 = vmatprep.subr.mxu0 0.0
      %v395 = vand.u32 %v261, 4294901760
      %396 = vmatpush1.msra.mxu0 %v395
      %397 = vmatprep.subr.mxu0 0.0
      %v398 = vand.u32 %v260, 4294901760
      %399 = vmatpush1.msra.mxu0 %v398
      %400 = vmatprep.subr.mxu0 0.0
      %401 = vmatpush2.msra.mxu0 0.0
      %402 = vmatprep.subr.mxu0 0.0
      %403 = vmatpush2.msra.mxu0 0.0
      %404 = vmatprep.subr.mxu0 0.0
      %405 = vmatpush2.msra.mxu0 0.0
      %406 = vmatprep.subr.mxu0 0.0
      %407 = vmatpush2.msra.mxu0 0.0
      %408 = vmatprep.subr.mxu0 0.0
      %409 = vmatpush2.msra.mxu0 0.0
      %410 = vmatprep.subr.mxu0 0.0
      %411 = vmatpush2.msra.mxu0 0.0
      %412 = vmatprep.subr.mxu0 0.0
      %413 = vmatpush2.msra.mxu0 0.0
      %414 = vmatprep.subr.mxu0 0.0
      %415 = vmatpush2.msra.mxu0 0.0
      %416 = vmatprep.subr.mxu0 0.0
      %417 = vmatpush2.msra.mxu0 0.0
      %418 = vmatprep.subr.mxu0 0.0
      %419 = vmatpush2.msra.mxu0 0.0
      %420 = vmatprep.subr.mxu0 0.0
      %421 = vmatpush2.msra.mxu0 0.0
      %422 = vmatprep.subr.mxu0 0.0
      %423 = vmatpush2.msra.mxu0 0.0
      %424 = vmatprep.subr.mxu0 0.0
      %425 = vmatpush2.msra.mxu0 0.0
      %426 = vmatprep.subr.mxu0 0.0
      %427 = vmatpush2.msra.mxu0 0.0
      %428 = vmatprep.subr.mxu0 0.0
      %429 = vmatpush2.msra.mxu0 0.0
      %430 = vmatprep.subr.mxu0 0.0
      %431 = vmatpush2.msra.mxu0 0.0
      %432 = vmatprep.mubr.f32.mxu0 0.0
      %v433 = vand.u32 %v271, 4294901760
      %v434 = vsub.f32 %v271, %v433
      %v435 = vand.u32 %v434, 4294901760
      %v436 = vsub.f32 %v434, %v435
      %v437 = vand.u32 %v436, 4294901760
      %438 = vmatmul.mubr.f32.gmra.mxu0 %v437
      %v439 = vpop.f32.mrf.mxu0
      %v440 = vadd.f32 %v267, %v439
      %v441 = vpop.f32.mrf.mxu0
      %442 = vmatprep.mubr.f32.mxu0 0.0
      %v443 = vand.u32 %v274, 4294901760
      %v444 = vsub.f32 %v274, %v443
      %v445 = vand.u32 %v444, 4294901760
      %v446 = vsub.f32 %v444, %v445
      %v447 = vand.u32 %v446, 4294901760
      %448 = vmatmul.mubr.f32.gmra.mxu0 %v447
      %v449 = vpop.f32.mrf.mxu0
      %v450 = vadd.f32 %v267, %v449
      %v451 = vpop.f32.mrf.mxu0
      %452 = vmatprep.mubr.f32.mxu0 0.0
      %v453 = vand.u32 %v277, 4294901760
      %v454 = vsub.f32 %v277, %v453
      %v455 = vand.u32 %v454, 4294901760
      %v456 = vsub.f32 %v454, %v455
      %v457 = vand.u32 %v456, 4294901760
      %458 = vmatmul.mubr.f32.gmra.mxu0 %v457
      %v459 = vpop.f32.mrf.mxu0
      %v460 = vadd.f32 %v267, %v459
      %v461 = vpop.f32.mrf.mxu0
      %462 = vmatprep.mubr.f32.mxu0 0.0
      %v463 = vand.u32 %v280, 4294901760
      %v464 = vsub.f32 %v280, %v463
      %v465 = vand.u32 %v464, 4294901760
      %v466 = vsub.f32 %v464, %v465
      %v467 = vand.u32 %v466, 4294901760
      %468 = vmatmul.mubr.f32.gmra.mxu0 %v467
      %v469 = vpop.f32.mrf.mxu0
      %v470 = vadd.f32 %v267, %v469
      %v471 = vpop.f32.mrf.mxu0
      %472 = vmatprep.mubr.f32.mxu0 0.0
      %v473 = vand.u32 %v283, 4294901760
      %v474 = vsub.f32 %v283, %v473
      %v475 = vand.u32 %v474, 4294901760
      %v476 = vsub.f32 %v474, %v475
      %v477 = vand.u32 %v476, 4294901760
      %478 = vmatmul.mubr.f32.gmra.mxu0 %v477
      %v479 = vpop.f32.mrf.mxu0
      %v480 = vadd.f32 %v267, %v479
      %v481 = vpop.f32.mrf.mxu0
      %482 = vmatprep.mubr.f32.mxu0 0.0
      %v483 = vand.u32 %v286, 4294901760
      %v484 = vsub.f32 %v286, %v483
      %v485 = vand.u32 %v484, 4294901760
      %v486 = vsub.f32 %v484, %v485
      %v487 = vand.u32 %v486, 4294901760
      %488 = vmatmul.mubr.f32.gmra.mxu0 %v487
      %v489 = vpop.f32.mrf.mxu0
      %v490 = vadd.f32 %v267, %v489
      %v491 = vpop.f32.mrf.mxu0
      %492 = vmatprep.mubr.f32.mxu0 0.0
      %v493 = vand.u32 %v289, 4294901760
      %v494 = vsub.f32 %v289, %v493
      %v495 = vand.u32 %v494, 4294901760
      %v496 = vsub.f32 %v494, %v495
      %v497 = vand.u32 %v496, 4294901760
      %498 = vmatmul.mubr.f32.gmra.mxu0 %v497
      %v499 = vpop.f32.mrf.mxu0
      %v500 = vadd.f32 %v267, %v499
      %v501 = vpop.f32.mrf.mxu0
      %502 = vmatprep.mubr.f32.mxu0 0.0
      %v503 = vand.u32 %v292, 4294901760
      %v504 = vsub.f32 %v292, %v503
      %v505 = vand.u32 %v504, 4294901760
      %v506 = vsub.f32 %v504, %v505
      %v507 = vand.u32 %v506, 4294901760
      %508 = vmatmul.mubr.f32.gmra.mxu0 %v507
      %v509 = vpop.f32.mrf.mxu0
      %v510 = vadd.f32 %v267, %v509
      %v511 = vpop.f32.mrf.mxu0
      %512 = vmatprep.mubr.f32.mxu0 0.0
      %v513 = vand.u32 %v295, 4294901760
      %v514 = vsub.f32 %v295, %v513
      %v515 = vand.u32 %v514, 4294901760
      %v516 = vsub.f32 %v514, %v515
      %v517 = vand.u32 %v516, 4294901760
      %518 = vmatmul.mubr.f32.gmra.mxu0 %v517
      %v519 = vpop.f32.mrf.mxu0
      %v520 = vadd.f32 %v267, %v519
      %v521 = vpop.f32.mrf.mxu0
      %522 = vmatprep.mubr.f32.mxu0 0.0
      %v523 = vand.u32 %v298, 4294901760
      %v524 = vsub.f32 %v298, %v523
      %v525 = vand.u32 %v524, 4294901760
      %v526 = vsub.f32 %v524, %v525
      %v527 = vand.u32 %v526, 4294901760
      %528 = vmatmul.mubr.f32.gmra.mxu0 %v527
      %v529 = vpop.f32.mrf.mxu0
      %v530 = vadd.f32 %v267, %v529
      %v531 = vpop.f32.mrf.mxu0
      %532 = vmatprep.mubr.f32.mxu0 0.0
      %v533 = vand.u32 %v301, 4294901760
      %v534 = vsub.f32 %v301, %v533
      %v535 = vand.u32 %v534, 4294901760
      %v536 = vsub.f32 %v534, %v535
      %v537 = vand.u32 %v536, 4294901760
      %538 = vmatmul.mubr.f32.gmra.mxu0 %v537
      %v539 = vpop.f32.mrf.mxu0
      %v540 = vadd.f32 %v267, %v539
      %v541 = vpop.f32.mrf.mxu0
      %542 = vmatprep.mubr.f32.mxu0 0.0
      %v543 = vand.u32 %v304, 4294901760
      %v544 = vsub.f32 %v304, %v543
      %v545 = vand.u32 %v544, 4294901760
      %v546 = vsub.f32 %v544, %v545
      %v547 = vand.u32 %v546, 4294901760
      %548 = vmatmul.mubr.f32.gmra.mxu0 %v547
      %v549 = vpop.f32.mrf.mxu0
      %v550 = vadd.f32 %v267, %v549
      %v551 = vpop.f32.mrf.mxu0
      %552 = vmatprep.mubr.f32.mxu0 0.0
      %v553 = vand.u32 %v307, 4294901760
      %v554 = vsub.f32 %v307, %v553
      %v555 = vand.u32 %v554, 4294901760
      %v556 = vsub.f32 %v554, %v555
      %v557 = vand.u32 %v556, 4294901760
      %558 = vmatmul.mubr.f32.gmra.mxu0 %v557
      %v559 = vpop.f32.mrf.mxu0
      %v560 = vadd.f32 %v267, %v559
      %v561 = vpop.f32.mrf.mxu0
      %562 = vmatprep.mubr.f32.mxu0 0.0
      %v563 = vand.u32 %v310, 4294901760
      %v564 = vsub.f32 %v310, %v563
      %v565 = vand.u32 %v564, 4294901760
      %v566 = vsub.f32 %v564, %v565
      %v567 = vand.u32 %v566, 4294901760
      %568 = vmatmul.mubr.f32.gmra.mxu0 %v567
      %v569 = vpop.f32.mrf.mxu0
      %v570 = vadd.f32 %v267, %v569
      %v571 = vpop.f32.mrf.mxu0
      %572 = vmatprep.mubr.f32.mxu0 0.0
      %v573 = vand.u32 %v313, 4294901760
      %v574 = vsub.f32 %v313, %v573
      %v575 = vand.u32 %v574, 4294901760
      %v576 = vsub.f32 %v574, %v575
      %v577 = vand.u32 %v576, 4294901760
      %578 = vmatmul.mubr.f32.gmra.mxu0 %v577
      %v579 = vpop.f32.mrf.mxu0
      %v580 = vadd.f32 %v267, %v579
      %v581 = vpop.f32.mrf.mxu0
      %582 = vmatprep.mubr.f32.mxu0 0.0
      %v583 = vand.u32 %v316, 4294901760
      %v584 = vsub.f32 %v316, %v583
      %v585 = vand.u32 %v584, 4294901760
      %v586 = vsub.f32 %v584, %v585
      %v587 = vand.u32 %v586, 4294901760
      %588 = vmatmul.mubr.f32.gmra.mxu0 %v587
      %v589 = vpop.f32.mrf.mxu0
      %v590 = vadd.f32 %v267, %v589
      %v591 = vpop.f32.mrf.mxu0
      %592 = vmatprep.mubr.f32.mxu0 0.0
      %v593 = vand.u32 %v319, 4294901760
      %v594 = vsub.f32 %v319, %v593
      %v595 = vand.u32 %v594, 4294901760
      %v596 = vsub.f32 %v594, %v595
      %v597 = vand.u32 %v596, 4294901760
      %598 = vmatmul.mubr.f32.gmra.mxu0 %v597
      %v599 = vpop.f32.mrf.mxu0
      %v600 = vadd.f32 %v267, %v599
      %v601 = vpop.f32.mrf.mxu0
      %602 = vmatprep.mubr.f32.mxu0 0.0
      %v603 = vand.u32 %v322, 4294901760
      %v604 = vsub.f32 %v322, %v603
      %v605 = vand.u32 %v604, 4294901760
      %v606 = vsub.f32 %v604, %v605
      %v607 = vand.u32 %v606, 4294901760
      %608 = vmatmul.mubr.f32.gmra.mxu0 %v607
      %v609 = vpop.f32.mrf.mxu0
      %v610 = vadd.f32 %v267, %v609
      %v611 = vpop.f32.mrf.mxu0
      %612 = vmatprep.mubr.f32.mxu0 0.0
      %v613 = vand.u32 %v325, 4294901760
      %v614 = vsub.f32 %v325, %v613
      %v615 = vand.u32 %v614, 4294901760
      %v616 = vsub.f32 %v614, %v615
      %v617 = vand.u32 %v616, 4294901760
      %618 = vmatmul.mubr.f32.gmra.mxu0 %v617
      %v619 = vpop.f32.mrf.mxu0
      %v620 = vadd.f32 %v267, %v619
      %v621 = vpop.f32.mrf.mxu0
      %622 = vmatprep.mubr.f32.mxu0 0.0
      %v623 = vand.u32 %v328, 4294901760
      %v624 = vsub.f32 %v328, %v623
      %v625 = vand.u32 %v624, 4294901760
      %v626 = vsub.f32 %v624, %v625
      %v627 = vand.u32 %v626, 4294901760
      %628 = vmatmul.mubr.f32.gmra.mxu0 %v627
      %v629 = vpop.f32.mrf.mxu0
      %v630 = vadd.f32 %v267, %v629
      %v631 = vpop.f32.mrf.mxu0
      %632 = vmatprep.mubr.f32.mxu0 0.0
      %v633 = vand.u32 %v331, 4294901760
      %v634 = vsub.f32 %v331, %v633
      %v635 = vand.u32 %v634, 4294901760
      %v636 = vsub.f32 %v634, %v635
      %v637 = vand.u32 %v636, 4294901760
      %638 = vmatmul.mubr.f32.gmra.mxu0 %v637
      %v639 = vpop.f32.mrf.mxu0
      %v640 = vadd.f32 %v267, %v639
      %v641 = vpop.f32.mrf.mxu0
      %642 = vmatprep.mubr.f32.mxu0 0.0
      %v643 = vand.u32 %v334, 4294901760
      %v644 = vsub.f32 %v334, %v643
      %v645 = vand.u32 %v644, 4294901760
      %v646 = vsub.f32 %v644, %v645
      %v647 = vand.u32 %v646, 4294901760
      %648 = vmatmul.mubr.f32.gmra.mxu0 %v647
      %v649 = vpop.f32.mrf.mxu0
      %v650 = vadd.f32 %v267, %v649
      %v651 = vpop.f32.mrf.mxu0
      %652 = vmatprep.mubr.f32.mxu0 0.0
      %v653 = vand.u32 %v337, 4294901760
      %v654 = vsub.f32 %v337, %v653
      %v655 = vand.u32 %v654, 4294901760
      %v656 = vsub.f32 %v654, %v655
      %v657 = vand.u32 %v656, 4294901760
      %658 = vmatmul.mubr.f32.gmra.mxu0 %v657
      %v659 = vpop.f32.mrf.mxu0
      %v660 = vadd.f32 %v267, %v659
      %v661 = vpop.f32.mrf.mxu0
      %662 = vmatprep.mubr.f32.mxu0 0.0
      %v663 = vand.u32 %v340, 4294901760
      %v664 = vsub.f32 %v340, %v663
      %v665 = vand.u32 %v664, 4294901760
      %v666 = vsub.f32 %v664, %v665
      %v667 = vand.u32 %v666, 4294901760
      %668 = vmatmul.mubr.f32.gmra.mxu0 %v667
      %v669 = vpop.f32.mrf.mxu0
      %v670 = vadd.f32 %v267, %v669
      %v671 = vpop.f32.mrf.mxu0
      %672 = vmatprep.mubr.f32.mxu0 0.0
      %v673 = vand.u32 %v343, 4294901760
      %v674 = vsub.f32 %v343, %v673
      %v675 = vand.u32 %v674, 4294901760
      %v676 = vsub.f32 %v674, %v675
      %v677 = vand.u32 %v676, 4294901760
      %678 = vmatmul.mubr.f32.gmra.mxu0 %v677
      %v679 = vpop.f32.mrf.mxu0
      %v680 = vadd.f32 %v267, %v679
      %v681 = vpop.f32.mrf.mxu0
      %682 = vmatprep.mubr.f32.mxu0 0.0
      %v683 = vand.u32 %v346, 4294901760
      %v684 = vsub.f32 %v346, %v683
      %v685 = vand.u32 %v684, 4294901760
      %v686 = vsub.f32 %v684, %v685
      %v687 = vand.u32 %v686, 4294901760
      %688 = vmatmul.mubr.f32.gmra.mxu0 %v687
      %v689 = vpop.f32.mrf.mxu0
      %v690 = vadd.f32 %v267, %v689
      %v691 = vpop.f32.mrf.mxu0
      %692 = vmatprep.mubr.f32.mxu0 0.0
      %v693 = vand.u32 %v349, 4294901760
      %v694 = vsub.f32 %v349, %v693
      %v695 = vand.u32 %v694, 4294901760
      %v696 = vsub.f32 %v694, %v695
      %v697 = vand.u32 %v696, 4294901760
      %698 = vmatmul.mubr.f32.gmra.mxu0 %v697
      %v699 = vpop.f32.mrf.mxu0
      %v700 = vadd.f32 %v267, %v699
      %v701 = vpop.f32.mrf.mxu0
      %702 = vmatprep.mubr.f32.mxu0 0.0
      %v703 = vand.u32 %v352, 4294901760
      %v704 = vsub.f32 %v352, %v703
      %v705 = vand.u32 %v704, 4294901760
      %v706 = vsub.f32 %v704, %v705
      %v707 = vand.u32 %v706, 4294901760
      %708 = vmatmul.mubr.f32.gmra.mxu0 %v707
      %v709 = vpop.f32.mrf.mxu0
      %v710 = vadd.f32 %v267, %v709
      %v711 = vpop.f32.mrf.mxu0
      %712 = vmatprep.mubr.f32.mxu0 0.0
      %v713 = vand.u32 %v355, 4294901760
      %v714 = vsub.f32 %v355, %v713
      %v715 = vand.u32 %v714, 4294901760
      %v716 = vsub.f32 %v714, %v715
      %v717 = vand.u32 %v716, 4294901760
      %718 = vmatmul.mubr.f32.gmra.mxu0 %v717
      %v719 = vpop.f32.mrf.mxu0
      %v720 = vadd.f32 %v267, %v719
      %v721 = vpop.f32.mrf.mxu0
      %722 = vmatprep.mubr.f32.mxu0 0.0
      %v723 = vand.u32 %v358, 4294901760
      %v724 = vsub.f32 %v358, %v723
      %v725 = vand.u32 %v724, 4294901760
      %v726 = vsub.f32 %v724, %v725
      %v727 = vand.u32 %v726, 4294901760
      %728 = vmatmul.mubr.f32.gmra.mxu0 %v727
      %v729 = vpop.f32.mrf.mxu0
      %v730 = vadd.f32 %v267, %v729
      %v731 = vpop.f32.mrf.mxu0
      %732 = vmatprep.mubr.f32.mxu0 0.0
      %v733 = vand.u32 %v361, 4294901760
      %v734 = vsub.f32 %v361, %v733
      %v735 = vand.u32 %v734, 4294901760
      %v736 = vsub.f32 %v734, %v735
      %v737 = vand.u32 %v736, 4294901760
      %738 = vmatmul.mubr.f32.gmra.mxu0 %v737
      %v739 = vpop.f32.mrf.mxu0
      %v740 = vadd.f32 %v267, %v739
      %v741 = vpop.f32.mrf.mxu0
      %742 = vmatprep.mubr.f32.mxu0 0.0
      %v743 = vand.u32 %v364, 4294901760
      %v744 = vsub.f32 %v364, %v743
      %v745 = vand.u32 %v744, 4294901760
      %v746 = vsub.f32 %v744, %v745
      %v747 = vand.u32 %v746, 4294901760
      %748 = vmatmul.mubr.f32.gmra.mxu0 %v747
      %v749 = vpop.f32.mrf.mxu0
      %v750 = vadd.f32 %v267, %v749
      %v751 = vpop.f32.mrf.mxu0
      %752 = vdwg.mxu0
      %753 = vmatprep.subr.mxu0 0.0
      %754 = vmatpush1.msra.mxu0 0.0
      %755 = vmatprep.subr.mxu0 0.0
      %756 = vmatpush1.msra.mxu0 0.0
      %757 = vmatprep.subr.mxu0 0.0
      %758 = vmatpush1.msra.mxu0 0.0
      %759 = vmatprep.subr.mxu0 0.0
      %760 = vmatpush1.msra.mxu0 0.0
      %761 = vmatprep.subr.mxu0 0.0
      %762 = vmatpush1.msra.mxu0 0.0
      %763 = vmatprep.subr.mxu0 0.0
      %764 = vmatpush1.msra.mxu0 0.0
      %765 = vmatprep.subr.mxu0 0.0
      %766 = vmatpush1.msra.mxu0 0.0
      %767 = vmatprep.subr.mxu0 0.0
      %768 = vmatpush1.msra.mxu0 0.0
      %769 = vmatprep.subr.mxu0 0.0
      %770 = vmatpush1.msra.mxu0 0.0
      %771 = vmatprep.subr.mxu0 0.0
      %772 = vmatpush1.msra.mxu0 0.0
      %773 = vmatprep.subr.mxu0 0.0
      %774 = vmatpush1.msra.mxu0 0.0
      %775 = vmatprep.subr.mxu0 0.0
      %776 = vmatpush1.msra.mxu0 0.0
      %777 = vmatprep.subr.mxu0 0.0
      %778 = vmatpush1.msra.mxu0 0.0
      %779 = vmatprep.subr.mxu0 0.0
      %780 = vmatpush1.msra.mxu0 0.0
      %781 = vmatprep.subr.mxu0 0.0
      %v782 = vand.u32 %v261, 4294901760
      %v783 = vsub.f32 %v261, %v782
      %v784 = vand.u32 %v783, 4294901760
      %v785 = vsub.f32 %v783, %v784
      %v786 = vand.u32 %v785, 4294901760
      %787 = vmatpush1.msra.mxu0 %v786
      %788 = vmatprep.subr.mxu0 0.0
      %v789 = vand.u32 %v260, 4294901760
      %v790 = vsub.f32 %v260, %v789
      %v791 = vand.u32 %v790, 4294901760
      %v792 = vsub.f32 %v790, %v791
      %v793 = vand.u32 %v792, 4294901760
      %794 = vmatpush1.msra.mxu0 %v793
      %795 = vmatprep.subr.mxu0 0.0
      %796 = vmatpush2.msra.mxu0 0.0
      %797 = vmatprep.subr.mxu0 0.0
      %798 = vmatpush2.msra.mxu0 0.0
      %799 = vmatprep.subr.mxu0 0.0
      %800 = vmatpush2.msra.mxu0 0.0
      %801 = vmatprep.subr.mxu0 0.0
      %802 = vmatpush2.msra.mxu0 0.0
      %803 = vmatprep.subr.mxu0 0.0
      %804 = vmatpush2.msra.mxu0 0.0
      %805 = vmatprep.subr.mxu0 0.0
      %806 = vmatpush2.msra.mxu0 0.0
      %807 = vmatprep.subr.mxu0 0.0
      %808 = vmatpush2.msra.mxu0 0.0
      %809 = vmatprep.subr.mxu0 0.0
      %810 = vmatpush2.msra.mxu0 0.0
      %811 = vmatprep.subr.mxu0 0.0
      %812 = vmatpush2.msra.mxu0 0.0
      %813 = vmatprep.subr.mxu0 0.0
      %814 = vmatpush2.msra.mxu0 0.0
      %815 = vmatprep.subr.mxu0 0.0
      %816 = vmatpush2.msra.mxu0 0.0
      %817 = vmatprep.subr.mxu0 0.0
      %818 = vmatpush2.msra.mxu0 0.0
      %819 = vmatprep.subr.mxu0 0.0
      %820 = vmatpush2.msra.mxu0 0.0
      %821 = vmatprep.subr.mxu0 0.0
      %822 = vmatpush2.msra.mxu0 0.0
      %823 = vmatprep.subr.mxu0 0.0
      %824 = vmatpush2.msra.mxu0 0.0
      %825 = vmatprep.subr.mxu0 0.0
      %826 = vmatpush2.msra.mxu0 0.0
      %827 = vmatprep.mubr.f32.mxu0 0.0
      %v828 = vand.u32 %v271, 4294901760
      %829 = vmatmul.mubr.f32.gmra.mxu0 %v828
      %v830 = vpop.f32.mrf.mxu0
      %v831 = vadd.f32 %v440, %v830
      %v832 = vpop.f32.mrf.mxu0
      %833 = vmatprep.mubr.f32.mxu0 0.0
      %v834 = vand.u32 %v274, 4294901760
      %835 = vmatmul.mubr.f32.gmra.mxu0 %v834
      %v836 = vpop.f32.mrf.mxu0
      %v837 = vadd.f32 %v450, %v836
      %v838 = vpop.f32.mrf.mxu0
      %839 = vmatprep.mubr.f32.mxu0 0.0
      %v840 = vand.u32 %v277, 4294901760
      %841 = vmatmul.mubr.f32.gmra.mxu0 %v840
      %v842 = vpop.f32.mrf.mxu0
      %v843 = vadd.f32 %v460, %v842
      %v844 = vpop.f32.mrf.mxu0
      %845 = vmatprep.mubr.f32.mxu0 0.0
      %v846 = vand.u32 %v280, 4294901760
      %847 = vmatmul.mubr.f32.gmra.mxu0 %v846
      %v848 = vpop.f32.mrf.mxu0
      %v849 = vadd.f32 %v470, %v848
      %v850 = vpop.f32.mrf.mxu0
      %851 = vmatprep.mubr.f32.mxu0 0.0
      %v852 = vand.u32 %v283, 4294901760
      %853 = vmatmul.mubr.f32.gmra.mxu0 %v852
      %v854 = vpop.f32.mrf.mxu0
      %v855 = vadd.f32 %v480, %v854
      %v856 = vpop.f32.mrf.mxu0
      %857 = vmatprep.mubr.f32.mxu0 0.0
      %v858 = vand.u32 %v286, 4294901760
      %859 = vmatmul.mubr.f32.gmra.mxu0 %v858
      %v860 = vpop.f32.mrf.mxu0
      %v861 = vadd.f32 %v490, %v860
      %v862 = vpop.f32.mrf.mxu0
      %863 = vmatprep.mubr.f32.mxu0 0.0
      %v864 = vand.u32 %v289, 4294901760
      %865 = vmatmul.mubr.f32.gmra.mxu0 %v864
      %v866 = vpop.f32.mrf.mxu0
      %v867 = vadd.f32 %v500, %v866
      %v868 = vpop.f32.mrf.mxu0
      %869 = vmatprep.mubr.f32.mxu0 0.0
      %v870 = vand.u32 %v292, 4294901760
      %871 = vmatmul.mubr.f32.gmra.mxu0 %v870
      %v872 = vpop.f32.mrf.mxu0
      %v873 = vadd.f32 %v510, %v872
      %v874 = vpop.f32.mrf.mxu0
      %875 = vmatprep.mubr.f32.mxu0 0.0
      %v876 = vand.u32 %v295, 4294901760
      %877 = vmatmul.mubr.f32.gmra.mxu0 %v876
      %v878 = vpop.f32.mrf.mxu0
      %v879 = vadd.f32 %v520, %v878
      %v880 = vpop.f32.mrf.mxu0
      %881 = vmatprep.mubr.f32.mxu0 0.0
      %v882 = vand.u32 %v298, 4294901760
      %883 = vmatmul.mubr.f32.gmra.mxu0 %v882
      %v884 = vpop.f32.mrf.mxu0
      %v885 = vadd.f32 %v530, %v884
      %v886 = vpop.f32.mrf.mxu0
      %887 = vmatprep.mubr.f32.mxu0 0.0
      %v888 = vand.u32 %v301, 4294901760
      %889 = vmatmul.mubr.f32.gmra.mxu0 %v888
      %v890 = vpop.f32.mrf.mxu0
      %v891 = vadd.f32 %v540, %v890
      %v892 = vpop.f32.mrf.mxu0
      %893 = vmatprep.mubr.f32.mxu0 0.0
      %v894 = vand.u32 %v304, 4294901760
      %895 = vmatmul.mubr.f32.gmra.mxu0 %v894
      %v896 = vpop.f32.mrf.mxu0
      %v897 = vadd.f32 %v550, %v896
      %v898 = vpop.f32.mrf.mxu0
      %899 = vmatprep.mubr.f32.mxu0 0.0
      %v900 = vand.u32 %v307, 4294901760
      %901 = vmatmul.mubr.f32.gmra.mxu0 %v900
      %v902 = vpop.f32.mrf.mxu0
      %v903 = vadd.f32 %v560, %v902
      %v904 = vpop.f32.mrf.mxu0
      %905 = vmatprep.mubr.f32.mxu0 0.0
      %v906 = vand.u32 %v310, 4294901760
      %907 = vmatmul.mubr.f32.gmra.mxu0 %v906
      %v908 = vpop.f32.mrf.mxu0
      %v909 = vadd.f32 %v570, %v908
      %v910 = vpop.f32.mrf.mxu0
      %911 = vmatprep.mubr.f32.mxu0 0.0
      %v912 = vand.u32 %v313, 4294901760
      %913 = vmatmul.mubr.f32.gmra.mxu0 %v912
      %v914 = vpop.f32.mrf.mxu0
      %v915 = vadd.f32 %v580, %v914
      %v916 = vpop.f32.mrf.mxu0
      %917 = vmatprep.mubr.f32.mxu0 0.0
      %v918 = vand.u32 %v316, 4294901760
      %919 = vmatmul.mubr.f32.gmra.mxu0 %v918
      %v920 = vpop.f32.mrf.mxu0
      %v921 = vadd.f32 %v590, %v920
      %v922 = vpop.f32.mrf.mxu0
      %923 = vmatprep.mubr.f32.mxu0 0.0
      %v924 = vand.u32 %v319, 4294901760
      %925 = vmatmul.mubr.f32.gmra.mxu0 %v924
      %v926 = vpop.f32.mrf.mxu0
      %v927 = vadd.f32 %v600, %v926
      %v928 = vpop.f32.mrf.mxu0
      %929 = vmatprep.mubr.f32.mxu0 0.0
      %v930 = vand.u32 %v322, 4294901760
      %931 = vmatmul.mubr.f32.gmra.mxu0 %v930
      %v932 = vpop.f32.mrf.mxu0
      %v933 = vadd.f32 %v610, %v932
      %v934 = vpop.f32.mrf.mxu0
      %935 = vmatprep.mubr.f32.mxu0 0.0
      %v936 = vand.u32 %v325, 4294901760
      %937 = vmatmul.mubr.f32.gmra.mxu0 %v936
      %v938 = vpop.f32.mrf.mxu0
      %v939 = vadd.f32 %v620, %v938
      %v940 = vpop.f32.mrf.mxu0
      %941 = vmatprep.mubr.f32.mxu0 0.0
      %v942 = vand.u32 %v328, 4294901760
      %943 = vmatmul.mubr.f32.gmra.mxu0 %v942
      %v944 = vpop.f32.mrf.mxu0
      %v945 = vadd.f32 %v630, %v944
      %v946 = vpop.f32.mrf.mxu0
      %947 = vmatprep.mubr.f32.mxu0 0.0
      %v948 = vand.u32 %v331, 4294901760
      %949 = vmatmul.mubr.f32.gmra.mxu0 %v948
      %v950 = vpop.f32.mrf.mxu0
      %v951 = vadd.f32 %v640, %v950
      %v952 = vpop.f32.mrf.mxu0
      %953 = vmatprep.mubr.f32.mxu0 0.0
      %v954 = vand.u32 %v334, 4294901760
      %955 = vmatmul.mubr.f32.gmra.mxu0 %v954
      %v956 = vpop.f32.mrf.mxu0
      %v957 = vadd.f32 %v650, %v956
      %v958 = vpop.f32.mrf.mxu0
      %959 = vmatprep.mubr.f32.mxu0 0.0
      %v960 = vand.u32 %v337, 4294901760
      %961 = vmatmul.mubr.f32.gmra.mxu0 %v960
      %v962 = vpop.f32.mrf.mxu0
      %v963 = vadd.f32 %v660, %v962
      %v964 = vpop.f32.mrf.mxu0
      %965 = vmatprep.mubr.f32.mxu0 0.0
      %v966 = vand.u32 %v340, 4294901760
      %967 = vmatmul.mubr.f32.gmra.mxu0 %v966
      %v968 = vpop.f32.mrf.mxu0
      %v969 = vadd.f32 %v670, %v968
      %v970 = vpop.f32.mrf.mxu0
      %971 = vmatprep.mubr.f32.mxu0 0.0
      %v972 = vand.u32 %v343, 4294901760
      %973 = vmatmul.mubr.f32.gmra.mxu0 %v972
      %v974 = vpop.f32.mrf.mxu0
      %v975 = vadd.f32 %v680, %v974
      %v976 = vpop.f32.mrf.mxu0
      %977 = vmatprep.mubr.f32.mxu0 0.0
      %v978 = vand.u32 %v346, 4294901760
      %979 = vmatmul.mubr.f32.gmra.mxu0 %v978
      %v980 = vpop.f32.mrf.mxu0
      %v981 = vadd.f32 %v690, %v980
      %v982 = vpop.f32.mrf.mxu0
      %983 = vmatprep.mubr.f32.mxu0 0.0
      %v984 = vand.u32 %v349, 4294901760
      %985 = vmatmul.mubr.f32.gmra.mxu0 %v984
      %v986 = vpop.f32.mrf.mxu0
      %v987 = vadd.f32 %v700, %v986
      %v988 = vpop.f32.mrf.mxu0
      %989 = vmatprep.mubr.f32.mxu0 0.0
      %v990 = vand.u32 %v352, 4294901760
      %991 = vmatmul.mubr.f32.gmra.mxu0 %v990
      %v992 = vpop.f32.mrf.mxu0
      %v993 = vadd.f32 %v710, %v992
      %v994 = vpop.f32.mrf.mxu0
      %995 = vmatprep.mubr.f32.mxu0 0.0
      %v996 = vand.u32 %v355, 4294901760
      %997 = vmatmul.mubr.f32.gmra.mxu0 %v996
      %v998 = vpop.f32.mrf.mxu0
      %v999 = vadd.f32 %v720, %v998
      %v1000 = vpop.f32.mrf.mxu0
      %1001 = vmatprep.mubr.f32.mxu0 0.0
      %v1002 = vand.u32 %v358, 4294901760
      %1003 = vmatmul.mubr.f32.gmra.mxu0 %v1002
      %v1004 = vpop.f32.mrf.mxu0
      %v1005 = vadd.f32 %v730, %v1004
      %v1006 = vpop.f32.mrf.mxu0
      %1007 = vmatprep.mubr.f32.mxu0 0.0
      %v1008 = vand.u32 %v361, 4294901760
      %1009 = vmatmul.mubr.f32.gmra.mxu0 %v1008
      %v1010 = vpop.f32.mrf.mxu0
      %v1011 = vadd.f32 %v740, %v1010
      %v1012 = vpop.f32.mrf.mxu0
      %1013 = vmatprep.mubr.f32.mxu0 0.0
      %v1014 = vand.u32 %v364, 4294901760
      %1015 = vmatmul.mubr.f32.gmra.mxu0 %v1014
      %v1016 = vpop.f32.mrf.mxu0
      %v1017 = vadd.f32 %v750, %v1016
      %v1018 = vpop.f32.mrf.mxu0
      %1019 = vdwg.mxu0
      %1020 = vmatprep.subr.mxu0 0.0
      %1021 = vmatpush1.msra.mxu0 0.0
      %1022 = vmatprep.subr.mxu0 0.0
      %1023 = vmatpush1.msra.mxu0 0.0
      %1024 = vmatprep.subr.mxu0 0.0
      %1025 = vmatpush1.msra.mxu0 0.0
      %1026 = vmatprep.subr.mxu0 0.0
      %1027 = vmatpush1.msra.mxu0 0.0
      %1028 = vmatprep.subr.mxu0 0.0
      %1029 = vmatpush1.msra.mxu0 0.0
      %1030 = vmatprep.subr.mxu0 0.0
      %1031 = vmatpush1.msra.mxu0 0.0
      %1032 = vmatprep.subr.mxu0 0.0
      %1033 = vmatpush1.msra.mxu0 0.0
      %1034 = vmatprep.subr.mxu0 0.0
      %1035 = vmatpush1.msra.mxu0 0.0
      %1036 = vmatprep.subr.mxu0 0.0
      %1037 = vmatpush1.msra.mxu0 0.0
      %1038 = vmatprep.subr.mxu0 0.0
      %1039 = vmatpush1.msra.mxu0 0.0
      %1040 = vmatprep.subr.mxu0 0.0
      %1041 = vmatpush1.msra.mxu0 0.0
      %1042 = vmatprep.subr.mxu0 0.0
      %1043 = vmatpush1.msra.mxu0 0.0
      %1044 = vmatprep.subr.mxu0 0.0
      %1045 = vmatpush1.msra.mxu0 0.0
      %1046 = vmatprep.subr.mxu0 0.0
      %1047 = vmatpush1.msra.mxu0 0.0
      %1048 = vmatprep.subr.mxu0 0.0
      %v1049 = vand.u32 %v261, 4294901760
      %v1050 = vsub.f32 %v261, %v1049
      %1051 = vmatpush1.msra.mxu0 %v1050
      %1052 = vmatprep.subr.mxu0 0.0
      %v1053 = vand.u32 %v260, 4294901760
      %v1054 = vsub.f32 %v260, %v1053
      %1055 = vmatpush1.msra.mxu0 %v1054
      %1056 = vmatprep.subr.mxu0 0.0
      %1057 = vmatpush2.msra.mxu0 0.0
      %1058 = vmatprep.subr.mxu0 0.0
      %1059 = vmatpush2.msra.mxu0 0.0
      %1060 = vmatprep.subr.mxu0 0.0
      %1061 = vmatpush2.msra.mxu0 0.0
      %1062 = vmatprep.subr.mxu0 0.0
      %1063 = vmatpush2.msra.mxu0 0.0
      %1064 = vmatprep.subr.mxu0 0.0
      %1065 = vmatpush2.msra.mxu0 0.0
      %1066 = vmatprep.subr.mxu0 0.0
      %1067 = vmatpush2.msra.mxu0 0.0
      %1068 = vmatprep.subr.mxu0 0.0
      %1069 = vmatpush2.msra.mxu0 0.0
      %1070 = vmatprep.subr.mxu0 0.0
      %1071 = vmatpush2.msra.mxu0 0.0
      %1072 = vmatprep.subr.mxu0 0.0
      %1073 = vmatpush2.msra.mxu0 0.0
      %1074 = vmatprep.subr.mxu0 0.0
      %1075 = vmatpush2.msra.mxu0 0.0
      %1076 = vmatprep.subr.mxu0 0.0
      %1077 = vmatpush2.msra.mxu0 0.0
      %1078 = vmatprep.subr.mxu0 0.0
      %1079 = vmatpush2.msra.mxu0 0.0
      %1080 = vmatprep.subr.mxu0 0.0
      %1081 = vmatpush2.msra.mxu0 0.0
      %1082 = vmatprep.subr.mxu0 0.0
      %1083 = vmatpush2.msra.mxu0 0.0
      %1084 = vmatprep.subr.mxu0 0.0
      %1085 = vmatpush2.msra.mxu0 0.0
      %1086 = vmatprep.subr.mxu0 0.0
      %1087 = vmatpush2.msra.mxu0 0.0
      %1088 = vmatprep.mubr.f32.mxu0 0.0
      %v1089 = vand.u32 %v271, 4294901760
      %v1090 = vsub.f32 %v271, %v1089
      %1091 = vmatmul.mubr.f32.gmra.mxu0 %v1090
      %v1092 = vpop.f32.mrf.mxu0
      %v1093 = vadd.f32 %v831, %v1092
      %v1094 = vpop.f32.mrf.mxu0
      %1095 = vmatprep.mubr.f32.mxu0 0.0
      %v1096 = vand.u32 %v274, 4294901760
      %v1097 = vsub.f32 %v274, %v1096
      %1098 = vmatmul.mubr.f32.gmra.mxu0 %v1097
      %v1099 = vpop.f32.mrf.mxu0
      %v1100 = vadd.f32 %v837, %v1099
      %v1101 = vpop.f32.mrf.mxu0
      %1102 = vmatprep.mubr.f32.mxu0 0.0
      %v1103 = vand.u32 %v277, 4294901760
      %v1104 = vsub.f32 %v277, %v1103
      %1105 = vmatmul.mubr.f32.gmra.mxu0 %v1104
      %v1106 = vpop.f32.mrf.mxu0
      %v1107 = vadd.f32 %v843, %v1106
      %v1108 = vpop.f32.mrf.mxu0
      %1109 = vmatprep.mubr.f32.mxu0 0.0
      %v1110 = vand.u32 %v280, 4294901760
      %v1111 = vsub.f32 %v280, %v1110
      %1112 = vmatmul.mubr.f32.gmra.mxu0 %v1111
      %v1113 = vpop.f32.mrf.mxu0
      %v1114 = vadd.f32 %v849, %v1113
      %v1115 = vpop.f32.mrf.mxu0
      %1116 = vmatprep.mubr.f32.mxu0 0.0
      %v1117 = vand.u32 %v283, 4294901760
      %v1118 = vsub.f32 %v283, %v1117
      %1119 = vmatmul.mubr.f32.gmra.mxu0 %v1118
      %v1120 = vpop.f32.mrf.mxu0
      %v1121 = vadd.f32 %v855, %v1120
      %v1122 = vpop.f32.mrf.mxu0
      %1123 = vmatprep.mubr.f32.mxu0 0.0
      %v1124 = vand.u32 %v286, 4294901760
      %v1125 = vsub.f32 %v286, %v1124
      %1126 = vmatmul.mubr.f32.gmra.mxu0 %v1125
      %v1127 = vpop.f32.mrf.mxu0
      %v1128 = vadd.f32 %v861, %v1127
      %v1129 = vpop.f32.mrf.mxu0
      %1130 = vmatprep.mubr.f32.mxu0 0.0
      %v1131 = vand.u32 %v289, 4294901760
      %v1132 = vsub.f32 %v289, %v1131
      %1133 = vmatmul.mubr.f32.gmra.mxu0 %v1132
      %v1134 = vpop.f32.mrf.mxu0
      %v1135 = vadd.f32 %v867, %v1134
      %v1136 = vpop.f32.mrf.mxu0
      %1137 = vmatprep.mubr.f32.mxu0 0.0
      %v1138 = vand.u32 %v292, 4294901760
      %v1139 = vsub.f32 %v292, %v1138
      %1140 = vmatmul.mubr.f32.gmra.mxu0 %v1139
      %v1141 = vpop.f32.mrf.mxu0
      %v1142 = vadd.f32 %v873, %v1141
      %v1143 = vpop.f32.mrf.mxu0
      %1144 = vmatprep.mubr.f32.mxu0 0.0
      %v1145 = vand.u32 %v295, 4294901760
      %v1146 = vsub.f32 %v295, %v1145
      %1147 = vmatmul.mubr.f32.gmra.mxu0 %v1146
      %v1148 = vpop.f32.mrf.mxu0
      %v1149 = vadd.f32 %v879, %v1148
      %v1150 = vpop.f32.mrf.mxu0
      %1151 = vmatprep.mubr.f32.mxu0 0.0
      %v1152 = vand.u32 %v298, 4294901760
      %v1153 = vsub.f32 %v298, %v1152
      %1154 = vmatmul.mubr.f32.gmra.mxu0 %v1153
      %v1155 = vpop.f32.mrf.mxu0
      %v1156 = vadd.f32 %v885, %v1155
      %v1157 = vpop.f32.mrf.mxu0
      %1158 = vmatprep.mubr.f32.mxu0 0.0
      %v1159 = vand.u32 %v301, 4294901760
      %v1160 = vsub.f32 %v301, %v1159
      %1161 = vmatmul.mubr.f32.gmra.mxu0 %v1160
      %v1162 = vpop.f32.mrf.mxu0
      %v1163 = vadd.f32 %v891, %v1162
      %v1164 = vpop.f32.mrf.mxu0
      %1165 = vmatprep.mubr.f32.mxu0 0.0
      %v1166 = vand.u32 %v304, 4294901760
      %v1167 = vsub.f32 %v304, %v1166
      %1168 = vmatmul.mubr.f32.gmra.mxu0 %v1167
      %v1169 = vpop.f32.mrf.mxu0
      %v1170 = vadd.f32 %v897, %v1169
      %v1171 = vpop.f32.mrf.mxu0
      %1172 = vmatprep.mubr.f32.mxu0 0.0
      %v1173 = vand.u32 %v307, 4294901760
      %v1174 = vsub.f32 %v307, %v1173
      %1175 = vmatmul.mubr.f32.gmra.mxu0 %v1174
      %v1176 = vpop.f32.mrf.mxu0
      %v1177 = vadd.f32 %v903, %v1176
      %v1178 = vpop.f32.mrf.mxu0
      %1179 = vmatprep.mubr.f32.mxu0 0.0
      %v1180 = vand.u32 %v310, 4294901760
      %v1181 = vsub.f32 %v310, %v1180
      %1182 = vmatmul.mubr.f32.gmra.mxu0 %v1181
      %v1183 = vpop.f32.mrf.mxu0
      %v1184 = vadd.f32 %v909, %v1183
      %v1185 = vpop.f32.mrf.mxu0
      %1186 = vmatprep.mubr.f32.mxu0 0.0
      %v1187 = vand.u32 %v313, 4294901760
      %v1188 = vsub.f32 %v313, %v1187
      %1189 = vmatmul.mubr.f32.gmra.mxu0 %v1188
      %v1190 = vpop.f32.mrf.mxu0
      %v1191 = vadd.f32 %v915, %v1190
      %v1192 = vpop.f32.mrf.mxu0
      %1193 = vmatprep.mubr.f32.mxu0 0.0
      %v1194 = vand.u32 %v316, 4294901760
      %v1195 = vsub.f32 %v316, %v1194
      %1196 = vmatmul.mubr.f32.gmra.mxu0 %v1195
      %v1197 = vpop.f32.mrf.mxu0
      %v1198 = vadd.f32 %v921, %v1197
      %v1199 = vpop.f32.mrf.mxu0
      %1200 = vmatprep.mubr.f32.mxu0 0.0
      %v1201 = vand.u32 %v319, 4294901760
      %v1202 = vsub.f32 %v319, %v1201
      %1203 = vmatmul.mubr.f32.gmra.mxu0 %v1202
      %v1204 = vpop.f32.mrf.mxu0
      %v1205 = vadd.f32 %v927, %v1204
      %v1206 = vpop.f32.mrf.mxu0
      %1207 = vmatprep.mubr.f32.mxu0 0.0
      %v1208 = vand.u32 %v322, 4294901760
      %v1209 = vsub.f32 %v322, %v1208
      %1210 = vmatmul.mubr.f32.gmra.mxu0 %v1209
      %v1211 = vpop.f32.mrf.mxu0
      %v1212 = vadd.f32 %v933, %v1211
      %v1213 = vpop.f32.mrf.mxu0
      %1214 = vmatprep.mubr.f32.mxu0 0.0
      %v1215 = vand.u32 %v325, 4294901760
      %v1216 = vsub.f32 %v325, %v1215
      %1217 = vmatmul.mubr.f32.gmra.mxu0 %v1216
      %v1218 = vpop.f32.mrf.mxu0
      %v1219 = vadd.f32 %v939, %v1218
      %v1220 = vpop.f32.mrf.mxu0
      %1221 = vmatprep.mubr.f32.mxu0 0.0
      %v1222 = vand.u32 %v328, 4294901760
      %v1223 = vsub.f32 %v328, %v1222
      %1224 = vmatmul.mubr.f32.gmra.mxu0 %v1223
      %v1225 = vpop.f32.mrf.mxu0
      %v1226 = vadd.f32 %v945, %v1225
      %v1227 = vpop.f32.mrf.mxu0
      %1228 = vmatprep.mubr.f32.mxu0 0.0
      %v1229 = vand.u32 %v331, 4294901760
      %v1230 = vsub.f32 %v331, %v1229
      %1231 = vmatmul.mubr.f32.gmra.mxu0 %v1230
      %v1232 = vpop.f32.mrf.mxu0
      %v1233 = vadd.f32 %v951, %v1232
      %v1234 = vpop.f32.mrf.mxu0
      %1235 = vmatprep.mubr.f32.mxu0 0.0
      %v1236 = vand.u32 %v334, 4294901760
      %v1237 = vsub.f32 %v334, %v1236
      %1238 = vmatmul.mubr.f32.gmra.mxu0 %v1237
      %v1239 = vpop.f32.mrf.mxu0
      %v1240 = vadd.f32 %v957, %v1239
      %v1241 = vpop.f32.mrf.mxu0
      %1242 = vmatprep.mubr.f32.mxu0 0.0
      %v1243 = vand.u32 %v337, 4294901760
      %v1244 = vsub.f32 %v337, %v1243
      %1245 = vmatmul.mubr.f32.gmra.mxu0 %v1244
      %v1246 = vpop.f32.mrf.mxu0
      %v1247 = vadd.f32 %v963, %v1246
      %v1248 = vpop.f32.mrf.mxu0
      %1249 = vmatprep.mubr.f32.mxu0 0.0
      %v1250 = vand.u32 %v340, 4294901760
      %v1251 = vsub.f32 %v340, %v1250
      %1252 = vmatmul.mubr.f32.gmra.mxu0 %v1251
      %v1253 = vpop.f32.mrf.mxu0
      %v1254 = vadd.f32 %v969, %v1253
      %v1255 = vpop.f32.mrf.mxu0
      %1256 = vmatprep.mubr.f32.mxu0 0.0
      %v1257 = vand.u32 %v343, 4294901760
      %v1258 = vsub.f32 %v343, %v1257
      %1259 = vmatmul.mubr.f32.gmra.mxu0 %v1258
      %v1260 = vpop.f32.mrf.mxu0
      %v1261 = vadd.f32 %v975, %v1260
      %v1262 = vpop.f32.mrf.mxu0
      %1263 = vmatprep.mubr.f32.mxu0 0.0
      %v1264 = vand.u32 %v346, 4294901760
      %v1265 = vsub.f32 %v346, %v1264
      %1266 = vmatmul.mubr.f32.gmra.mxu0 %v1265
      %v1267 = vpop.f32.mrf.mxu0
      %v1268 = vadd.f32 %v981, %v1267
      %v1269 = vpop.f32.mrf.mxu0
      %1270 = vmatprep.mubr.f32.mxu0 0.0
      %v1271 = vand.u32 %v349, 4294901760
      %v1272 = vsub.f32 %v349, %v1271
      %1273 = vmatmul.mubr.f32.gmra.mxu0 %v1272
      %v1274 = vpop.f32.mrf.mxu0
      %v1275 = vadd.f32 %v987, %v1274
      %v1276 = vpop.f32.mrf.mxu0
      %1277 = vmatprep.mubr.f32.mxu0 0.0
      %v1278 = vand.u32 %v352, 4294901760
      %v1279 = vsub.f32 %v352, %v1278
      %1280 = vmatmul.mubr.f32.gmra.mxu0 %v1279
      %v1281 = vpop.f32.mrf.mxu0
      %v1282 = vadd.f32 %v993, %v1281
      %v1283 = vpop.f32.mrf.mxu0
      %1284 = vmatprep.mubr.f32.mxu0 0.0
      %v1285 = vand.u32 %v355, 4294901760
      %v1286 = vsub.f32 %v355, %v1285
      %1287 = vmatmul.mubr.f32.gmra.mxu0 %v1286
      %v1288 = vpop.f32.mrf.mxu0
      %v1289 = vadd.f32 %v999, %v1288
      %v1290 = vpop.f32.mrf.mxu0
      %1291 = vmatprep.mubr.f32.mxu0 0.0
      %v1292 = vand.u32 %v358, 4294901760
      %v1293 = vsub.f32 %v358, %v1292
      %1294 = vmatmul.mubr.f32.gmra.mxu0 %v1293
      %v1295 = vpop.f32.mrf.mxu0
      %v1296 = vadd.f32 %v1005, %v1295
      %v1297 = vpop.f32.mrf.mxu0
      %1298 = vmatprep.mubr.f32.mxu0 0.0
      %v1299 = vand.u32 %v361, 4294901760
      %v1300 = vsub.f32 %v361, %v1299
      %1301 = vmatmul.mubr.f32.gmra.mxu0 %v1300
      %v1302 = vpop.f32.mrf.mxu0
      %v1303 = vadd.f32 %v1011, %v1302
      %v1304 = vpop.f32.mrf.mxu0
      %1305 = vmatprep.mubr.f32.mxu0 0.0
      %v1306 = vand.u32 %v364, 4294901760
      %v1307 = vsub.f32 %v364, %v1306
      %1308 = vmatmul.mubr.f32.gmra.mxu0 %v1307
      %v1309 = vpop.f32.mrf.mxu0
      %v1310 = vadd.f32 %v1017, %v1309
      %v1311 = vpop.f32.mrf.mxu0
      %1312 = vdwg.mxu0
      %1313 = vmatprep.subr.mxu0 0.0
      %1314 = vmatpush1.msra.mxu0 0.0
      %1315 = vmatprep.subr.mxu0 0.0
      %1316 = vmatpush1.msra.mxu0 0.0
      %1317 = vmatprep.subr.mxu0 0.0
      %1318 = vmatpush1.msra.mxu0 0.0
      %1319 = vmatprep.subr.mxu0 0.0
      %1320 = vmatpush1.msra.mxu0 0.0
      %1321 = vmatprep.subr.mxu0 0.0
      %1322 = vmatpush1.msra.mxu0 0.0
      %1323 = vmatprep.subr.mxu0 0.0
      %1324 = vmatpush1.msra.mxu0 0.0
      %1325 = vmatprep.subr.mxu0 0.0
      %1326 = vmatpush1.msra.mxu0 0.0
      %1327 = vmatprep.subr.mxu0 0.0
      %1328 = vmatpush1.msra.mxu0 0.0
      %1329 = vmatprep.subr.mxu0 0.0
      %1330 = vmatpush1.msra.mxu0 0.0
      %1331 = vmatprep.subr.mxu0 0.0
      %1332 = vmatpush1.msra.mxu0 0.0
      %1333 = vmatprep.subr.mxu0 0.0
      %1334 = vmatpush1.msra.mxu0 0.0
      %1335 = vmatprep.subr.mxu0 0.0
      %1336 = vmatpush1.msra.mxu0 0.0
      %1337 = vmatprep.subr.mxu0 0.0
      %1338 = vmatpush1.msra.mxu0 0.0
      %1339 = vmatprep.subr.mxu0 0.0
      %1340 = vmatpush1.msra.mxu0 0.0
      %1341 = vmatprep.subr.mxu0 0.0
      %v1342 = vand.u32 %v261, 4294901760
      %1343 = vmatpush1.msra.mxu0 %v1342
      %1344 = vmatprep.subr.mxu0 0.0
      %v1345 = vand.u32 %v260, 4294901760
      %1346 = vmatpush1.msra.mxu0 %v1345
      %1347 = vmatprep.subr.mxu0 0.0
      %1348 = vmatpush2.msra.mxu0 0.0
      %1349 = vmatprep.subr.mxu0 0.0
      %1350 = vmatpush2.msra.mxu0 0.0
      %1351 = vmatprep.subr.mxu0 0.0
      %1352 = vmatpush2.msra.mxu0 0.0
      %1353 = vmatprep.subr.mxu0 0.0
      %1354 = vmatpush2.msra.mxu0 0.0
      %1355 = vmatprep.subr.mxu0 0.0
      %1356 = vmatpush2.msra.mxu0 0.0
      %1357 = vmatprep.subr.mxu0 0.0
      %1358 = vmatpush2.msra.mxu0 0.0
      %1359 = vmatprep.subr.mxu0 0.0
      %1360 = vmatpush2.msra.mxu0 0.0
      %1361 = vmatprep.subr.mxu0 0.0
      %1362 = vmatpush2.msra.mxu0 0.0
      %1363 = vmatprep.subr.mxu0 0.0
      %1364 = vmatpush2.msra.mxu0 0.0
      %1365 = vmatprep.subr.mxu0 0.0
      %1366 = vmatpush2.msra.mxu0 0.0
      %1367 = vmatprep.subr.mxu0 0.0
      %1368 = vmatpush2.msra.mxu0 0.0
      %1369 = vmatprep.subr.mxu0 0.0
      %1370 = vmatpush2.msra.mxu0 0.0
      %1371 = vmatprep.subr.mxu0 0.0
      %1372 = vmatpush2.msra.mxu0 0.0
      %1373 = vmatprep.subr.mxu0 0.0
      %1374 = vmatpush2.msra.mxu0 0.0
      %1375 = vmatprep.subr.mxu0 0.0
      %1376 = vmatpush2.msra.mxu0 0.0
      %1377 = vmatprep.subr.mxu0 0.0
      %1378 = vmatpush2.msra.mxu0 0.0
      %1379 = vmatprep.mubr.f32.mxu0 0.0
      %v1380 = vand.u32 %v271, 4294901760
      %v1381 = vsub.f32 %v271, %v1380
      %v1382 = vand.u32 %v1381, 4294901760
      %1383 = vmatmul.mubr.f32.gmra.mxu0 %v1382
      %v1384 = vpop.f32.mrf.mxu0
      %v1385 = vadd.f32 %v1093, %v1384
      %v1386 = vpop.f32.mrf.mxu0
      %1387 = vmatprep.mubr.f32.mxu0 0.0
      %v1388 = vand.u32 %v274, 4294901760
      %v1389 = vsub.f32 %v274, %v1388
      %v1390 = vand.u32 %v1389, 4294901760
      %1391 = vmatmul.mubr.f32.gmra.mxu0 %v1390
      %v1392 = vpop.f32.mrf.mxu0
      %v1393 = vadd.f32 %v1100, %v1392
      %v1394 = vpop.f32.mrf.mxu0
      %1395 = vmatprep.mubr.f32.mxu0 0.0
      %v1396 = vand.u32 %v277, 4294901760
      %v1397 = vsub.f32 %v277, %v1396
      %v1398 = vand.u32 %v1397, 4294901760
      %1399 = vmatmul.mubr.f32.gmra.mxu0 %v1398
      %v1400 = vpop.f32.mrf.mxu0
      %v1401 = vadd.f32 %v1107, %v1400
      %v1402 = vpop.f32.mrf.mxu0
      %1403 = vmatprep.mubr.f32.mxu0 0.0
      %v1404 = vand.u32 %v280, 4294901760
      %v1405 = vsub.f32 %v280, %v1404
      %v1406 = vand.u32 %v1405, 4294901760
      %1407 = vmatmul.mubr.f32.gmra.mxu0 %v1406
      %v1408 = vpop.f32.mrf.mxu0
      %v1409 = vadd.f32 %v1114, %v1408
      %v1410 = vpop.f32.mrf.mxu0
      %1411 = vmatprep.mubr.f32.mxu0 0.0
      %v1412 = vand.u32 %v283, 4294901760
      %v1413 = vsub.f32 %v283, %v1412
      %v1414 = vand.u32 %v1413, 4294901760
      %1415 = vmatmul.mubr.f32.gmra.mxu0 %v1414
      %v1416 = vpop.f32.mrf.mxu0
      %v1417 = vadd.f32 %v1121, %v1416
      %v1418 = vpop.f32.mrf.mxu0
      %1419 = vmatprep.mubr.f32.mxu0 0.0
      %v1420 = vand.u32 %v286, 4294901760
      %v1421 = vsub.f32 %v286, %v1420
      %v1422 = vand.u32 %v1421, 4294901760
      %1423 = vmatmul.mubr.f32.gmra.mxu0 %v1422
      %v1424 = vpop.f32.mrf.mxu0
      %v1425 = vadd.f32 %v1128, %v1424
      %v1426 = vpop.f32.mrf.mxu0
      %1427 = vmatprep.mubr.f32.mxu0 0.0
      %v1428 = vand.u32 %v289, 4294901760
      %v1429 = vsub.f32 %v289, %v1428
      %v1430 = vand.u32 %v1429, 4294901760
      %1431 = vmatmul.mubr.f32.gmra.mxu0 %v1430
      %v1432 = vpop.f32.mrf.mxu0
      %v1433 = vadd.f32 %v1135, %v1432
      %v1434 = vpop.f32.mrf.mxu0
      %1435 = vmatprep.mubr.f32.mxu0 0.0
      %v1436 = vand.u32 %v292, 4294901760
      %v1437 = vsub.f32 %v292, %v1436
      %v1438 = vand.u32 %v1437, 4294901760
      %1439 = vmatmul.mubr.f32.gmra.mxu0 %v1438
      %v1440 = vpop.f32.mrf.mxu0
      %v1441 = vadd.f32 %v1142, %v1440
      %v1442 = vpop.f32.mrf.mxu0
      %1443 = vmatprep.mubr.f32.mxu0 0.0
      %v1444 = vand.u32 %v295, 4294901760
      %v1445 = vsub.f32 %v295, %v1444
      %v1446 = vand.u32 %v1445, 4294901760
      %1447 = vmatmul.mubr.f32.gmra.mxu0 %v1446
      %v1448 = vpop.f32.mrf.mxu0
      %v1449 = vadd.f32 %v1149, %v1448
      %v1450 = vpop.f32.mrf.mxu0
      %1451 = vmatprep.mubr.f32.mxu0 0.0
      %v1452 = vand.u32 %v298, 4294901760
      %v1453 = vsub.f32 %v298, %v1452
      %v1454 = vand.u32 %v1453, 4294901760
      %1455 = vmatmul.mubr.f32.gmra.mxu0 %v1454
      %v1456 = vpop.f32.mrf.mxu0
      %v1457 = vadd.f32 %v1156, %v1456
      %v1458 = vpop.f32.mrf.mxu0
      %1459 = vmatprep.mubr.f32.mxu0 0.0
      %v1460 = vand.u32 %v301, 4294901760
      %v1461 = vsub.f32 %v301, %v1460
      %v1462 = vand.u32 %v1461, 4294901760
      %1463 = vmatmul.mubr.f32.gmra.mxu0 %v1462
      %v1464 = vpop.f32.mrf.mxu0
      %v1465 = vadd.f32 %v1163, %v1464
      %v1466 = vpop.f32.mrf.mxu0
      %1467 = vmatprep.mubr.f32.mxu0 0.0
      %v1468 = vand.u32 %v304, 4294901760
      %v1469 = vsub.f32 %v304, %v1468
      %v1470 = vand.u32 %v1469, 4294901760
      %1471 = vmatmul.mubr.f32.gmra.mxu0 %v1470
      %v1472 = vpop.f32.mrf.mxu0
      %v1473 = vadd.f32 %v1170, %v1472
      %v1474 = vpop.f32.mrf.mxu0
      %1475 = vmatprep.mubr.f32.mxu0 0.0
      %v1476 = vand.u32 %v307, 4294901760
      %v1477 = vsub.f32 %v307, %v1476
      %v1478 = vand.u32 %v1477, 4294901760
      %1479 = vmatmul.mubr.f32.gmra.mxu0 %v1478
      %v1480 = vpop.f32.mrf.mxu0
      %v1481 = vadd.f32 %v1177, %v1480
      %v1482 = vpop.f32.mrf.mxu0
      %1483 = vmatprep.mubr.f32.mxu0 0.0
      %v1484 = vand.u32 %v310, 4294901760
      %v1485 = vsub.f32 %v310, %v1484
      %v1486 = vand.u32 %v1485, 4294901760
      %1487 = vmatmul.mubr.f32.gmra.mxu0 %v1486
      %v1488 = vpop.f32.mrf.mxu0
      %v1489 = vadd.f32 %v1184, %v1488
      %v1490 = vpop.f32.mrf.mxu0
      %1491 = vmatprep.mubr.f32.mxu0 0.0
      %v1492 = vand.u32 %v313, 4294901760
      %v1493 = vsub.f32 %v313, %v1492
      %v1494 = vand.u32 %v1493, 4294901760
      %1495 = vmatmul.mubr.f32.gmra.mxu0 %v1494
      %v1496 = vpop.f32.mrf.mxu0
      %v1497 = vadd.f32 %v1191, %v1496
      %v1498 = vpop.f32.mrf.mxu0
      %1499 = vmatprep.mubr.f32.mxu0 0.0
      %v1500 = vand.u32 %v316, 4294901760
      %v1501 = vsub.f32 %v316, %v1500
      %v1502 = vand.u32 %v1501, 4294901760
      %1503 = vmatmul.mubr.f32.gmra.mxu0 %v1502
      %v1504 = vpop.f32.mrf.mxu0
      %v1505 = vadd.f32 %v1198, %v1504
      %v1506 = vpop.f32.mrf.mxu0
      %1507 = vmatprep.mubr.f32.mxu0 0.0
      %v1508 = vand.u32 %v319, 4294901760
      %v1509 = vsub.f32 %v319, %v1508
      %v1510 = vand.u32 %v1509, 4294901760
      %1511 = vmatmul.mubr.f32.gmra.mxu0 %v1510
      %v1512 = vpop.f32.mrf.mxu0
      %v1513 = vadd.f32 %v1205, %v1512
      %v1514 = vpop.f32.mrf.mxu0
      %1515 = vmatprep.mubr.f32.mxu0 0.0
      %v1516 = vand.u32 %v322, 4294901760
      %v1517 = vsub.f32 %v322, %v1516
      %v1518 = vand.u32 %v1517, 4294901760
      %1519 = vmatmul.mubr.f32.gmra.mxu0 %v1518
      %v1520 = vpop.f32.mrf.mxu0
      %v1521 = vadd.f32 %v1212, %v1520
      %v1522 = vpop.f32.mrf.mxu0
      %1523 = vmatprep.mubr.f32.mxu0 0.0
      %v1524 = vand.u32 %v325, 4294901760
      %v1525 = vsub.f32 %v325, %v1524
      %v1526 = vand.u32 %v1525, 4294901760
      %1527 = vmatmul.mubr.f32.gmra.mxu0 %v1526
      %v1528 = vpop.f32.mrf.mxu0
      %v1529 = vadd.f32 %v1219, %v1528
      %v1530 = vpop.f32.mrf.mxu0
      %1531 = vmatprep.mubr.f32.mxu0 0.0
      %v1532 = vand.u32 %v328, 4294901760
      %v1533 = vsub.f32 %v328, %v1532
      %v1534 = vand.u32 %v1533, 4294901760
      %1535 = vmatmul.mubr.f32.gmra.mxu0 %v1534
      %v1536 = vpop.f32.mrf.mxu0
      %v1537 = vadd.f32 %v1226, %v1536
      %v1538 = vpop.f32.mrf.mxu0
      %1539 = vmatprep.mubr.f32.mxu0 0.0
      %v1540 = vand.u32 %v331, 4294901760
      %v1541 = vsub.f32 %v331, %v1540
      %v1542 = vand.u32 %v1541, 4294901760
      %1543 = vmatmul.mubr.f32.gmra.mxu0 %v1542
      %v1544 = vpop.f32.mrf.mxu0
      %v1545 = vadd.f32 %v1233, %v1544
      %v1546 = vpop.f32.mrf.mxu0
      %1547 = vmatprep.mubr.f32.mxu0 0.0
      %v1548 = vand.u32 %v334, 4294901760
      %v1549 = vsub.f32 %v334, %v1548
      %v1550 = vand.u32 %v1549, 4294901760
      %1551 = vmatmul.mubr.f32.gmra.mxu0 %v1550
      %v1552 = vpop.f32.mrf.mxu0
      %v1553 = vadd.f32 %v1240, %v1552
      %v1554 = vpop.f32.mrf.mxu0
      %1555 = vmatprep.mubr.f32.mxu0 0.0
      %v1556 = vand.u32 %v337, 4294901760
      %v1557 = vsub.f32 %v337, %v1556
      %v1558 = vand.u32 %v1557, 4294901760
      %1559 = vmatmul.mubr.f32.gmra.mxu0 %v1558
      %v1560 = vpop.f32.mrf.mxu0
      %v1561 = vadd.f32 %v1247, %v1560
      %v1562 = vpop.f32.mrf.mxu0
      %1563 = vmatprep.mubr.f32.mxu0 0.0
      %v1564 = vand.u32 %v340, 4294901760
      %v1565 = vsub.f32 %v340, %v1564
      %v1566 = vand.u32 %v1565, 4294901760
      %1567 = vmatmul.mubr.f32.gmra.mxu0 %v1566
      %v1568 = vpop.f32.mrf.mxu0
      %v1569 = vadd.f32 %v1254, %v1568
      %v1570 = vpop.f32.mrf.mxu0
      %1571 = vmatprep.mubr.f32.mxu0 0.0
      %v1572 = vand.u32 %v343, 4294901760
      %v1573 = vsub.f32 %v343, %v1572
      %v1574 = vand.u32 %v1573, 4294901760
      %1575 = vmatmul.mubr.f32.gmra.mxu0 %v1574
      %v1576 = vpop.f32.mrf.mxu0
      %v1577 = vadd.f32 %v1261, %v1576
      %v1578 = vpop.f32.mrf.mxu0
      %1579 = vmatprep.mubr.f32.mxu0 0.0
      %v1580 = vand.u32 %v346, 4294901760
      %v1581 = vsub.f32 %v346, %v1580
      %v1582 = vand.u32 %v1581, 4294901760
      %1583 = vmatmul.mubr.f32.gmra.mxu0 %v1582
      %v1584 = vpop.f32.mrf.mxu0
      %v1585 = vadd.f32 %v1268, %v1584
      %v1586 = vpop.f32.mrf.mxu0
      %1587 = vmatprep.mubr.f32.mxu0 0.0
      %v1588 = vand.u32 %v349, 4294901760
      %v1589 = vsub.f32 %v349, %v1588
      %v1590 = vand.u32 %v1589, 4294901760
      %1591 = vmatmul.mubr.f32.gmra.mxu0 %v1590
      %v1592 = vpop.f32.mrf.mxu0
      %v1593 = vadd.f32 %v1275, %v1592
      %v1594 = vpop.f32.mrf.mxu0
      %1595 = vmatprep.mubr.f32.mxu0 0.0
      %v1596 = vand.u32 %v352, 4294901760
      %v1597 = vsub.f32 %v352, %v1596
      %v1598 = vand.u32 %v1597, 4294901760
      %1599 = vmatmul.mubr.f32.gmra.mxu0 %v1598
      %v1600 = vpop.f32.mrf.mxu0
      %v1601 = vadd.f32 %v1282, %v1600
      %v1602 = vpop.f32.mrf.mxu0
      %1603 = vmatprep.mubr.f32.mxu0 0.0
      %v1604 = vand.u32 %v355, 4294901760
      %v1605 = vsub.f32 %v355, %v1604
      %v1606 = vand.u32 %v1605, 4294901760
      %1607 = vmatmul.mubr.f32.gmra.mxu0 %v1606
      %v1608 = vpop.f32.mrf.mxu0
      %v1609 = vadd.f32 %v1289, %v1608
      %v1610 = vpop.f32.mrf.mxu0
      %1611 = vmatprep.mubr.f32.mxu0 0.0
      %v1612 = vand.u32 %v358, 4294901760
      %v1613 = vsub.f32 %v358, %v1612
      %v1614 = vand.u32 %v1613, 4294901760
      %1615 = vmatmul.mubr.f32.gmra.mxu0 %v1614
      %v1616 = vpop.f32.mrf.mxu0
      %v1617 = vadd.f32 %v1296, %v1616
      %v1618 = vpop.f32.mrf.mxu0
      %1619 = vmatprep.mubr.f32.mxu0 0.0
      %v1620 = vand.u32 %v361, 4294901760
      %v1621 = vsub.f32 %v361, %v1620
      %v1622 = vand.u32 %v1621, 4294901760
      %1623 = vmatmul.mubr.f32.gmra.mxu0 %v1622
      %v1624 = vpop.f32.mrf.mxu0
      %v1625 = vadd.f32 %v1303, %v1624
      %v1626 = vpop.f32.mrf.mxu0
      %1627 = vmatprep.mubr.f32.mxu0 0.0
      %v1628 = vand.u32 %v364, 4294901760
      %v1629 = vsub.f32 %v364, %v1628
      %v1630 = vand.u32 %v1629, 4294901760
      %1631 = vmatmul.mubr.f32.gmra.mxu0 %v1630
      %v1632 = vpop.f32.mrf.mxu0
      %v1633 = vadd.f32 %v1310, %v1632
      %v1634 = vpop.f32.mrf.mxu0
      %1635 = vdwg.mxu0
      %1636 = vmatprep.subr.mxu0 0.0
      %1637 = vmatpush1.msra.mxu0 0.0
      %1638 = vmatprep.subr.mxu0 0.0
      %1639 = vmatpush1.msra.mxu0 0.0
      %1640 = vmatprep.subr.mxu0 0.0
      %1641 = vmatpush1.msra.mxu0 0.0
      %1642 = vmatprep.subr.mxu0 0.0
      %1643 = vmatpush1.msra.mxu0 0.0
      %1644 = vmatprep.subr.mxu0 0.0
      %1645 = vmatpush1.msra.mxu0 0.0
      %1646 = vmatprep.subr.mxu0 0.0
      %1647 = vmatpush1.msra.mxu0 0.0
      %1648 = vmatprep.subr.mxu0 0.0
      %1649 = vmatpush1.msra.mxu0 0.0
      %1650 = vmatprep.subr.mxu0 0.0
      %1651 = vmatpush1.msra.mxu0 0.0
      %1652 = vmatprep.subr.mxu0 0.0
      %1653 = vmatpush1.msra.mxu0 0.0
      %1654 = vmatprep.subr.mxu0 0.0
      %1655 = vmatpush1.msra.mxu0 0.0
      %1656 = vmatprep.subr.mxu0 0.0
      %1657 = vmatpush1.msra.mxu0 0.0
      %1658 = vmatprep.subr.mxu0 0.0
      %1659 = vmatpush1.msra.mxu0 0.0
      %1660 = vmatprep.subr.mxu0 0.0
      %1661 = vmatpush1.msra.mxu0 0.0
      %1662 = vmatprep.subr.mxu0 0.0
      %1663 = vmatpush1.msra.mxu0 0.0
      %1664 = vmatprep.subr.mxu0 0.0
      %v1665 = vand.u32 %v261, 4294901760
      %v1666 = vsub.f32 %v261, %v1665
      %v1667 = vand.u32 %v1666, 4294901760
      %1668 = vmatpush1.msra.mxu0 %v1667
      %1669 = vmatprep.subr.mxu0 0.0
      %v1670 = vand.u32 %v260, 4294901760
      %v1671 = vsub.f32 %v260, %v1670
      %v1672 = vand.u32 %v1671, 4294901760
      %1673 = vmatpush1.msra.mxu0 %v1672
      %1674 = vmatprep.subr.mxu0 0.0
      %1675 = vmatpush2.msra.mxu0 0.0
      %1676 = vmatprep.subr.mxu0 0.0
      %1677 = vmatpush2.msra.mxu0 0.0
      %1678 = vmatprep.subr.mxu0 0.0
      %1679 = vmatpush2.msra.mxu0 0.0
      %1680 = vmatprep.subr.mxu0 0.0
      %1681 = vmatpush2.msra.mxu0 0.0
      %1682 = vmatprep.subr.mxu0 0.0
      %1683 = vmatpush2.msra.mxu0 0.0
      %1684 = vmatprep.subr.mxu0 0.0
      %1685 = vmatpush2.msra.mxu0 0.0
      %1686 = vmatprep.subr.mxu0 0.0
      %1687 = vmatpush2.msra.mxu0 0.0
      %1688 = vmatprep.subr.mxu0 0.0
      %1689 = vmatpush2.msra.mxu0 0.0
      %1690 = vmatprep.subr.mxu0 0.0
      %1691 = vmatpush2.msra.mxu0 0.0
      %1692 = vmatprep.subr.mxu0 0.0
      %1693 = vmatpush2.msra.mxu0 0.0
      %1694 = vmatprep.subr.mxu0 0.0
      %1695 = vmatpush2.msra.mxu0 0.0
      %1696 = vmatprep.subr.mxu0 0.0
      %1697 = vmatpush2.msra.mxu0 0.0
      %1698 = vmatprep.subr.mxu0 0.0
      %1699 = vmatpush2.msra.mxu0 0.0
      %1700 = vmatprep.subr.mxu0 0.0
      %1701 = vmatpush2.msra.mxu0 0.0
      %1702 = vmatprep.subr.mxu0 0.0
      %1703 = vmatpush2.msra.mxu0 0.0
      %1704 = vmatprep.subr.mxu0 0.0
      %1705 = vmatpush2.msra.mxu0 0.0
      %1706 = vmatprep.mubr.f32.mxu0 0.0
      %v1707 = vand.u32 %v271, 4294901760
      %1708 = vmatmul.mubr.f32.gmra.mxu0 %v1707
      %v1709 = vpop.f32.mrf.mxu0
      %v1710 = vadd.f32 %v1385, %v1709
      %v1711 = vpop.f32.mrf.mxu0
      %1712 = vmatprep.mubr.f32.mxu0 0.0
      %v1713 = vand.u32 %v274, 4294901760
      %1714 = vmatmul.mubr.f32.gmra.mxu0 %v1713
      %v1715 = vpop.f32.mrf.mxu0
      %v1716 = vadd.f32 %v1393, %v1715
      %v1717 = vpop.f32.mrf.mxu0
      %1718 = vmatprep.mubr.f32.mxu0 0.0
      %v1719 = vand.u32 %v277, 4294901760
      %1720 = vmatmul.mubr.f32.gmra.mxu0 %v1719
      %v1721 = vpop.f32.mrf.mxu0
      %v1722 = vadd.f32 %v1401, %v1721
      %v1723 = vpop.f32.mrf.mxu0
      %1724 = vmatprep.mubr.f32.mxu0 0.0
      %v1725 = vand.u32 %v280, 4294901760
      %1726 = vmatmul.mubr.f32.gmra.mxu0 %v1725
      %v1727 = vpop.f32.mrf.mxu0
      %v1728 = vadd.f32 %v1409, %v1727
      %v1729 = vpop.f32.mrf.mxu0
      %1730 = vmatprep.mubr.f32.mxu0 0.0
      %v1731 = vand.u32 %v283, 4294901760
      %1732 = vmatmul.mubr.f32.gmra.mxu0 %v1731
      %v1733 = vpop.f32.mrf.mxu0
      %v1734 = vadd.f32 %v1417, %v1733
      %v1735 = vpop.f32.mrf.mxu0
      %1736 = vmatprep.mubr.f32.mxu0 0.0
      %v1737 = vand.u32 %v286, 4294901760
      %1738 = vmatmul.mubr.f32.gmra.mxu0 %v1737
      %v1739 = vpop.f32.mrf.mxu0
      %v1740 = vadd.f32 %v1425, %v1739
      %v1741 = vpop.f32.mrf.mxu0
      %1742 = vmatprep.mubr.f32.mxu0 0.0
      %v1743 = vand.u32 %v289, 4294901760
      %1744 = vmatmul.mubr.f32.gmra.mxu0 %v1743
      %v1745 = vpop.f32.mrf.mxu0
      %v1746 = vadd.f32 %v1433, %v1745
      %v1747 = vpop.f32.mrf.mxu0
      %1748 = vmatprep.mubr.f32.mxu0 0.0
      %v1749 = vand.u32 %v292, 4294901760
      %1750 = vmatmul.mubr.f32.gmra.mxu0 %v1749
      %v1751 = vpop.f32.mrf.mxu0
      %v1752 = vadd.f32 %v1441, %v1751
      %v1753 = vpop.f32.mrf.mxu0
      %1754 = vmatprep.mubr.f32.mxu0 0.0
      %v1755 = vand.u32 %v295, 4294901760
      %1756 = vmatmul.mubr.f32.gmra.mxu0 %v1755
      %v1757 = vpop.f32.mrf.mxu0
      %v1758 = vadd.f32 %v1449, %v1757
      %v1759 = vpop.f32.mrf.mxu0
      %1760 = vmatprep.mubr.f32.mxu0 0.0
      %v1761 = vand.u32 %v298, 4294901760
      %1762 = vmatmul.mubr.f32.gmra.mxu0 %v1761
      %v1763 = vpop.f32.mrf.mxu0
      %v1764 = vadd.f32 %v1457, %v1763
      %v1765 = vpop.f32.mrf.mxu0
      %1766 = vmatprep.mubr.f32.mxu0 0.0
      %v1767 = vand.u32 %v301, 4294901760
      %1768 = vmatmul.mubr.f32.gmra.mxu0 %v1767
      %v1769 = vpop.f32.mrf.mxu0
      %v1770 = vadd.f32 %v1465, %v1769
      %v1771 = vpop.f32.mrf.mxu0
      %1772 = vmatprep.mubr.f32.mxu0 0.0
      %v1773 = vand.u32 %v304, 4294901760
      %1774 = vmatmul.mubr.f32.gmra.mxu0 %v1773
      %v1775 = vpop.f32.mrf.mxu0
      %v1776 = vadd.f32 %v1473, %v1775
      %v1777 = vpop.f32.mrf.mxu0
      %1778 = vmatprep.mubr.f32.mxu0 0.0
      %v1779 = vand.u32 %v307, 4294901760
      %1780 = vmatmul.mubr.f32.gmra.mxu0 %v1779
      %v1781 = vpop.f32.mrf.mxu0
      %v1782 = vadd.f32 %v1481, %v1781
      %v1783 = vpop.f32.mrf.mxu0
      %1784 = vmatprep.mubr.f32.mxu0 0.0
      %v1785 = vand.u32 %v310, 4294901760
      %1786 = vmatmul.mubr.f32.gmra.mxu0 %v1785
      %v1787 = vpop.f32.mrf.mxu0
      %v1788 = vadd.f32 %v1489, %v1787
      %v1789 = vpop.f32.mrf.mxu0
      %1790 = vmatprep.mubr.f32.mxu0 0.0
      %v1791 = vand.u32 %v313, 4294901760
      %1792 = vmatmul.mubr.f32.gmra.mxu0 %v1791
      %v1793 = vpop.f32.mrf.mxu0
      %v1794 = vadd.f32 %v1497, %v1793
      %v1795 = vpop.f32.mrf.mxu0
      %1796 = vmatprep.mubr.f32.mxu0 0.0
      %v1797 = vand.u32 %v316, 4294901760
      %1798 = vmatmul.mubr.f32.gmra.mxu0 %v1797
      %v1799 = vpop.f32.mrf.mxu0
      %v1800 = vadd.f32 %v1505, %v1799
      %v1801 = vpop.f32.mrf.mxu0
      %1802 = vmatprep.mubr.f32.mxu0 0.0
      %v1803 = vand.u32 %v319, 4294901760
      %1804 = vmatmul.mubr.f32.gmra.mxu0 %v1803
      %v1805 = vpop.f32.mrf.mxu0
      %v1806 = vadd.f32 %v1513, %v1805
      %v1807 = vpop.f32.mrf.mxu0
      %1808 = vmatprep.mubr.f32.mxu0 0.0
      %v1809 = vand.u32 %v322, 4294901760
      %1810 = vmatmul.mubr.f32.gmra.mxu0 %v1809
      %v1811 = vpop.f32.mrf.mxu0
      %v1812 = vadd.f32 %v1521, %v1811
      %v1813 = vpop.f32.mrf.mxu0
      %1814 = vmatprep.mubr.f32.mxu0 0.0
      %v1815 = vand.u32 %v325, 4294901760
      %1816 = vmatmul.mubr.f32.gmra.mxu0 %v1815
      %v1817 = vpop.f32.mrf.mxu0
      %v1818 = vadd.f32 %v1529, %v1817
      %v1819 = vpop.f32.mrf.mxu0
      %1820 = vmatprep.mubr.f32.mxu0 0.0
      %v1821 = vand.u32 %v328, 4294901760
      %1822 = vmatmul.mubr.f32.gmra.mxu0 %v1821
      %v1823 = vpop.f32.mrf.mxu0
      %v1824 = vadd.f32 %v1537, %v1823
      %v1825 = vpop.f32.mrf.mxu0
      %1826 = vmatprep.mubr.f32.mxu0 0.0
      %v1827 = vand.u32 %v331, 4294901760
      %1828 = vmatmul.mubr.f32.gmra.mxu0 %v1827
      %v1829 = vpop.f32.mrf.mxu0
      %v1830 = vadd.f32 %v1545, %v1829
      %v1831 = vpop.f32.mrf.mxu0
      %1832 = vmatprep.mubr.f32.mxu0 0.0
      %v1833 = vand.u32 %v334, 4294901760
      %1834 = vmatmul.mubr.f32.gmra.mxu0 %v1833
      %v1835 = vpop.f32.mrf.mxu0
      %v1836 = vadd.f32 %v1553, %v1835
      %v1837 = vpop.f32.mrf.mxu0
      %1838 = vmatprep.mubr.f32.mxu0 0.0
      %v1839 = vand.u32 %v337, 4294901760
      %1840 = vmatmul.mubr.f32.gmra.mxu0 %v1839
      %v1841 = vpop.f32.mrf.mxu0
      %v1842 = vadd.f32 %v1561, %v1841
      %v1843 = vpop.f32.mrf.mxu0
      %1844 = vmatprep.mubr.f32.mxu0 0.0
      %v1845 = vand.u32 %v340, 4294901760
      %1846 = vmatmul.mubr.f32.gmra.mxu0 %v1845
      %v1847 = vpop.f32.mrf.mxu0
      %v1848 = vadd.f32 %v1569, %v1847
      %v1849 = vpop.f32.mrf.mxu0
      %1850 = vmatprep.mubr.f32.mxu0 0.0
      %v1851 = vand.u32 %v343, 4294901760
      %1852 = vmatmul.mubr.f32.gmra.mxu0 %v1851
      %v1853 = vpop.f32.mrf.mxu0
      %v1854 = vadd.f32 %v1577, %v1853
      %v1855 = vpop.f32.mrf.mxu0
      %1856 = vmatprep.mubr.f32.mxu0 0.0
      %v1857 = vand.u32 %v346, 4294901760
      %1858 = vmatmul.mubr.f32.gmra.mxu0 %v1857
      %v1859 = vpop.f32.mrf.mxu0
      %v1860 = vadd.f32 %v1585, %v1859
      %v1861 = vpop.f32.mrf.mxu0
      %1862 = vmatprep.mubr.f32.mxu0 0.0
      %v1863 = vand.u32 %v349, 4294901760
      %1864 = vmatmul.mubr.f32.gmra.mxu0 %v1863
      %v1865 = vpop.f32.mrf.mxu0
      %v1866 = vadd.f32 %v1593, %v1865
      %v1867 = vpop.f32.mrf.mxu0
      %1868 = vmatprep.mubr.f32.mxu0 0.0
      %v1869 = vand.u32 %v352, 4294901760
      %1870 = vmatmul.mubr.f32.gmra.mxu0 %v1869
      %v1871 = vpop.f32.mrf.mxu0
      %v1872 = vadd.f32 %v1601, %v1871
      %v1873 = vpop.f32.mrf.mxu0
      %1874 = vmatprep.mubr.f32.mxu0 0.0
      %v1875 = vand.u32 %v355, 4294901760
      %1876 = vmatmul.mubr.f32.gmra.mxu0 %v1875
      %v1877 = vpop.f32.mrf.mxu0
      %v1878 = vadd.f32 %v1609, %v1877
      %v1879 = vpop.f32.mrf.mxu0
      %1880 = vmatprep.mubr.f32.mxu0 0.0
      %v1881 = vand.u32 %v358, 4294901760
      %1882 = vmatmul.mubr.f32.gmra.mxu0 %v1881
      %v1883 = vpop.f32.mrf.mxu0
      %v1884 = vadd.f32 %v1617, %v1883
      %v1885 = vpop.f32.mrf.mxu0
      %1886 = vmatprep.mubr.f32.mxu0 0.0
      %v1887 = vand.u32 %v361, 4294901760
      %1888 = vmatmul.mubr.f32.gmra.mxu0 %v1887
      %v1889 = vpop.f32.mrf.mxu0
      %v1890 = vadd.f32 %v1625, %v1889
      %v1891 = vpop.f32.mrf.mxu0
      %1892 = vmatprep.mubr.f32.mxu0 0.0
      %v1893 = vand.u32 %v364, 4294901760
      %1894 = vmatmul.mubr.f32.gmra.mxu0 %v1893
      %v1895 = vpop.f32.mrf.mxu0
      %v1896 = vadd.f32 %v1633, %v1895
      %v1897 = vpop.f32.mrf.mxu0
      %1898 = vdwg.mxu0
      %1899 = vmatprep.subr.mxu0 0.0
      %1900 = vmatpush1.msra.mxu0 0.0
      %1901 = vmatprep.subr.mxu0 0.0
      %1902 = vmatpush1.msra.mxu0 0.0
      %1903 = vmatprep.subr.mxu0 0.0
      %1904 = vmatpush1.msra.mxu0 0.0
      %1905 = vmatprep.subr.mxu0 0.0
      %1906 = vmatpush1.msra.mxu0 0.0
      %1907 = vmatprep.subr.mxu0 0.0
      %1908 = vmatpush1.msra.mxu0 0.0
      %1909 = vmatprep.subr.mxu0 0.0
      %1910 = vmatpush1.msra.mxu0 0.0
      %1911 = vmatprep.subr.mxu0 0.0
      %1912 = vmatpush1.msra.mxu0 0.0
      %1913 = vmatprep.subr.mxu0 0.0
      %1914 = vmatpush1.msra.mxu0 0.0
      %1915 = vmatprep.subr.mxu0 0.0
      %1916 = vmatpush1.msra.mxu0 0.0
      %1917 = vmatprep.subr.mxu0 0.0
      %1918 = vmatpush1.msra.mxu0 0.0
      %1919 = vmatprep.subr.mxu0 0.0
      %1920 = vmatpush1.msra.mxu0 0.0
      %1921 = vmatprep.subr.mxu0 0.0
      %1922 = vmatpush1.msra.mxu0 0.0
      %1923 = vmatprep.subr.mxu0 0.0
      %1924 = vmatpush1.msra.mxu0 0.0
      %1925 = vmatprep.subr.mxu0 0.0
      %1926 = vmatpush1.msra.mxu0 0.0
      %1927 = vmatprep.subr.mxu0 0.0
      %v1928 = vand.u32 %v261, 4294901760
      %1929 = vmatpush1.msra.mxu0 %v1928
      %1930 = vmatprep.subr.mxu0 0.0
      %v1931 = vand.u32 %v260, 4294901760
      %1932 = vmatpush1.msra.mxu0 %v1931
      %1933 = vmatprep.subr.mxu0 0.0
      %1934 = vmatpush2.msra.mxu0 0.0
      %1935 = vmatprep.subr.mxu0 0.0
      %1936 = vmatpush2.msra.mxu0 0.0
      %1937 = vmatprep.subr.mxu0 0.0
      %1938 = vmatpush2.msra.mxu0 0.0
      %1939 = vmatprep.subr.mxu0 0.0
      %1940 = vmatpush2.msra.mxu0 0.0
      %1941 = vmatprep.subr.mxu0 0.0
      %1942 = vmatpush2.msra.mxu0 0.0
      %1943 = vmatprep.subr.mxu0 0.0
      %1944 = vmatpush2.msra.mxu0 0.0
      %1945 = vmatprep.subr.mxu0 0.0
      %1946 = vmatpush2.msra.mxu0 0.0
      %1947 = vmatprep.subr.mxu0 0.0
      %1948 = vmatpush2.msra.mxu0 0.0
      %1949 = vmatprep.subr.mxu0 0.0
      %1950 = vmatpush2.msra.mxu0 0.0
      %1951 = vmatprep.subr.mxu0 0.0
      %1952 = vmatpush2.msra.mxu0 0.0
      %1953 = vmatprep.subr.mxu0 0.0
      %1954 = vmatpush2.msra.mxu0 0.0
      %1955 = vmatprep.subr.mxu0 0.0
      %1956 = vmatpush2.msra.mxu0 0.0
      %1957 = vmatprep.subr.mxu0 0.0
      %1958 = vmatpush2.msra.mxu0 0.0
      %1959 = vmatprep.subr.mxu0 0.0
      %1960 = vmatpush2.msra.mxu0 0.0
      %1961 = vmatprep.subr.mxu0 0.0
      %1962 = vmatpush2.msra.mxu0 0.0
      %1963 = vmatprep.subr.mxu0 0.0
      %1964 = vmatpush2.msra.mxu0 0.0
      %1965 = vmatprep.mubr.f32.mxu0 0.0
      %v1966 = vand.u32 %v271, 4294901760
      %1967 = vmatmul.mubr.f32.gmra.mxu0 %v1966
      %v1968 = vpop.f32.mrf.mxu0
      %v1969 = vadd.f32 %v1710, %v1968
      %v1970 = vpop.f32.mrf.mxu0
      %1971 = vmatprep.mubr.f32.mxu0 0.0
      %v1972 = vand.u32 %v274, 4294901760
      %1973 = vmatmul.mubr.f32.gmra.mxu0 %v1972
      %v1974 = vpop.f32.mrf.mxu0
      %v1975 = vadd.f32 %v1716, %v1974
      %v1976 = vpop.f32.mrf.mxu0
      %1977 = vmatprep.mubr.f32.mxu0 0.0
      %v1978 = vand.u32 %v277, 4294901760
      %1979 = vmatmul.mubr.f32.gmra.mxu0 %v1978
      %v1980 = vpop.f32.mrf.mxu0
      %v1981 = vadd.f32 %v1722, %v1980
      %v1982 = vpop.f32.mrf.mxu0
      %1983 = vmatprep.mubr.f32.mxu0 0.0
      %v1984 = vand.u32 %v280, 4294901760
      %1985 = vmatmul.mubr.f32.gmra.mxu0 %v1984
      %v1986 = vpop.f32.mrf.mxu0
      %v1987 = vadd.f32 %v1728, %v1986
      %v1988 = vpop.f32.mrf.mxu0
      %1989 = vmatprep.mubr.f32.mxu0 0.0
      %v1990 = vand.u32 %v283, 4294901760
      %1991 = vmatmul.mubr.f32.gmra.mxu0 %v1990
      %v1992 = vpop.f32.mrf.mxu0
      %v1993 = vadd.f32 %v1734, %v1992
      %v1994 = vpop.f32.mrf.mxu0
      %1995 = vmatprep.mubr.f32.mxu0 0.0
      %v1996 = vand.u32 %v286, 4294901760
      %1997 = vmatmul.mubr.f32.gmra.mxu0 %v1996
      %v1998 = vpop.f32.mrf.mxu0
      %v1999 = vadd.f32 %v1740, %v1998
      %v2000 = vpop.f32.mrf.mxu0
      %2001 = vmatprep.mubr.f32.mxu0 0.0
      %v2002 = vand.u32 %v289, 4294901760
      %2003 = vmatmul.mubr.f32.gmra.mxu0 %v2002
      %v2004 = vpop.f32.mrf.mxu0
      %v2005 = vadd.f32 %v1746, %v2004
      %v2006 = vpop.f32.mrf.mxu0
      %2007 = vmatprep.mubr.f32.mxu0 0.0
      %v2008 = vand.u32 %v292, 4294901760
      %2009 = vmatmul.mubr.f32.gmra.mxu0 %v2008
      %v2010 = vpop.f32.mrf.mxu0
      %v2011 = vadd.f32 %v1752, %v2010
      %v2012 = vpop.f32.mrf.mxu0
      %2013 = vmatprep.mubr.f32.mxu0 0.0
      %v2014 = vand.u32 %v295, 4294901760
      %2015 = vmatmul.mubr.f32.gmra.mxu0 %v2014
      %v2016 = vpop.f32.mrf.mxu0
      %v2017 = vadd.f32 %v1758, %v2016
      %v2018 = vpop.f32.mrf.mxu0
      %2019 = vmatprep.mubr.f32.mxu0 0.0
      %v2020 = vand.u32 %v298, 4294901760
      %2021 = vmatmul.mubr.f32.gmra.mxu0 %v2020
      %v2022 = vpop.f32.mrf.mxu0
      %v2023 = vadd.f32 %v1764, %v2022
      %v2024 = vpop.f32.mrf.mxu0
      %2025 = vmatprep.mubr.f32.mxu0 0.0
      %v2026 = vand.u32 %v301, 4294901760
      %2027 = vmatmul.mubr.f32.gmra.mxu0 %v2026
      %v2028 = vpop.f32.mrf.mxu0
      %v2029 = vadd.f32 %v1770, %v2028
      %v2030 = vpop.f32.mrf.mxu0
      %2031 = vmatprep.mubr.f32.mxu0 0.0
      %v2032 = vand.u32 %v304, 4294901760
      %2033 = vmatmul.mubr.f32.gmra.mxu0 %v2032
      %v2034 = vpop.f32.mrf.mxu0
      %v2035 = vadd.f32 %v1776, %v2034
      %v2036 = vpop.f32.mrf.mxu0
      %2037 = vmatprep.mubr.f32.mxu0 0.0
      %v2038 = vand.u32 %v307, 4294901760
      %2039 = vmatmul.mubr.f32.gmra.mxu0 %v2038
      %v2040 = vpop.f32.mrf.mxu0
      %v2041 = vadd.f32 %v1782, %v2040
      %v2042 = vpop.f32.mrf.mxu0
      %2043 = vmatprep.mubr.f32.mxu0 0.0
      %v2044 = vand.u32 %v310, 4294901760
      %2045 = vmatmul.mubr.f32.gmra.mxu0 %v2044
      %v2046 = vpop.f32.mrf.mxu0
      %v2047 = vadd.f32 %v1788, %v2046
      %v2048 = vpop.f32.mrf.mxu0
      %2049 = vmatprep.mubr.f32.mxu0 0.0
      %v2050 = vand.u32 %v313, 4294901760
      %2051 = vmatmul.mubr.f32.gmra.mxu0 %v2050
      %v2052 = vpop.f32.mrf.mxu0
      %v2053 = vadd.f32 %v1794, %v2052
      %v2054 = vpop.f32.mrf.mxu0
      %2055 = vmatprep.mubr.f32.mxu0 0.0
      %v2056 = vand.u32 %v316, 4294901760
      %2057 = vmatmul.mubr.f32.gmra.mxu0 %v2056
      %v2058 = vpop.f32.mrf.mxu0
      %v2059 = vadd.f32 %v1800, %v2058
      %v2060 = vpop.f32.mrf.mxu0
      %2061 = vmatprep.mubr.f32.mxu0 0.0
      %v2062 = vand.u32 %v319, 4294901760
      %2063 = vmatmul.mubr.f32.gmra.mxu0 %v2062
      %v2064 = vpop.f32.mrf.mxu0
      %v2065 = vadd.f32 %v1806, %v2064
      %v2066 = vpop.f32.mrf.mxu0
      %2067 = vmatprep.mubr.f32.mxu0 0.0
      %v2068 = vand.u32 %v322, 4294901760
      %2069 = vmatmul.mubr.f32.gmra.mxu0 %v2068
      %v2070 = vpop.f32.mrf.mxu0
      %v2071 = vadd.f32 %v1812, %v2070
      %v2072 = vpop.f32.mrf.mxu0
      %2073 = vmatprep.mubr.f32.mxu0 0.0
      %v2074 = vand.u32 %v325, 4294901760
      %2075 = vmatmul.mubr.f32.gmra.mxu0 %v2074
      %v2076 = vpop.f32.mrf.mxu0
      %v2077 = vadd.f32 %v1818, %v2076
      %v2078 = vpop.f32.mrf.mxu0
      %2079 = vmatprep.mubr.f32.mxu0 0.0
      %v2080 = vand.u32 %v328, 4294901760
      %2081 = vmatmul.mubr.f32.gmra.mxu0 %v2080
      %v2082 = vpop.f32.mrf.mxu0
      %v2083 = vadd.f32 %v1824, %v2082
      %v2084 = vpop.f32.mrf.mxu0
      %2085 = vmatprep.mubr.f32.mxu0 0.0
      %v2086 = vand.u32 %v331, 4294901760
      %2087 = vmatmul.mubr.f32.gmra.mxu0 %v2086
      %v2088 = vpop.f32.mrf.mxu0
      %v2089 = vadd.f32 %v1830, %v2088
      %v2090 = vpop.f32.mrf.mxu0
      %2091 = vmatprep.mubr.f32.mxu0 0.0
      %v2092 = vand.u32 %v334, 4294901760
      %2093 = vmatmul.mubr.f32.gmra.mxu0 %v2092
      %v2094 = vpop.f32.mrf.mxu0
      %v2095 = vadd.f32 %v1836, %v2094
      %v2096 = vpop.f32.mrf.mxu0
      %2097 = vmatprep.mubr.f32.mxu0 0.0
      %v2098 = vand.u32 %v337, 4294901760
      %2099 = vmatmul.mubr.f32.gmra.mxu0 %v2098
      %v2100 = vpop.f32.mrf.mxu0
      %v2101 = vadd.f32 %v1842, %v2100
      %v2102 = vpop.f32.mrf.mxu0
      %2103 = vmatprep.mubr.f32.mxu0 0.0
      %v2104 = vand.u32 %v340, 4294901760
      %2105 = vmatmul.mubr.f32.gmra.mxu0 %v2104
      %v2106 = vpop.f32.mrf.mxu0
      %v2107 = vadd.f32 %v1848, %v2106
      %v2108 = vpop.f32.mrf.mxu0
      %2109 = vmatprep.mubr.f32.mxu0 0.0
      %v2110 = vand.u32 %v343, 4294901760
      %2111 = vmatmul.mubr.f32.gmra.mxu0 %v2110
      %v2112 = vpop.f32.mrf.mxu0
      %v2113 = vadd.f32 %v1854, %v2112
      %v2114 = vpop.f32.mrf.mxu0
      %2115 = vmatprep.mubr.f32.mxu0 0.0
      %v2116 = vand.u32 %v346, 4294901760
      %2117 = vmatmul.mubr.f32.gmra.mxu0 %v2116
      %v2118 = vpop.f32.mrf.mxu0
      %v2119 = vadd.f32 %v1860, %v2118
      %v2120 = vpop.f32.mrf.mxu0
      %2121 = vmatprep.mubr.f32.mxu0 0.0
      %v2122 = vand.u32 %v349, 4294901760
      %2123 = vmatmul.mubr.f32.gmra.mxu0 %v2122
      %v2124 = vpop.f32.mrf.mxu0
      %v2125 = vadd.f32 %v1866, %v2124
      %v2126 = vpop.f32.mrf.mxu0
      %2127 = vmatprep.mubr.f32.mxu0 0.0
      %v2128 = vand.u32 %v352, 4294901760
      %2129 = vmatmul.mubr.f32.gmra.mxu0 %v2128
      %v2130 = vpop.f32.mrf.mxu0
      %v2131 = vadd.f32 %v1872, %v2130
      %v2132 = vpop.f32.mrf.mxu0
      %2133 = vmatprep.mubr.f32.mxu0 0.0
      %v2134 = vand.u32 %v355, 4294901760
      %2135 = vmatmul.mubr.f32.gmra.mxu0 %v2134
      %v2136 = vpop.f32.mrf.mxu0
      %v2137 = vadd.f32 %v1878, %v2136
      %v2138 = vpop.f32.mrf.mxu0
      %2139 = vmatprep.mubr.f32.mxu0 0.0
      %v2140 = vand.u32 %v358, 4294901760
      %2141 = vmatmul.mubr.f32.gmra.mxu0 %v2140
      %v2142 = vpop.f32.mrf.mxu0
      %v2143 = vadd.f32 %v1884, %v2142
      %v2144 = vpop.f32.mrf.mxu0
      %2145 = vmatprep.mubr.f32.mxu0 0.0
      %v2146 = vand.u32 %v361, 4294901760
      %2147 = vmatmul.mubr.f32.gmra.mxu0 %v2146
      %v2148 = vpop.f32.mrf.mxu0
      %v2149 = vadd.f32 %v1890, %v2148
      %v2150 = vpop.f32.mrf.mxu0
      %2151 = vmatprep.mubr.f32.mxu0 0.0
      %v2152 = vand.u32 %v364, 4294901760
      %2153 = vmatmul.mubr.f32.gmra.mxu0 %v2152
      %v2154 = vpop.f32.mrf.mxu0
      %v2155 = vadd.f32 %v1896, %v2154
      %v2156 = vpop.f32.mrf.mxu0
      %2157 = vdwg.mxu0
      %v2158 = vmax.f32 %v1969, 0.0
      %v2159 = vmax.f32 %v1975, 0.0
      %v2160 = vmax.f32 %v1981, 0.0
      %v2161 = vmax.f32 %v1987, 0.0
      %v2162 = vmax.f32 %v1993, 0.0
      %v2163 = vmax.f32 %v1999, 0.0
      %v2164 = vmax.f32 %v2005, 0.0
      %v2165 = vmax.f32 %v2011, 0.0
      %v2166 = vmax.f32 %v2017, 0.0
      %v2167 = vmax.f32 %v2023, 0.0
      %v2168 = vmax.f32 %v2029, 0.0
      %v2169 = vmax.f32 %v2035, 0.0
      %v2170 = vmax.f32 %v2041, 0.0
      %v2171 = vmax.f32 %v2047, 0.0
      %v2172 = vmax.f32 %v2053, 0.0
      %v2173 = vmax.f32 %v2059, 0.0
      %v2174 = vmax.f32 %v2065, 0.0
      %v2175 = vmax.f32 %v2071, 0.0
      %v2176 = vmax.f32 %v2077, 0.0
      %v2177 = vmax.f32 %v2083, 0.0
      %v2178 = vmax.f32 %v2089, 0.0
      %v2179 = vmax.f32 %v2095, 0.0
      %v2180 = vmax.f32 %v2101, 0.0
      %v2181 = vmax.f32 %v2107, 0.0
      %v2182 = vmax.f32 %v2113, 0.0
      %v2183 = vmax.f32 %v2119, 0.0
      %v2184 = vmax.f32 %v2125, 0.0
      %v2185 = vmax.f32 %v2131, 0.0
      %v2186 = vmax.f32 %v2137, 0.0
      %v2187 = vmax.f32 %v2143, 0.0
      %v2188 = vmax.f32 %v2149, 0.0
      %v2189 = vmax.f32 %v2155, 0.0
      %v2190 = vld [vmem:[%s3] sm:$0xff]
      %v2191 = vld [vmem:[%s3 + $0x8] sm:$0xff]
      %v2192 = vld [vmem:[%s3 + $0x10] sm:$0xff]
      %v2193 = vld [vmem:[%s3 + $0x18] sm:$0xff]
      %v2194 = vld [vmem:[%s3 + $0x20] sm:$0xff]
      %v2195 = vld [vmem:[%s3 + $0x28] sm:$0xff]
      %v2196 = vld [vmem:[%s3 + $0x30] sm:$0xff]
      %v2197 = vld [vmem:[%s3 + $0x38] sm:$0xff]
      %v2198 = vld [vmem:[%s3 + $0x40] sm:$0xff]
      %v2199 = vld [vmem:[%s3 + $0x48] sm:$0xff]
      %v2200 = vld [vmem:[%s3 + $0x50] sm:$0xff]
      %v2201 = vld [vmem:[%s3 + $0x58] sm:$0xff]
      %v2202 = vld [vmem:[%s3 + $0x60] sm:$0xff]
      %v2203 = vld [vmem:[%s3 + $0x68] sm:$0xff]
      %v2204 = vld [vmem:[%s3 + $0x70] sm:$0xff]
      %v2205 = vld [vmem:[%s3 + $0x78] sm:$0xff]
      %v2206 = vld [vmem:[%s4] sm:$0x1]
      %v2208 = vlaneseq
      %v2209 = vshrl.u32 %v2208, 7
      %v2210 = vsub.s32 0, %v2209
      %v2211 = vrot.slane %v2206, %v2210
      %2213 = vmatprep.subr.mxu0 0.0
      %v2214 = vand.u32 %v2205, 4294901760
      %2215 = vmatpush1.msra.mxu0 %v2214
      %2216 = vmatprep.subr.mxu0 0.0
      %v2217 = vand.u32 %v2204, 4294901760
      %2218 = vmatpush1.msra.mxu0 %v2217
      %2219 = vmatprep.subr.mxu0 0.0
      %v2220 = vand.u32 %v2203, 4294901760
      %2221 = vmatpush1.msra.mxu0 %v2220
      %2222 = vmatprep.subr.mxu0 0.0
      %v2223 = vand.u32 %v2202, 4294901760
      %2224 = vmatpush1.msra.mxu0 %v2223
      %2225 = vmatprep.subr.mxu0 0.0
      %v2226 = vand.u32 %v2201, 4294901760
      %2227 = vmatpush1.msra.mxu0 %v2226
      %2228 = vmatprep.subr.mxu0 0.0
      %v2229 = vand.u32 %v2200, 4294901760
      %2230 = vmatpush1.msra.mxu0 %v2229
      %2231 = vmatprep.subr.mxu0 0.0
      %v2232 = vand.u32 %v2199, 4294901760
      %2233 = vmatpush1.msra.mxu0 %v2232
      %2234 = vmatprep.subr.mxu0 0.0
      %v2235 = vand.u32 %v2198, 4294901760
      %2236 = vmatpush1.msra.mxu0 %v2235
      %2237 = vmatprep.subr.mxu0 0.0
      %v2238 = vand.u32 %v2197, 4294901760
      %2239 = vmatpush1.msra.mxu0 %v2238
      %2240 = vmatprep.subr.mxu0 0.0
      %v2241 = vand.u32 %v2196, 4294901760
      %2242 = vmatpush1.msra.mxu0 %v2241
      %2243 = vmatprep.subr.mxu0 0.0
      %v2244 = vand.u32 %v2195, 4294901760
      %2245 = vmatpush1.msra.mxu0 %v2244
      %2246 = vmatprep.subr.mxu0 0.0
      %v2247 = vand.u32 %v2194, 4294901760
      %2248 = vmatpush1.msra.mxu0 %v2247
      %2249 = vmatprep.subr.mxu0 0.0
      %v2250 = vand.u32 %v2193, 4294901760
      %2251 = vmatpush1.msra.mxu0 %v2250
      %2252 = vmatprep.subr.mxu0 0.0
      %v2253 = vand.u32 %v2192, 4294901760
      %2254 = vmatpush1.msra.mxu0 %v2253
      %2255 = vmatprep.subr.mxu0 0.0
      %v2256 = vand.u32 %v2191, 4294901760
      %2257 = vmatpush1.msra.mxu0 %v2256
      %2258 = vmatprep.subr.mxu0 0.0
      %v2259 = vand.u32 %v2190, 4294901760
      %2260 = vmatpush1.msra.mxu0 %v2259
      %2261 = vmatprep.subr.mxu0 0.0
      %2262 = vmatpush2.msra.mxu0 0.0
      %2263 = vmatprep.subr.mxu0 0.0
      %2264 = vmatpush2.msra.mxu0 0.0
      %2265 = vmatprep.subr.mxu0 0.0
      %2266 = vmatpush2.msra.mxu0 0.0
      %2267 = vmatprep.subr.mxu0 0.0
      %2268 = vmatpush2.msra.mxu0 0.0
      %2269 = vmatprep.subr.mxu0 0.0
      %2270 = vmatpush2.msra.mxu0 0.0
      %2271 = vmatprep.subr.mxu0 0.0
      %2272 = vmatpush2.msra.mxu0 0.0
      %2273 = vmatprep.subr.mxu0 0.0
      %2274 = vmatpush2.msra.mxu0 0.0
      %2275 = vmatprep.subr.mxu0 0.0
      %2276 = vmatpush2.msra.mxu0 0.0
      %2277 = vmatprep.subr.mxu0 0.0
      %2278 = vmatpush2.msra.mxu0 0.0
      %2279 = vmatprep.subr.mxu0 0.0
      %2280 = vmatpush2.msra.mxu0 0.0
      %2281 = vmatprep.subr.mxu0 0.0
      %2282 = vmatpush2.msra.mxu0 0.0
      %2283 = vmatprep.subr.mxu0 0.0
      %2284 = vmatpush2.msra.mxu0 0.0
      %2285 = vmatprep.subr.mxu0 0.0
      %2286 = vmatpush2.msra.mxu0 0.0
      %2287 = vmatprep.subr.mxu0 0.0
      %2288 = vmatpush2.msra.mxu0 0.0
      %2289 = vmatprep.subr.mxu0 0.0
      %2290 = vmatpush2.msra.mxu0 0.0
      %2291 = vmatprep.subr.mxu0 0.0
      %2292 = vmatpush2.msra.mxu0 0.0
      %2293 = vmatprep.mubr.f32.mxu0 0.0
      %v2294 = vand.u32 %v2158, 4294901760
      %v2295 = vsub.f32 %v2158, %v2294
      %v2296 = vand.u32 %v2295, 4294901760
      %v2297 = vsub.f32 %v2295, %v2296
      %v2298 = vand.u32 %v2297, 4294901760
      %2299 = vmatmul.mubr.f32.gmra.mxu0 %v2298
      %v2300 = vpop.f32.mrf.mxu0
      %v2301 = vadd.f32 %v2211, %v2300
      %v2302 = vpop.f32.mrf.mxu0
      %2303 = vmatprep.mubr.f32.mxu0 0.0
      %v2304 = vand.u32 %v2159, 4294901760
      %v2305 = vsub.f32 %v2159, %v2304
      %v2306 = vand.u32 %v2305, 4294901760
      %v2307 = vsub.f32 %v2305, %v2306
      %v2308 = vand.u32 %v2307, 4294901760
      %2309 = vmatmul.mubr.f32.gmra.mxu0 %v2308
      %v2310 = vpop.f32.mrf.mxu0
      %v2311 = vadd.f32 %v2211, %v2310
      %v2312 = vpop.f32.mrf.mxu0
      %2313 = vmatprep.mubr.f32.mxu0 0.0
      %v2314 = vand.u32 %v2160, 4294901760
      %v2315 = vsub.f32 %v2160, %v2314
      %v2316 = vand.u32 %v2315, 4294901760
      %v2317 = vsub.f32 %v2315, %v2316
      %v2318 = vand.u32 %v2317, 4294901760
      %2319 = vmatmul.mubr.f32.gmra.mxu0 %v2318
      %v2320 = vpop.f32.mrf.mxu0
      %v2321 = vadd.f32 %v2211, %v2320
      %v2322 = vpop.f32.mrf.mxu0
      %2323 = vmatprep.mubr.f32.mxu0 0.0
      %v2324 = vand.u32 %v2161, 4294901760
      %v2325 = vsub.f32 %v2161, %v2324
      %v2326 = vand.u32 %v2325, 4294901760
      %v2327 = vsub.f32 %v2325, %v2326
      %v2328 = vand.u32 %v2327, 4294901760
      %2329 = vmatmul.mubr.f32.gmra.mxu0 %v2328
      %v2330 = vpop.f32.mrf.mxu0
      %v2331 = vadd.f32 %v2211, %v2330
      %v2332 = vpop.f32.mrf.mxu0
      %2333 = vmatprep.mubr.f32.mxu0 0.0
      %v2334 = vand.u32 %v2162, 4294901760
      %v2335 = vsub.f32 %v2162, %v2334
      %v2336 = vand.u32 %v2335, 4294901760
      %v2337 = vsub.f32 %v2335, %v2336
      %v2338 = vand.u32 %v2337, 4294901760
      %2339 = vmatmul.mubr.f32.gmra.mxu0 %v2338
      %v2340 = vpop.f32.mrf.mxu0
      %v2341 = vadd.f32 %v2211, %v2340
      %v2342 = vpop.f32.mrf.mxu0
      %2343 = vmatprep.mubr.f32.mxu0 0.0
      %v2344 = vand.u32 %v2163, 4294901760
      %v2345 = vsub.f32 %v2163, %v2344
      %v2346 = vand.u32 %v2345, 4294901760
      %v2347 = vsub.f32 %v2345, %v2346
      %v2348 = vand.u32 %v2347, 4294901760
      %2349 = vmatmul.mubr.f32.gmra.mxu0 %v2348
      %v2350 = vpop.f32.mrf.mxu0
      %v2351 = vadd.f32 %v2211, %v2350
      %v2352 = vpop.f32.mrf.mxu0
      %2353 = vmatprep.mubr.f32.mxu0 0.0
      %v2354 = vand.u32 %v2164, 4294901760
      %v2355 = vsub.f32 %v2164, %v2354
      %v2356 = vand.u32 %v2355, 4294901760
      %v2357 = vsub.f32 %v2355, %v2356
      %v2358 = vand.u32 %v2357, 4294901760
      %2359 = vmatmul.mubr.f32.gmra.mxu0 %v2358
      %v2360 = vpop.f32.mrf.mxu0
      %v2361 = vadd.f32 %v2211, %v2360
      %v2362 = vpop.f32.mrf.mxu0
      %2363 = vmatprep.mubr.f32.mxu0 0.0
      %v2364 = vand.u32 %v2165, 4294901760
      %v2365 = vsub.f32 %v2165, %v2364
      %v2366 = vand.u32 %v2365, 4294901760
      %v2367 = vsub.f32 %v2365, %v2366
      %v2368 = vand.u32 %v2367, 4294901760
      %2369 = vmatmul.mubr.f32.gmra.mxu0 %v2368
      %v2370 = vpop.f32.mrf.mxu0
      %v2371 = vadd.f32 %v2211, %v2370
      %v2372 = vpop.f32.mrf.mxu0
      %2373 = vmatprep.mubr.f32.mxu0 0.0
      %v2374 = vand.u32 %v2166, 4294901760
      %v2375 = vsub.f32 %v2166, %v2374
      %v2376 = vand.u32 %v2375, 4294901760
      %v2377 = vsub.f32 %v2375, %v2376
      %v2378 = vand.u32 %v2377, 4294901760
      %2379 = vmatmul.mubr.f32.gmra.mxu0 %v2378
      %v2380 = vpop.f32.mrf.mxu0
      %v2381 = vadd.f32 %v2211, %v2380
      %v2382 = vpop.f32.mrf.mxu0
      %2383 = vmatprep.mubr.f32.mxu0 0.0
      %v2384 = vand.u32 %v2167, 4294901760
      %v2385 = vsub.f32 %v2167, %v2384
      %v2386 = vand.u32 %v2385, 4294901760
      %v2387 = vsub.f32 %v2385, %v2386
      %v2388 = vand.u32 %v2387, 4294901760
      %2389 = vmatmul.mubr.f32.gmra.mxu0 %v2388
      %v2390 = vpop.f32.mrf.mxu0
      %v2391 = vadd.f32 %v2211, %v2390
      %v2392 = vpop.f32.mrf.mxu0
      %2393 = vmatprep.mubr.f32.mxu0 0.0
      %v2394 = vand.u32 %v2168, 4294901760
      %v2395 = vsub.f32 %v2168, %v2394
      %v2396 = vand.u32 %v2395, 4294901760
      %v2397 = vsub.f32 %v2395, %v2396
      %v2398 = vand.u32 %v2397, 4294901760
      %2399 = vmatmul.mubr.f32.gmra.mxu0 %v2398
      %v2400 = vpop.f32.mrf.mxu0
      %v2401 = vadd.f32 %v2211, %v2400
      %v2402 = vpop.f32.mrf.mxu0
      %2403 = vmatprep.mubr.f32.mxu0 0.0
      %v2404 = vand.u32 %v2169, 4294901760
      %v2405 = vsub.f32 %v2169, %v2404
      %v2406 = vand.u32 %v2405, 4294901760
      %v2407 = vsub.f32 %v2405, %v2406
      %v2408 = vand.u32 %v2407, 4294901760
      %2409 = vmatmul.mubr.f32.gmra.mxu0 %v2408
      %v2410 = vpop.f32.mrf.mxu0
      %v2411 = vadd.f32 %v2211, %v2410
      %v2412 = vpop.f32.mrf.mxu0
      %2413 = vmatprep.mubr.f32.mxu0 0.0
      %v2414 = vand.u32 %v2170, 4294901760
      %v2415 = vsub.f32 %v2170, %v2414
      %v2416 = vand.u32 %v2415, 4294901760
      %v2417 = vsub.f32 %v2415, %v2416
      %v2418 = vand.u32 %v2417, 4294901760
      %2419 = vmatmul.mubr.f32.gmra.mxu0 %v2418
      %v2420 = vpop.f32.mrf.mxu0
      %v2421 = vadd.f32 %v2211, %v2420
      %v2422 = vpop.f32.mrf.mxu0
      %2423 = vmatprep.mubr.f32.mxu0 0.0
      %v2424 = vand.u32 %v2171, 4294901760
      %v2425 = vsub.f32 %v2171, %v2424
      %v2426 = vand.u32 %v2425, 4294901760
      %v2427 = vsub.f32 %v2425, %v2426
      %v2428 = vand.u32 %v2427, 4294901760
      %2429 = vmatmul.mubr.f32.gmra.mxu0 %v2428
      %v2430 = vpop.f32.mrf.mxu0
      %v2431 = vadd.f32 %v2211, %v2430
      %v2432 = vpop.f32.mrf.mxu0
      %2433 = vmatprep.mubr.f32.mxu0 0.0
      %v2434 = vand.u32 %v2172, 4294901760
      %v2435 = vsub.f32 %v2172, %v2434
      %v2436 = vand.u32 %v2435, 4294901760
      %v2437 = vsub.f32 %v2435, %v2436
      %v2438 = vand.u32 %v2437, 4294901760
      %2439 = vmatmul.mubr.f32.gmra.mxu0 %v2438
      %v2440 = vpop.f32.mrf.mxu0
      %v2441 = vadd.f32 %v2211, %v2440
      %v2442 = vpop.f32.mrf.mxu0
      %2443 = vmatprep.mubr.f32.mxu0 0.0
      %v2444 = vand.u32 %v2173, 4294901760
      %v2445 = vsub.f32 %v2173, %v2444
      %v2446 = vand.u32 %v2445, 4294901760
      %v2447 = vsub.f32 %v2445, %v2446
      %v2448 = vand.u32 %v2447, 4294901760
      %2449 = vmatmul.mubr.f32.gmra.mxu0 %v2448
      %v2450 = vpop.f32.mrf.mxu0
      %v2451 = vadd.f32 %v2211, %v2450
      %v2452 = vpop.f32.mrf.mxu0
      %2453 = vmatprep.mubr.f32.mxu0 0.0
      %v2454 = vand.u32 %v2174, 4294901760
      %v2455 = vsub.f32 %v2174, %v2454
      %v2456 = vand.u32 %v2455, 4294901760
      %v2457 = vsub.f32 %v2455, %v2456
      %v2458 = vand.u32 %v2457, 4294901760
      %2459 = vmatmul.mubr.f32.gmra.mxu0 %v2458
      %v2460 = vpop.f32.mrf.mxu0
      %v2461 = vadd.f32 %v2211, %v2460
      %v2462 = vpop.f32.mrf.mxu0
      %2463 = vmatprep.mubr.f32.mxu0 0.0
      %v2464 = vand.u32 %v2175, 4294901760
      %v2465 = vsub.f32 %v2175, %v2464
      %v2466 = vand.u32 %v2465, 4294901760
      %v2467 = vsub.f32 %v2465, %v2466
      %v2468 = vand.u32 %v2467, 4294901760
      %2469 = vmatmul.mubr.f32.gmra.mxu0 %v2468
      %v2470 = vpop.f32.mrf.mxu0
      %v2471 = vadd.f32 %v2211, %v2470
      %v2472 = vpop.f32.mrf.mxu0
      %2473 = vmatprep.mubr.f32.mxu0 0.0
      %v2474 = vand.u32 %v2176, 4294901760
      %v2475 = vsub.f32 %v2176, %v2474
      %v2476 = vand.u32 %v2475, 4294901760
      %v2477 = vsub.f32 %v2475, %v2476
      %v2478 = vand.u32 %v2477, 4294901760
      %2479 = vmatmul.mubr.f32.gmra.mxu0 %v2478
      %v2480 = vpop.f32.mrf.mxu0
      %v2481 = vadd.f32 %v2211, %v2480
      %v2482 = vpop.f32.mrf.mxu0
      %2483 = vmatprep.mubr.f32.mxu0 0.0
      %v2484 = vand.u32 %v2177, 4294901760
      %v2485 = vsub.f32 %v2177, %v2484
      %v2486 = vand.u32 %v2485, 4294901760
      %v2487 = vsub.f32 %v2485, %v2486
      %v2488 = vand.u32 %v2487, 4294901760
      %2489 = vmatmul.mubr.f32.gmra.mxu0 %v2488
      %v2490 = vpop.f32.mrf.mxu0
      %v2491 = vadd.f32 %v2211, %v2490
      %v2492 = vpop.f32.mrf.mxu0
      %2493 = vmatprep.mubr.f32.mxu0 0.0
      %v2494 = vand.u32 %v2178, 4294901760
      %v2495 = vsub.f32 %v2178, %v2494
      %v2496 = vand.u32 %v2495, 4294901760
      %v2497 = vsub.f32 %v2495, %v2496
      %v2498 = vand.u32 %v2497, 4294901760
      %2499 = vmatmul.mubr.f32.gmra.mxu0 %v2498
      %v2500 = vpop.f32.mrf.mxu0
      %v2501 = vadd.f32 %v2211, %v2500
      %v2502 = vpop.f32.mrf.mxu0
      %2503 = vmatprep.mubr.f32.mxu0 0.0
      %v2504 = vand.u32 %v2179, 4294901760
      %v2505 = vsub.f32 %v2179, %v2504
      %v2506 = vand.u32 %v2505, 4294901760
      %v2507 = vsub.f32 %v2505, %v2506
      %v2508 = vand.u32 %v2507, 4294901760
      %2509 = vmatmul.mubr.f32.gmra.mxu0 %v2508
      %v2510 = vpop.f32.mrf.mxu0
      %v2511 = vadd.f32 %v2211, %v2510
      %v2512 = vpop.f32.mrf.mxu0
      %2513 = vmatprep.mubr.f32.mxu0 0.0
      %v2514 = vand.u32 %v2180, 4294901760
      %v2515 = vsub.f32 %v2180, %v2514
      %v2516 = vand.u32 %v2515, 4294901760
      %v2517 = vsub.f32 %v2515, %v2516
      %v2518 = vand.u32 %v2517, 4294901760
      %2519 = vmatmul.mubr.f32.gmra.mxu0 %v2518
      %v2520 = vpop.f32.mrf.mxu0
      %v2521 = vadd.f32 %v2211, %v2520
      %v2522 = vpop.f32.mrf.mxu0
      %2523 = vmatprep.mubr.f32.mxu0 0.0
      %v2524 = vand.u32 %v2181, 4294901760
      %v2525 = vsub.f32 %v2181, %v2524
      %v2526 = vand.u32 %v2525, 4294901760
      %v2527 = vsub.f32 %v2525, %v2526
      %v2528 = vand.u32 %v2527, 4294901760
      %2529 = vmatmul.mubr.f32.gmra.mxu0 %v2528
      %v2530 = vpop.f32.mrf.mxu0
      %v2531 = vadd.f32 %v2211, %v2530
      %v2532 = vpop.f32.mrf.mxu0
      %2533 = vmatprep.mubr.f32.mxu0 0.0
      %v2534 = vand.u32 %v2182, 4294901760
      %v2535 = vsub.f32 %v2182, %v2534
      %v2536 = vand.u32 %v2535, 4294901760
      %v2537 = vsub.f32 %v2535, %v2536
      %v2538 = vand.u32 %v2537, 4294901760
      %2539 = vmatmul.mubr.f32.gmra.mxu0 %v2538
      %v2540 = vpop.f32.mrf.mxu0
      %v2541 = vadd.f32 %v2211, %v2540
      %v2542 = vpop.f32.mrf.mxu0
      %2543 = vmatprep.mubr.f32.mxu0 0.0
      %v2544 = vand.u32 %v2183, 4294901760
      %v2545 = vsub.f32 %v2183, %v2544
      %v2546 = vand.u32 %v2545, 4294901760
      %v2547 = vsub.f32 %v2545, %v2546
      %v2548 = vand.u32 %v2547, 4294901760
      %2549 = vmatmul.mubr.f32.gmra.mxu0 %v2548
      %v2550 = vpop.f32.mrf.mxu0
      %v2551 = vadd.f32 %v2211, %v2550
      %v2552 = vpop.f32.mrf.mxu0
      %2553 = vmatprep.mubr.f32.mxu0 0.0
      %v2554 = vand.u32 %v2184, 4294901760
      %v2555 = vsub.f32 %v2184, %v2554
      %v2556 = vand.u32 %v2555, 4294901760
      %v2557 = vsub.f32 %v2555, %v2556
      %v2558 = vand.u32 %v2557, 4294901760
      %2559 = vmatmul.mubr.f32.gmra.mxu0 %v2558
      %v2560 = vpop.f32.mrf.mxu0
      %v2561 = vadd.f32 %v2211, %v2560
      %v2562 = vpop.f32.mrf.mxu0
      %2563 = vmatprep.mubr.f32.mxu0 0.0
      %v2564 = vand.u32 %v2185, 4294901760
      %v2565 = vsub.f32 %v2185, %v2564
      %v2566 = vand.u32 %v2565, 4294901760
      %v2567 = vsub.f32 %v2565, %v2566
      %v2568 = vand.u32 %v2567, 4294901760
      %2569 = vmatmul.mubr.f32.gmra.mxu0 %v2568
      %v2570 = vpop.f32.mrf.mxu0
      %v2571 = vadd.f32 %v2211, %v2570
      %v2572 = vpop.f32.mrf.mxu0
      %2573 = vmatprep.mubr.f32.mxu0 0.0
      %v2574 = vand.u32 %v2186, 4294901760
      %v2575 = vsub.f32 %v2186, %v2574
      %v2576 = vand.u32 %v2575, 4294901760
      %v2577 = vsub.f32 %v2575, %v2576
      %v2578 = vand.u32 %v2577, 4294901760
      %2579 = vmatmul.mubr.f32.gmra.mxu0 %v2578
      %v2580 = vpop.f32.mrf.mxu0
      %v2581 = vadd.f32 %v2211, %v2580
      %v2582 = vpop.f32.mrf.mxu0
      %2583 = vmatprep.mubr.f32.mxu0 0.0
      %v2584 = vand.u32 %v2187, 4294901760
      %v2585 = vsub.f32 %v2187, %v2584
      %v2586 = vand.u32 %v2585, 4294901760
      %v2587 = vsub.f32 %v2585, %v2586
      %v2588 = vand.u32 %v2587, 4294901760
      %2589 = vmatmul.mubr.f32.gmra.mxu0 %v2588
      %v2590 = vpop.f32.mrf.mxu0
      %v2591 = vadd.f32 %v2211, %v2590
      %v2592 = vpop.f32.mrf.mxu0
      %2593 = vmatprep.mubr.f32.mxu0 0.0
      %v2594 = vand.u32 %v2188, 4294901760
      %v2595 = vsub.f32 %v2188, %v2594
      %v2596 = vand.u32 %v2595, 4294901760
      %v2597 = vsub.f32 %v2595, %v2596
      %v2598 = vand.u32 %v2597, 4294901760
      %2599 = vmatmul.mubr.f32.gmra.mxu0 %v2598
      %v2600 = vpop.f32.mrf.mxu0
      %v2601 = vadd.f32 %v2211, %v2600
      %v2602 = vpop.f32.mrf.mxu0
      %2603 = vmatprep.mubr.f32.mxu0 0.0
      %v2604 = vand.u32 %v2189, 4294901760
      %v2605 = vsub.f32 %v2189, %v2604
      %v2606 = vand.u32 %v2605, 4294901760
      %v2607 = vsub.f32 %v2605, %v2606
      %v2608 = vand.u32 %v2607, 4294901760
      %2609 = vmatmul.mubr.f32.gmra.mxu0 %v2608
      %v2610 = vpop.f32.mrf.mxu0
      %v2611 = vadd.f32 %v2211, %v2610
      %v2612 = vpop.f32.mrf.mxu0
      %2613 = vdwg.mxu0
      %2614 = vmatprep.subr.mxu0 0.0
      %v2615 = vand.u32 %v2205, 4294901760
      %v2616 = vsub.f32 %v2205, %v2615
      %v2617 = vand.u32 %v2616, 4294901760
      %v2618 = vsub.f32 %v2616, %v2617
      %v2619 = vand.u32 %v2618, 4294901760
      %2620 = vmatpush1.msra.mxu0 %v2619
      %2621 = vmatprep.subr.mxu0 0.0
      %v2622 = vand.u32 %v2204, 4294901760
      %v2623 = vsub.f32 %v2204, %v2622
      %v2624 = vand.u32 %v2623, 4294901760
      %v2625 = vsub.f32 %v2623, %v2624
      %v2626 = vand.u32 %v2625, 4294901760
      %2627 = vmatpush1.msra.mxu0 %v2626
      %2628 = vmatprep.subr.mxu0 0.0
      %v2629 = vand.u32 %v2203, 4294901760
      %v2630 = vsub.f32 %v2203, %v2629
      %v2631 = vand.u32 %v2630, 4294901760
      %v2632 = vsub.f32 %v2630, %v2631
      %v2633 = vand.u32 %v2632, 4294901760
      %2634 = vmatpush1.msra.mxu0 %v2633
      %2635 = vmatprep.subr.mxu0 0.0
      %v2636 = vand.u32 %v2202, 4294901760
      %v2637 = vsub.f32 %v2202, %v2636
      %v2638 = vand.u32 %v2637, 4294901760
      %v2639 = vsub.f32 %v2637, %v2638
      %v2640 = vand.u32 %v2639, 4294901760
      %2641 = vmatpush1.msra.mxu0 %v2640
      %2642 = vmatprep.subr.mxu0 0.0
      %v2643 = vand.u32 %v2201, 4294901760
      %v2644 = vsub.f32 %v2201, %v2643
      %v2645 = vand.u32 %v2644, 4294901760
      %v2646 = vsub.f32 %v2644, %v2645
      %v2647 = vand.u32 %v2646, 4294901760
      %2648 = vmatpush1.msra.mxu0 %v2647
      %2649 = vmatprep.subr.mxu0 0.0
      %v2650 = vand.u32 %v2200, 4294901760
      %v2651 = vsub.f32 %v2200, %v2650
      %v2652 = vand.u32 %v2651, 4294901760
      %v2653 = vsub.f32 %v2651, %v2652
      %v2654 = vand.u32 %v2653, 4294901760
      %2655 = vmatpush1.msra.mxu0 %v2654
      %2656 = vmatprep.subr.mxu0 0.0
      %v2657 = vand.u32 %v2199, 4294901760
      %v2658 = vsub.f32 %v2199, %v2657
      %v2659 = vand.u32 %v2658, 4294901760
      %v2660 = vsub.f32 %v2658, %v2659
      %v2661 = vand.u32 %v2660, 4294901760
      %2662 = vmatpush1.msra.mxu0 %v2661
      %2663 = vmatprep.subr.mxu0 0.0
      %v2664 = vand.u32 %v2198, 4294901760
      %v2665 = vsub.f32 %v2198, %v2664
      %v2666 = vand.u32 %v2665, 4294901760
      %v2667 = vsub.f32 %v2665, %v2666
      %v2668 = vand.u32 %v2667, 4294901760
      %2669 = vmatpush1.msra.mxu0 %v2668
      %2670 = vmatprep.subr.mxu0 0.0
      %v2671 = vand.u32 %v2197, 4294901760
      %v2672 = vsub.f32 %v2197, %v2671
      %v2673 = vand.u32 %v2672, 4294901760
      %v2674 = vsub.f32 %v2672, %v2673
      %v2675 = vand.u32 %v2674, 4294901760
      %2676 = vmatpush1.msra.mxu0 %v2675
      %2677 = vmatprep.subr.mxu0 0.0
      %v2678 = vand.u32 %v2196, 4294901760
      %v2679 = vsub.f32 %v2196, %v2678
      %v2680 = vand.u32 %v2679, 4294901760
      %v2681 = vsub.f32 %v2679, %v2680
      %v2682 = vand.u32 %v2681, 4294901760
      %2683 = vmatpush1.msra.mxu0 %v2682
      %2684 = vmatprep.subr.mxu0 0.0
      %v2685 = vand.u32 %v2195, 4294901760
      %v2686 = vsub.f32 %v2195, %v2685
      %v2687 = vand.u32 %v2686, 4294901760
      %v2688 = vsub.f32 %v2686, %v2687
      %v2689 = vand.u32 %v2688, 4294901760
      %2690 = vmatpush1.msra.mxu0 %v2689
      %2691 = vmatprep.subr.mxu0 0.0
      %v2692 = vand.u32 %v2194, 4294901760
      %v2693 = vsub.f32 %v2194, %v2692
      %v2694 = vand.u32 %v2693, 4294901760
      %v2695 = vsub.f32 %v2693, %v2694
      %v2696 = vand.u32 %v2695, 4294901760
      %2697 = vmatpush1.msra.mxu0 %v2696
      %2698 = vmatprep.subr.mxu0 0.0
      %v2699 = vand.u32 %v2193, 4294901760
      %v2700 = vsub.f32 %v2193, %v2699
      %v2701 = vand.u32 %v2700, 4294901760
      %v2702 = vsub.f32 %v2700, %v2701
      %v2703 = vand.u32 %v2702, 4294901760
      %2704 = vmatpush1.msra.mxu0 %v2703
      %2705 = vmatprep.subr.mxu0 0.0
      %v2706 = vand.u32 %v2192, 4294901760
      %v2707 = vsub.f32 %v2192, %v2706
      %v2708 = vand.u32 %v2707, 4294901760
      %v2709 = vsub.f32 %v2707, %v2708
      %v2710 = vand.u32 %v2709, 4294901760
      %2711 = vmatpush1.msra.mxu0 %v2710
      %2712 = vmatprep.subr.mxu0 0.0
      %v2713 = vand.u32 %v2191, 4294901760
      %v2714 = vsub.f32 %v2191, %v2713
      %v2715 = vand.u32 %v2714, 4294901760
      %v2716 = vsub.f32 %v2714, %v2715
      %v2717 = vand.u32 %v2716, 4294901760
      %2718 = vmatpush1.msra.mxu0 %v2717
      %2719 = vmatprep.subr.mxu0 0.0
      %v2720 = vand.u32 %v2190, 4294901760
      %v2721 = vsub.f32 %v2190, %v2720
      %v2722 = vand.u32 %v2721, 4294901760
      %v2723 = vsub.f32 %v2721, %v2722
      %v2724 = vand.u32 %v2723, 4294901760
      %2725 = vmatpush1.msra.mxu0 %v2724
      %2726 = vmatprep.subr.mxu0 0.0
      %2727 = vmatpush2.msra.mxu0 0.0
      %2728 = vmatprep.subr.mxu0 0.0
      %2729 = vmatpush2.msra.mxu0 0.0
      %2730 = vmatprep.subr.mxu0 0.0
      %2731 = vmatpush2.msra.mxu0 0.0
      %2732 = vmatprep.subr.mxu0 0.0
      %2733 = vmatpush2.msra.mxu0 0.0
      %2734 = vmatprep.subr.mxu0 0.0
      %2735 = vmatpush2.msra.mxu0 0.0
      %2736 = vmatprep.subr.mxu0 0.0
      %2737 = vmatpush2.msra.mxu0 0.0
      %2738 = vmatprep.subr.mxu0 0.0
      %2739 = vmatpush2.msra.mxu0 0.0
      %2740 = vmatprep.subr.mxu0 0.0
      %2741 = vmatpush2.msra.mxu0 0.0
      %2742 = vmatprep.subr.mxu0 0.0
      %2743 = vmatpush2.msra.mxu0 0.0
      %2744 = vmatprep.subr.mxu0 0.0
      %2745 = vmatpush2.msra.mxu0 0.0
      %2746 = vmatprep.subr.mxu0 0.0
      %2747 = vmatpush2.msra.mxu0 0.0
      %2748 = vmatprep.subr.mxu0 0.0
      %2749 = vmatpush2.msra.mxu0 0.0
      %2750 = vmatprep.subr.mxu0 0.0
      %2751 = vmatpush2.msra.mxu0 0.0
      %2752 = vmatprep.subr.mxu0 0.0
      %2753 = vmatpush2.msra.mxu0 0.0
      %2754 = vmatprep.subr.mxu0 0.0
      %2755 = vmatpush2.msra.mxu0 0.0
      %2756 = vmatprep.subr.mxu0 0.0
      %2757 = vmatpush2.msra.mxu0 0.0
      %2758 = vmatprep.mubr.f32.mxu0 0.0
      %v2759 = vand.u32 %v2158, 4294901760
      %2760 = vmatmul.mubr.f32.gmra.mxu0 %v2759
      %v2761 = vpop.f32.mrf.mxu0
      %v2762 = vadd.f32 %v2301, %v2761
      %v2763 = vpop.f32.mrf.mxu0
      %2764 = vmatprep.mubr.f32.mxu0 0.0
      %v2765 = vand.u32 %v2159, 4294901760
      %2766 = vmatmul.mubr.f32.gmra.mxu0 %v2765
      %v2767 = vpop.f32.mrf.mxu0
      %v2768 = vadd.f32 %v2311, %v2767
      %v2769 = vpop.f32.mrf.mxu0
      %2770 = vmatprep.mubr.f32.mxu0 0.0
      %v2771 = vand.u32 %v2160, 4294901760
      %2772 = vmatmul.mubr.f32.gmra.mxu0 %v2771
      %v2773 = vpop.f32.mrf.mxu0
      %v2774 = vadd.f32 %v2321, %v2773
      %v2775 = vpop.f32.mrf.mxu0
      %2776 = vmatprep.mubr.f32.mxu0 0.0
      %v2777 = vand.u32 %v2161, 4294901760
      %2778 = vmatmul.mubr.f32.gmra.mxu0 %v2777
      %v2779 = vpop.f32.mrf.mxu0
      %v2780 = vadd.f32 %v2331, %v2779
      %v2781 = vpop.f32.mrf.mxu0
      %2782 = vmatprep.mubr.f32.mxu0 0.0
      %v2783 = vand.u32 %v2162, 4294901760
      %2784 = vmatmul.mubr.f32.gmra.mxu0 %v2783
      %v2785 = vpop.f32.mrf.mxu0
      %v2786 = vadd.f32 %v2341, %v2785
      %v2787 = vpop.f32.mrf.mxu0
      %2788 = vmatprep.mubr.f32.mxu0 0.0
      %v2789 = vand.u32 %v2163, 4294901760
      %2790 = vmatmul.mubr.f32.gmra.mxu0 %v2789
      %v2791 = vpop.f32.mrf.mxu0
      %v2792 = vadd.f32 %v2351, %v2791
      %v2793 = vpop.f32.mrf.mxu0
      %2794 = vmatprep.mubr.f32.mxu0 0.0
      %v2795 = vand.u32 %v2164, 4294901760
      %2796 = vmatmul.mubr.f32.gmra.mxu0 %v2795
      %v2797 = vpop.f32.mrf.mxu0
      %v2798 = vadd.f32 %v2361, %v2797
      %v2799 = vpop.f32.mrf.mxu0
      %2800 = vmatprep.mubr.f32.mxu0 0.0
      %v2801 = vand.u32 %v2165, 4294901760
      %2802 = vmatmul.mubr.f32.gmra.mxu0 %v2801
      %v2803 = vpop.f32.mrf.mxu0
      %v2804 = vadd.f32 %v2371, %v2803
      %v2805 = vpop.f32.mrf.mxu0
      %2806 = vmatprep.mubr.f32.mxu0 0.0
      %v2807 = vand.u32 %v2166, 4294901760
      %2808 = vmatmul.mubr.f32.gmra.mxu0 %v2807
      %v2809 = vpop.f32.mrf.mxu0
      %v2810 = vadd.f32 %v2381, %v2809
      %v2811 = vpop.f32.mrf.mxu0
      %2812 = vmatprep.mubr.f32.mxu0 0.0
      %v2813 = vand.u32 %v2167, 4294901760
      %2814 = vmatmul.mubr.f32.gmra.mxu0 %v2813
      %v2815 = vpop.f32.mrf.mxu0
      %v2816 = vadd.f32 %v2391, %v2815
      %v2817 = vpop.f32.mrf.mxu0
      %2818 = vmatprep.mubr.f32.mxu0 0.0
      %v2819 = vand.u32 %v2168, 4294901760
      %2820 = vmatmul.mubr.f32.gmra.mxu0 %v2819
      %v2821 = vpop.f32.mrf.mxu0
      %v2822 = vadd.f32 %v2401, %v2821
      %v2823 = vpop.f32.mrf.mxu0
      %2824 = vmatprep.mubr.f32.mxu0 0.0
      %v2825 = vand.u32 %v2169, 4294901760
      %2826 = vmatmul.mubr.f32.gmra.mxu0 %v2825
      %v2827 = vpop.f32.mrf.mxu0
      %v2828 = vadd.f32 %v2411, %v2827
      %v2829 = vpop.f32.mrf.mxu0
      %2830 = vmatprep.mubr.f32.mxu0 0.0
      %v2831 = vand.u32 %v2170, 4294901760
      %2832 = vmatmul.mubr.f32.gmra.mxu0 %v2831
      %v2833 = vpop.f32.mrf.mxu0
      %v2834 = vadd.f32 %v2421, %v2833
      %v2835 = vpop.f32.mrf.mxu0
      %2836 = vmatprep.mubr.f32.mxu0 0.0
      %v2837 = vand.u32 %v2171, 4294901760
      %2838 = vmatmul.mubr.f32.gmra.mxu0 %v2837
      %v2839 = vpop.f32.mrf.mxu0
      %v2840 = vadd.f32 %v2431, %v2839
      %v2841 = vpop.f32.mrf.mxu0
      %2842 = vmatprep.mubr.f32.mxu0 0.0
      %v2843 = vand.u32 %v2172, 4294901760
      %2844 = vmatmul.mubr.f32.gmra.mxu0 %v2843
      %v2845 = vpop.f32.mrf.mxu0
      %v2846 = vadd.f32 %v2441, %v2845
      %v2847 = vpop.f32.mrf.mxu0
      %2848 = vmatprep.mubr.f32.mxu0 0.0
      %v2849 = vand.u32 %v2173, 4294901760
      %2850 = vmatmul.mubr.f32.gmra.mxu0 %v2849
      %v2851 = vpop.f32.mrf.mxu0
      %v2852 = vadd.f32 %v2451, %v2851
      %v2853 = vpop.f32.mrf.mxu0
      %2854 = vmatprep.mubr.f32.mxu0 0.0
      %v2855 = vand.u32 %v2174, 4294901760
      %2856 = vmatmul.mubr.f32.gmra.mxu0 %v2855
      %v2857 = vpop.f32.mrf.mxu0
      %v2858 = vadd.f32 %v2461, %v2857
      %v2859 = vpop.f32.mrf.mxu0
      %2860 = vmatprep.mubr.f32.mxu0 0.0
      %v2861 = vand.u32 %v2175, 4294901760
      %2862 = vmatmul.mubr.f32.gmra.mxu0 %v2861
      %v2863 = vpop.f32.mrf.mxu0
      %v2864 = vadd.f32 %v2471, %v2863
      %v2865 = vpop.f32.mrf.mxu0
      %2866 = vmatprep.mubr.f32.mxu0 0.0
      %v2867 = vand.u32 %v2176, 4294901760
      %2868 = vmatmul.mubr.f32.gmra.mxu0 %v2867
      %v2869 = vpop.f32.mrf.mxu0
      %v2870 = vadd.f32 %v2481, %v2869
      %v2871 = vpop.f32.mrf.mxu0
      %2872 = vmatprep.mubr.f32.mxu0 0.0
      %v2873 = vand.u32 %v2177, 4294901760
      %2874 = vmatmul.mubr.f32.gmra.mxu0 %v2873
      %v2875 = vpop.f32.mrf.mxu0
      %v2876 = vadd.f32 %v2491, %v2875
      %v2877 = vpop.f32.mrf.mxu0
      %2878 = vmatprep.mubr.f32.mxu0 0.0
      %v2879 = vand.u32 %v2178, 4294901760
      %2880 = vmatmul.mubr.f32.gmra.mxu0 %v2879
      %v2881 = vpop.f32.mrf.mxu0
      %v2882 = vadd.f32 %v2501, %v2881
      %v2883 = vpop.f32.mrf.mxu0
      %2884 = vmatprep.mubr.f32.mxu0 0.0
      %v2885 = vand.u32 %v2179, 4294901760
      %2886 = vmatmul.mubr.f32.gmra.mxu0 %v2885
      %v2887 = vpop.f32.mrf.mxu0
      %v2888 = vadd.f32 %v2511, %v2887
      %v2889 = vpop.f32.mrf.mxu0
      %2890 = vmatprep.mubr.f32.mxu0 0.0
      %v2891 = vand.u32 %v2180, 4294901760
      %2892 = vmatmul.mubr.f32.gmra.mxu0 %v2891
      %v2893 = vpop.f32.mrf.mxu0
      %v2894 = vadd.f32 %v2521, %v2893
      %v2895 = vpop.f32.mrf.mxu0
      %2896 = vmatprep.mubr.f32.mxu0 0.0
      %v2897 = vand.u32 %v2181, 4294901760
      %2898 = vmatmul.mubr.f32.gmra.mxu0 %v2897
      %v2899 = vpop.f32.mrf.mxu0
      %v2900 = vadd.f32 %v2531, %v2899
      %v2901 = vpop.f32.mrf.mxu0
      %2902 = vmatprep.mubr.f32.mxu0 0.0
      %v2903 = vand.u32 %v2182, 4294901760
      %2904 = vmatmul.mubr.f32.gmra.mxu0 %v2903
      %v2905 = vpop.f32.mrf.mxu0
      %v2906 = vadd.f32 %v2541, %v2905
      %v2907 = vpop.f32.mrf.mxu0
      %2908 = vmatprep.mubr.f32.mxu0 0.0
      %v2909 = vand.u32 %v2183, 4294901760
      %2910 = vmatmul.mubr.f32.gmra.mxu0 %v2909
      %v2911 = vpop.f32.mrf.mxu0
      %v2912 = vadd.f32 %v2551, %v2911
      %v2913 = vpop.f32.mrf.mxu0
      %2914 = vmatprep.mubr.f32.mxu0 0.0
      %v2915 = vand.u32 %v2184, 4294901760
      %2916 = vmatmul.mubr.f32.gmra.mxu0 %v2915
      %v2917 = vpop.f32.mrf.mxu0
      %v2918 = vadd.f32 %v2561, %v2917
      %v2919 = vpop.f32.mrf.mxu0
      %2920 = vmatprep.mubr.f32.mxu0 0.0
      %v2921 = vand.u32 %v2185, 4294901760
      %2922 = vmatmul.mubr.f32.gmra.mxu0 %v2921
      %v2923 = vpop.f32.mrf.mxu0
      %v2924 = vadd.f32 %v2571, %v2923
      %v2925 = vpop.f32.mrf.mxu0
      %2926 = vmatprep.mubr.f32.mxu0 0.0
      %v2927 = vand.u32 %v2186, 4294901760
      %2928 = vmatmul.mubr.f32.gmra.mxu0 %v2927
      %v2929 = vpop.f32.mrf.mxu0
      %v2930 = vadd.f32 %v2581, %v2929
      %v2931 = vpop.f32.mrf.mxu0
      %2932 = vmatprep.mubr.f32.mxu0 0.0
      %v2933 = vand.u32 %v2187, 4294901760
      %2934 = vmatmul.mubr.f32.gmra.mxu0 %v2933
      %v2935 = vpop.f32.mrf.mxu0
      %v2936 = vadd.f32 %v2591, %v2935
      %v2937 = vpop.f32.mrf.mxu0
      %2938 = vmatprep.mubr.f32.mxu0 0.0
      %v2939 = vand.u32 %v2188, 4294901760
      %2940 = vmatmul.mubr.f32.gmra.mxu0 %v2939
      %v2941 = vpop.f32.mrf.mxu0
      %v2942 = vadd.f32 %v2601, %v2941
      %v2943 = vpop.f32.mrf.mxu0
      %2944 = vmatprep.mubr.f32.mxu0 0.0
      %v2945 = vand.u32 %v2189, 4294901760
      %2946 = vmatmul.mubr.f32.gmra.mxu0 %v2945
      %v2947 = vpop.f32.mrf.mxu0
      %v2948 = vadd.f32 %v2611, %v2947
      %v2949 = vpop.f32.mrf.mxu0
      %2950 = vdwg.mxu0
      %2951 = vmatprep.subr.mxu0 0.0
      %v2952 = vand.u32 %v2205, 4294901760
      %v2953 = vsub.f32 %v2205, %v2952
      %2954 = vmatpush1.msra.mxu0 %v2953
      %2955 = vmatprep.subr.mxu0 0.0
      %v2956 = vand.u32 %v2204, 4294901760
      %v2957 = vsub.f32 %v2204, %v2956
      %2958 = vmatpush1.msra.mxu0 %v2957
      %2959 = vmatprep.subr.mxu0 0.0
      %v2960 = vand.u32 %v2203, 4294901760
      %v2961 = vsub.f32 %v2203, %v2960
      %2962 = vmatpush1.msra.mxu0 %v2961
      %2963 = vmatprep.subr.mxu0 0.0
      %v2964 = vand.u32 %v2202, 4294901760
      %v2965 = vsub.f32 %v2202, %v2964
      %2966 = vmatpush1.msra.mxu0 %v2965
      %2967 = vmatprep.subr.mxu0 0.0
      %v2968 = vand.u32 %v2201, 4294901760
      %v2969 = vsub.f32 %v2201, %v2968
      %2970 = vmatpush1.msra.mxu0 %v2969
      %2971 = vmatprep.subr.mxu0 0.0
      %v2972 = vand.u32 %v2200, 4294901760
      %v2973 = vsub.f32 %v2200, %v2972
      %2974 = vmatpush1.msra.mxu0 %v2973
      %2975 = vmatprep.subr.mxu0 0.0
      %v2976 = vand.u32 %v2199, 4294901760
      %v2977 = vsub.f32 %v2199, %v2976
      %2978 = vmatpush1.msra.mxu0 %v2977
      %2979 = vmatprep.subr.mxu0 0.0
      %v2980 = vand.u32 %v2198, 4294901760
      %v2981 = vsub.f32 %v2198, %v2980
      %2982 = vmatpush1.msra.mxu0 %v2981
      %2983 = vmatprep.subr.mxu0 0.0
      %v2984 = vand.u32 %v2197, 4294901760
      %v2985 = vsub.f32 %v2197, %v2984
      %2986 = vmatpush1.msra.mxu0 %v2985
      %2987 = vmatprep.subr.mxu0 0.0
      %v2988 = vand.u32 %v2196, 4294901760
      %v2989 = vsub.f32 %v2196, %v2988
      %2990 = vmatpush1.msra.mxu0 %v2989
      %2991 = vmatprep.subr.mxu0 0.0
      %v2992 = vand.u32 %v2195, 4294901760
      %v2993 = vsub.f32 %v2195, %v2992
      %2994 = vmatpush1.msra.mxu0 %v2993
      %2995 = vmatprep.subr.mxu0 0.0
      %v2996 = vand.u32 %v2194, 4294901760
      %v2997 = vsub.f32 %v2194, %v2996
      %2998 = vmatpush1.msra.mxu0 %v2997
      %2999 = vmatprep.subr.mxu0 0.0
      %v3000 = vand.u32 %v2193, 4294901760
      %v3001 = vsub.f32 %v2193, %v3000
      %3002 = vmatpush1.msra.mxu0 %v3001
      %3003 = vmatprep.subr.mxu0 0.0
      %v3004 = vand.u32 %v2192, 4294901760
      %v3005 = vsub.f32 %v2192, %v3004
      %3006 = vmatpush1.msra.mxu0 %v3005
      %3007 = vmatprep.subr.mxu0 0.0
      %v3008 = vand.u32 %v2191, 4294901760
      %v3009 = vsub.f32 %v2191, %v3008
      %3010 = vmatpush1.msra.mxu0 %v3009
      %3011 = vmatprep.subr.mxu0 0.0
      %v3012 = vand.u32 %v2190, 4294901760
      %v3013 = vsub.f32 %v2190, %v3012
      %3014 = vmatpush1.msra.mxu0 %v3013
      %3015 = vmatprep.subr.mxu0 0.0
      %3016 = vmatpush2.msra.mxu0 0.0
      %3017 = vmatprep.subr.mxu0 0.0
      %3018 = vmatpush2.msra.mxu0 0.0
      %3019 = vmatprep.subr.mxu0 0.0
      %3020 = vmatpush2.msra.mxu0 0.0
      %3021 = vmatprep.subr.mxu0 0.0
      %3022 = vmatpush2.msra.mxu0 0.0
      %3023 = vmatprep.subr.mxu0 0.0
      %3024 = vmatpush2.msra.mxu0 0.0
      %3025 = vmatprep.subr.mxu0 0.0
      %3026 = vmatpush2.msra.mxu0 0.0
      %3027 = vmatprep.subr.mxu0 0.0
      %3028 = vmatpush2.msra.mxu0 0.0
      %3029 = vmatprep.subr.mxu0 0.0
      %3030 = vmatpush2.msra.mxu0 0.0
      %3031 = vmatprep.subr.mxu0 0.0
      %3032 = vmatpush2.msra.mxu0 0.0
      %3033 = vmatprep.subr.mxu0 0.0
      %3034 = vmatpush2.msra.mxu0 0.0
      %3035 = vmatprep.subr.mxu0 0.0
      %3036 = vmatpush2.msra.mxu0 0.0
      %3037 = vmatprep.subr.mxu0 0.0
      %3038 = vmatpush2.msra.mxu0 0.0
      %3039 = vmatprep.subr.mxu0 0.0
      %3040 = vmatpush2.msra.mxu0 0.0
      %3041 = vmatprep.subr.mxu0 0.0
      %3042 = vmatpush2.msra.mxu0 0.0
      %3043 = vmatprep.subr.mxu0 0.0
      %3044 = vmatpush2.msra.mxu0 0.0
      %3045 = vmatprep.subr.mxu0 0.0
      %3046 = vmatpush2.msra.mxu0 0.0
      %3047 = vmatprep.mubr.f32.mxu0 0.0
      %v3048 = vand.u32 %v2158, 4294901760
      %v3049 = vsub.f32 %v2158, %v3048
      %3050 = vmatmul.mubr.f32.gmra.mxu0 %v3049
      %v3051 = vpop.f32.mrf.mxu0
      %v3052 = vadd.f32 %v2762, %v3051
      %v3053 = vpop.f32.mrf.mxu0
      %3054 = vmatprep.mubr.f32.mxu0 0.0
      %v3055 = vand.u32 %v2159, 4294901760
      %v3056 = vsub.f32 %v2159, %v3055
      %3057 = vmatmul.mubr.f32.gmra.mxu0 %v3056
      %v3058 = vpop.f32.mrf.mxu0
      %v3059 = vadd.f32 %v2768, %v3058
      %v3060 = vpop.f32.mrf.mxu0
      %3061 = vmatprep.mubr.f32.mxu0 0.0
      %v3062 = vand.u32 %v2160, 4294901760
      %v3063 = vsub.f32 %v2160, %v3062
      %3064 = vmatmul.mubr.f32.gmra.mxu0 %v3063
      %v3065 = vpop.f32.mrf.mxu0
      %v3066 = vadd.f32 %v2774, %v3065
      %v3067 = vpop.f32.mrf.mxu0
      %3068 = vmatprep.mubr.f32.mxu0 0.0
      %v3069 = vand.u32 %v2161, 4294901760
      %v3070 = vsub.f32 %v2161, %v3069
      %3071 = vmatmul.mubr.f32.gmra.mxu0 %v3070
      %v3072 = vpop.f32.mrf.mxu0
      %v3073 = vadd.f32 %v2780, %v3072
      %v3074 = vpop.f32.mrf.mxu0
      %3075 = vmatprep.mubr.f32.mxu0 0.0
      %v3076 = vand.u32 %v2162, 4294901760
      %v3077 = vsub.f32 %v2162, %v3076
      %3078 = vmatmul.mubr.f32.gmra.mxu0 %v3077
      %v3079 = vpop.f32.mrf.mxu0
      %v3080 = vadd.f32 %v2786, %v3079
      %v3081 = vpop.f32.mrf.mxu0
      %3082 = vmatprep.mubr.f32.mxu0 0.0
      %v3083 = vand.u32 %v2163, 4294901760
      %v3084 = vsub.f32 %v2163, %v3083
      %3085 = vmatmul.mubr.f32.gmra.mxu0 %v3084
      %v3086 = vpop.f32.mrf.mxu0
      %v3087 = vadd.f32 %v2792, %v3086
      %v3088 = vpop.f32.mrf.mxu0
      %3089 = vmatprep.mubr.f32.mxu0 0.0
      %v3090 = vand.u32 %v2164, 4294901760
      %v3091 = vsub.f32 %v2164, %v3090
      %3092 = vmatmul.mubr.f32.gmra.mxu0 %v3091
      %v3093 = vpop.f32.mrf.mxu0
      %v3094 = vadd.f32 %v2798, %v3093
      %v3095 = vpop.f32.mrf.mxu0
      %3096 = vmatprep.mubr.f32.mxu0 0.0
      %v3097 = vand.u32 %v2165, 4294901760
      %v3098 = vsub.f32 %v2165, %v3097
      %3099 = vmatmul.mubr.f32.gmra.mxu0 %v3098
      %v3100 = vpop.f32.mrf.mxu0
      %v3101 = vadd.f32 %v2804, %v3100
      %v3102 = vpop.f32.mrf.mxu0
      %3103 = vmatprep.mubr.f32.mxu0 0.0
      %v3104 = vand.u32 %v2166, 4294901760
      %v3105 = vsub.f32 %v2166, %v3104
      %3106 = vmatmul.mubr.f32.gmra.mxu0 %v3105
      %v3107 = vpop.f32.mrf.mxu0
      %v3108 = vadd.f32 %v2810, %v3107
      %v3109 = vpop.f32.mrf.mxu0
      %3110 = vmatprep.mubr.f32.mxu0 0.0
      %v3111 = vand.u32 %v2167, 4294901760
      %v3112 = vsub.f32 %v2167, %v3111
      %3113 = vmatmul.mubr.f32.gmra.mxu0 %v3112
      %v3114 = vpop.f32.mrf.mxu0
      %v3115 = vadd.f32 %v2816, %v3114
      %v3116 = vpop.f32.mrf.mxu0
      %3117 = vmatprep.mubr.f32.mxu0 0.0
      %v3118 = vand.u32 %v2168, 4294901760
      %v3119 = vsub.f32 %v2168, %v3118
      %3120 = vmatmul.mubr.f32.gmra.mxu0 %v3119
      %v3121 = vpop.f32.mrf.mxu0
      %v3122 = vadd.f32 %v2822, %v3121
      %v3123 = vpop.f32.mrf.mxu0
      %3124 = vmatprep.mubr.f32.mxu0 0.0
      %v3125 = vand.u32 %v2169, 4294901760
      %v3126 = vsub.f32 %v2169, %v3125
      %3127 = vmatmul.mubr.f32.gmra.mxu0 %v3126
      %v3128 = vpop.f32.mrf.mxu0
      %v3129 = vadd.f32 %v2828, %v3128
      %v3130 = vpop.f32.mrf.mxu0
      %3131 = vmatprep.mubr.f32.mxu0 0.0
      %v3132 = vand.u32 %v2170, 4294901760
      %v3133 = vsub.f32 %v2170, %v3132
      %3134 = vmatmul.mubr.f32.gmra.mxu0 %v3133
      %v3135 = vpop.f32.mrf.mxu0
      %v3136 = vadd.f32 %v2834, %v3135
      %v3137 = vpop.f32.mrf.mxu0
      %3138 = vmatprep.mubr.f32.mxu0 0.0
      %v3139 = vand.u32 %v2171, 4294901760
      %v3140 = vsub.f32 %v2171, %v3139
      %3141 = vmatmul.mubr.f32.gmra.mxu0 %v3140
      %v3142 = vpop.f32.mrf.mxu0
      %v3143 = vadd.f32 %v2840, %v3142
      %v3144 = vpop.f32.mrf.mxu0
      %3145 = vmatprep.mubr.f32.mxu0 0.0
      %v3146 = vand.u32 %v2172, 4294901760
      %v3147 = vsub.f32 %v2172, %v3146
      %3148 = vmatmul.mubr.f32.gmra.mxu0 %v3147
      %v3149 = vpop.f32.mrf.mxu0
      %v3150 = vadd.f32 %v2846, %v3149
      %v3151 = vpop.f32.mrf.mxu0
      %3152 = vmatprep.mubr.f32.mxu0 0.0
      %v3153 = vand.u32 %v2173, 4294901760
      %v3154 = vsub.f32 %v2173, %v3153
      %3155 = vmatmul.mubr.f32.gmra.mxu0 %v3154
      %v3156 = vpop.f32.mrf.mxu0
      %v3157 = vadd.f32 %v2852, %v3156
      %v3158 = vpop.f32.mrf.mxu0
      %3159 = vmatprep.mubr.f32.mxu0 0.0
      %v3160 = vand.u32 %v2174, 4294901760
      %v3161 = vsub.f32 %v2174, %v3160
      %3162 = vmatmul.mubr.f32.gmra.mxu0 %v3161
      %v3163 = vpop.f32.mrf.mxu0
      %v3164 = vadd.f32 %v2858, %v3163
      %v3165 = vpop.f32.mrf.mxu0
      %3166 = vmatprep.mubr.f32.mxu0 0.0
      %v3167 = vand.u32 %v2175, 4294901760
      %v3168 = vsub.f32 %v2175, %v3167
      %3169 = vmatmul.mubr.f32.gmra.mxu0 %v3168
      %v3170 = vpop.f32.mrf.mxu0
      %v3171 = vadd.f32 %v2864, %v3170
      %v3172 = vpop.f32.mrf.mxu0
      %3173 = vmatprep.mubr.f32.mxu0 0.0
      %v3174 = vand.u32 %v2176, 4294901760
      %v3175 = vsub.f32 %v2176, %v3174
      %3176 = vmatmul.mubr.f32.gmra.mxu0 %v3175
      %v3177 = vpop.f32.mrf.mxu0
      %v3178 = vadd.f32 %v2870, %v3177
      %v3179 = vpop.f32.mrf.mxu0
      %3180 = vmatprep.mubr.f32.mxu0 0.0
      %v3181 = vand.u32 %v2177, 4294901760
      %v3182 = vsub.f32 %v2177, %v3181
      %3183 = vmatmul.mubr.f32.gmra.mxu0 %v3182
      %v3184 = vpop.f32.mrf.mxu0
      %v3185 = vadd.f32 %v2876, %v3184
      %v3186 = vpop.f32.mrf.mxu0
      %3187 = vmatprep.mubr.f32.mxu0 0.0
      %v3188 = vand.u32 %v2178, 4294901760
      %v3189 = vsub.f32 %v2178, %v3188
      %3190 = vmatmul.mubr.f32.gmra.mxu0 %v3189
      %v3191 = vpop.f32.mrf.mxu0
      %v3192 = vadd.f32 %v2882, %v3191
      %v3193 = vpop.f32.mrf.mxu0
      %3194 = vmatprep.mubr.f32.mxu0 0.0
      %v3195 = vand.u32 %v2179, 4294901760
      %v3196 = vsub.f32 %v2179, %v3195
      %3197 = vmatmul.mubr.f32.gmra.mxu0 %v3196
      %v3198 = vpop.f32.mrf.mxu0
      %v3199 = vadd.f32 %v2888, %v3198
      %v3200 = vpop.f32.mrf.mxu0
      %3201 = vmatprep.mubr.f32.mxu0 0.0
      %v3202 = vand.u32 %v2180, 4294901760
      %v3203 = vsub.f32 %v2180, %v3202
      %3204 = vmatmul.mubr.f32.gmra.mxu0 %v3203
      %v3205 = vpop.f32.mrf.mxu0
      %v3206 = vadd.f32 %v2894, %v3205
      %v3207 = vpop.f32.mrf.mxu0
      %3208 = vmatprep.mubr.f32.mxu0 0.0
      %v3209 = vand.u32 %v2181, 4294901760
      %v3210 = vsub.f32 %v2181, %v3209
      %3211 = vmatmul.mubr.f32.gmra.mxu0 %v3210
      %v3212 = vpop.f32.mrf.mxu0
      %v3213 = vadd.f32 %v2900, %v3212
      %v3214 = vpop.f32.mrf.mxu0
      %3215 = vmatprep.mubr.f32.mxu0 0.0
      %v3216 = vand.u32 %v2182, 4294901760
      %v3217 = vsub.f32 %v2182, %v3216
      %3218 = vmatmul.mubr.f32.gmra.mxu0 %v3217
      %v3219 = vpop.f32.mrf.mxu0
      %v3220 = vadd.f32 %v2906, %v3219
      %v3221 = vpop.f32.mrf.mxu0
      %3222 = vmatprep.mubr.f32.mxu0 0.0
      %v3223 = vand.u32 %v2183, 4294901760
      %v3224 = vsub.f32 %v2183, %v3223
      %3225 = vmatmul.mubr.f32.gmra.mxu0 %v3224
      %v3226 = vpop.f32.mrf.mxu0
      %v3227 = vadd.f32 %v2912, %v3226
      %v3228 = vpop.f32.mrf.mxu0
      %3229 = vmatprep.mubr.f32.mxu0 0.0
      %v3230 = vand.u32 %v2184, 4294901760
      %v3231 = vsub.f32 %v2184, %v3230
      %3232 = vmatmul.mubr.f32.gmra.mxu0 %v3231
      %v3233 = vpop.f32.mrf.mxu0
      %v3234 = vadd.f32 %v2918, %v3233
      %v3235 = vpop.f32.mrf.mxu0
      %3236 = vmatprep.mubr.f32.mxu0 0.0
      %v3237 = vand.u32 %v2185, 4294901760
      %v3238 = vsub.f32 %v2185, %v3237
      %3239 = vmatmul.mubr.f32.gmra.mxu0 %v3238
      %v3240 = vpop.f32.mrf.mxu0
      %v3241 = vadd.f32 %v2924, %v3240
      %v3242 = vpop.f32.mrf.mxu0
      %3243 = vmatprep.mubr.f32.mxu0 0.0
      %v3244 = vand.u32 %v2186, 4294901760
      %v3245 = vsub.f32 %v2186, %v3244
      %3246 = vmatmul.mubr.f32.gmra.mxu0 %v3245
      %v3247 = vpop.f32.mrf.mxu0
      %v3248 = vadd.f32 %v2930, %v3247
      %v3249 = vpop.f32.mrf.mxu0
      %3250 = vmatprep.mubr.f32.mxu0 0.0
      %v3251 = vand.u32 %v2187, 4294901760
      %v3252 = vsub.f32 %v2187, %v3251
      %3253 = vmatmul.mubr.f32.gmra.mxu0 %v3252
      %v3254 = vpop.f32.mrf.mxu0
      %v3255 = vadd.f32 %v2936, %v3254
      %v3256 = vpop.f32.mrf.mxu0
      %3257 = vmatprep.mubr.f32.mxu0 0.0
      %v3258 = vand.u32 %v2188, 4294901760
      %v3259 = vsub.f32 %v2188, %v3258
      %3260 = vmatmul.mubr.f32.gmra.mxu0 %v3259
      %v3261 = vpop.f32.mrf.mxu0
      %v3262 = vadd.f32 %v2942, %v3261
      %v3263 = vpop.f32.mrf.mxu0
      %3264 = vmatprep.mubr.f32.mxu0 0.0
      %v3265 = vand.u32 %v2189, 4294901760
      %v3266 = vsub.f32 %v2189, %v3265
      %3267 = vmatmul.mubr.f32.gmra.mxu0 %v3266
      %v3268 = vpop.f32.mrf.mxu0
      %v3269 = vadd.f32 %v2948, %v3268
      %v3270 = vpop.f32.mrf.mxu0
      %3271 = vdwg.mxu0
      %3272 = vmatprep.subr.mxu0 0.0
      %v3273 = vand.u32 %v2205, 4294901760
      %3274 = vmatpush1.msra.mxu0 %v3273
      %3275 = vmatprep.subr.mxu0 0.0
      %v3276 = vand.u32 %v2204, 4294901760
      %3277 = vmatpush1.msra.mxu0 %v3276
      %3278 = vmatprep.subr.mxu0 0.0
      %v3279 = vand.u32 %v2203, 4294901760
      %3280 = vmatpush1.msra.mxu0 %v3279
      %3281 = vmatprep.subr.mxu0 0.0
      %v3282 = vand.u32 %v2202, 4294901760
      %3283 = vmatpush1.msra.mxu0 %v3282
      %3284 = vmatprep.subr.mxu0 0.0
      %v3285 = vand.u32 %v2201, 4294901760
      %3286 = vmatpush1.msra.mxu0 %v3285
      %3287 = vmatprep.subr.mxu0 0.0
      %v3288 = vand.u32 %v2200, 4294901760
      %3289 = vmatpush1.msra.mxu0 %v3288
      %3290 = vmatprep.subr.mxu0 0.0
      %v3291 = vand.u32 %v2199, 4294901760
      %3292 = vmatpush1.msra.mxu0 %v3291
      %3293 = vmatprep.subr.mxu0 0.0
      %v3294 = vand.u32 %v2198, 4294901760
      %3295 = vmatpush1.msra.mxu0 %v3294
      %3296 = vmatprep.subr.mxu0 0.0
      %v3297 = vand.u32 %v2197, 4294901760
      %3298 = vmatpush1.msra.mxu0 %v3297
      %3299 = vmatprep.subr.mxu0 0.0
      %v3300 = vand.u32 %v2196, 4294901760
      %3301 = vmatpush1.msra.mxu0 %v3300
      %3302 = vmatprep.subr.mxu0 0.0
      %v3303 = vand.u32 %v2195, 4294901760
      %3304 = vmatpush1.msra.mxu0 %v3303
      %3305 = vmatprep.subr.mxu0 0.0
      %v3306 = vand.u32 %v2194, 4294901760
      %3307 = vmatpush1.msra.mxu0 %v3306
      %3308 = vmatprep.subr.mxu0 0.0
      %v3309 = vand.u32 %v2193, 4294901760
      %3310 = vmatpush1.msra.mxu0 %v3309
      %3311 = vmatprep.subr.mxu0 0.0
      %v3312 = vand.u32 %v2192, 4294901760
      %3313 = vmatpush1.msra.mxu0 %v3312
      %3314 = vmatprep.subr.mxu0 0.0
      %v3315 = vand.u32 %v2191, 4294901760
      %3316 = vmatpush1.msra.mxu0 %v3315
      %3317 = vmatprep.subr.mxu0 0.0
      %v3318 = vand.u32 %v2190, 4294901760
      %3319 = vmatpush1.msra.mxu0 %v3318
      %3320 = vmatprep.subr.mxu0 0.0
      %3321 = vmatpush2.msra.mxu0 0.0
      %3322 = vmatprep.subr.mxu0 0.0
      %3323 = vmatpush2.msra.mxu0 0.0
      %3324 = vmatprep.subr.mxu0 0.0
      %3325 = vmatpush2.msra.mxu0 0.0
      %3326 = vmatprep.subr.mxu0 0.0
      %3327 = vmatpush2.msra.mxu0 0.0
      %3328 = vmatprep.subr.mxu0 0.0
      %3329 = vmatpush2.msra.mxu0 0.0
      %3330 = vmatprep.subr.mxu0 0.0
      %3331 = vmatpush2.msra.mxu0 0.0
      %3332 = vmatprep.subr.mxu0 0.0
      %3333 = vmatpush2.msra.mxu0 0.0
      %3334 = vmatprep.subr.mxu0 0.0
      %3335 = vmatpush2.msra.mxu0 0.0
      %3336 = vmatprep.subr.mxu0 0.0
      %3337 = vmatpush2.msra.mxu0 0.0
      %3338 = vmatprep.subr.mxu0 0.0
      %3339 = vmatpush2.msra.mxu0 0.0
      %3340 = vmatprep.subr.mxu0 0.0
      %3341 = vmatpush2.msra.mxu0 0.0
      %3342 = vmatprep.subr.mxu0 0.0
      %3343 = vmatpush2.msra.mxu0 0.0
      %3344 = vmatprep.subr.mxu0 0.0
      %3345 = vmatpush2.msra.mxu0 0.0
      %3346 = vmatprep.subr.mxu0 0.0
      %3347 = vmatpush2.msra.mxu0 0.0
      %3348 = vmatprep.subr.mxu0 0.0
      %3349 = vmatpush2.msra.mxu0 0.0
      %3350 = vmatprep.subr.mxu0 0.0
      %3351 = vmatpush2.msra.mxu0 0.0
      %3352 = vmatprep.mubr.f32.mxu0 0.0
      %v3353 = vand.u32 %v2158, 4294901760
      %v3354 = vsub.f32 %v2158, %v3353
      %v3355 = vand.u32 %v3354, 4294901760
      %3356 = vmatmul.mubr.f32.gmra.mxu0 %v3355
      %v3357 = vpop.f32.mrf.mxu0
      %v3358 = vadd.f32 %v3052, %v3357
      %v3359 = vpop.f32.mrf.mxu0
      %3360 = vmatprep.mubr.f32.mxu0 0.0
      %v3361 = vand.u32 %v2159, 4294901760
      %v3362 = vsub.f32 %v2159, %v3361
      %v3363 = vand.u32 %v3362, 4294901760
      %3364 = vmatmul.mubr.f32.gmra.mxu0 %v3363
      %v3365 = vpop.f32.mrf.mxu0
      %v3366 = vadd.f32 %v3059, %v3365
      %v3367 = vpop.f32.mrf.mxu0
      %3368 = vmatprep.mubr.f32.mxu0 0.0
      %v3369 = vand.u32 %v2160, 4294901760
      %v3370 = vsub.f32 %v2160, %v3369
      %v3371 = vand.u32 %v3370, 4294901760
      %3372 = vmatmul.mubr.f32.gmra.mxu0 %v3371
      %v3373 = vpop.f32.mrf.mxu0
      %v3374 = vadd.f32 %v3066, %v3373
      %v3375 = vpop.f32.mrf.mxu0
      %3376 = vmatprep.mubr.f32.mxu0 0.0
      %v3377 = vand.u32 %v2161, 4294901760
      %v3378 = vsub.f32 %v2161, %v3377
      %v3379 = vand.u32 %v3378, 4294901760
      %3380 = vmatmul.mubr.f32.gmra.mxu0 %v3379
      %v3381 = vpop.f32.mrf.mxu0
      %v3382 = vadd.f32 %v3073, %v3381
      %v3383 = vpop.f32.mrf.mxu0
      %3384 = vmatprep.mubr.f32.mxu0 0.0
      %v3385 = vand.u32 %v2162, 4294901760
      %v3386 = vsub.f32 %v2162, %v3385
      %v3387 = vand.u32 %v3386, 4294901760
      %3388 = vmatmul.mubr.f32.gmra.mxu0 %v3387
      %v3389 = vpop.f32.mrf.mxu0
      %v3390 = vadd.f32 %v3080, %v3389
      %v3391 = vpop.f32.mrf.mxu0
      %3392 = vmatprep.mubr.f32.mxu0 0.0
      %v3393 = vand.u32 %v2163, 4294901760
      %v3394 = vsub.f32 %v2163, %v3393
      %v3395 = vand.u32 %v3394, 4294901760
      %3396 = vmatmul.mubr.f32.gmra.mxu0 %v3395
      %v3397 = vpop.f32.mrf.mxu0
      %v3398 = vadd.f32 %v3087, %v3397
      %v3399 = vpop.f32.mrf.mxu0
      %3400 = vmatprep.mubr.f32.mxu0 0.0
      %v3401 = vand.u32 %v2164, 4294901760
      %v3402 = vsub.f32 %v2164, %v3401
      %v3403 = vand.u32 %v3402, 4294901760
      %3404 = vmatmul.mubr.f32.gmra.mxu0 %v3403
      %v3405 = vpop.f32.mrf.mxu0
      %v3406 = vadd.f32 %v3094, %v3405
      %v3407 = vpop.f32.mrf.mxu0
      %3408 = vmatprep.mubr.f32.mxu0 0.0
      %v3409 = vand.u32 %v2165, 4294901760
      %v3410 = vsub.f32 %v2165, %v3409
      %v3411 = vand.u32 %v3410, 4294901760
      %3412 = vmatmul.mubr.f32.gmra.mxu0 %v3411
      %v3413 = vpop.f32.mrf.mxu0
      %v3414 = vadd.f32 %v3101, %v3413
      %v3415 = vpop.f32.mrf.mxu0
      %3416 = vmatprep.mubr.f32.mxu0 0.0
      %v3417 = vand.u32 %v2166, 4294901760
      %v3418 = vsub.f32 %v2166, %v3417
      %v3419 = vand.u32 %v3418, 4294901760
      %3420 = vmatmul.mubr.f32.gmra.mxu0 %v3419
      %v3421 = vpop.f32.mrf.mxu0
      %v3422 = vadd.f32 %v3108, %v3421
      %v3423 = vpop.f32.mrf.mxu0
      %3424 = vmatprep.mubr.f32.mxu0 0.0
      %v3425 = vand.u32 %v2167, 4294901760
      %v3426 = vsub.f32 %v2167, %v3425
      %v3427 = vand.u32 %v3426, 4294901760
      %3428 = vmatmul.mubr.f32.gmra.mxu0 %v3427
      %v3429 = vpop.f32.mrf.mxu0
      %v3430 = vadd.f32 %v3115, %v3429
      %v3431 = vpop.f32.mrf.mxu0
      %3432 = vmatprep.mubr.f32.mxu0 0.0
      %v3433 = vand.u32 %v2168, 4294901760
      %v3434 = vsub.f32 %v2168, %v3433
      %v3435 = vand.u32 %v3434, 4294901760
      %3436 = vmatmul.mubr.f32.gmra.mxu0 %v3435
      %v3437 = vpop.f32.mrf.mxu0
      %v3438 = vadd.f32 %v3122, %v3437
      %v3439 = vpop.f32.mrf.mxu0
      %3440 = vmatprep.mubr.f32.mxu0 0.0
      %v3441 = vand.u32 %v2169, 4294901760
      %v3442 = vsub.f32 %v2169, %v3441
      %v3443 = vand.u32 %v3442, 4294901760
      %3444 = vmatmul.mubr.f32.gmra.mxu0 %v3443
      %v3445 = vpop.f32.mrf.mxu0
      %v3446 = vadd.f32 %v3129, %v3445
      %v3447 = vpop.f32.mrf.mxu0
      %3448 = vmatprep.mubr.f32.mxu0 0.0
      %v3449 = vand.u32 %v2170, 4294901760
      %v3450 = vsub.f32 %v2170, %v3449
      %v3451 = vand.u32 %v3450, 4294901760
      %3452 = vmatmul.mubr.f32.gmra.mxu0 %v3451
      %v3453 = vpop.f32.mrf.mxu0
      %v3454 = vadd.f32 %v3136, %v3453
      %v3455 = vpop.f32.mrf.mxu0
      %3456 = vmatprep.mubr.f32.mxu0 0.0
      %v3457 = vand.u32 %v2171, 4294901760
      %v3458 = vsub.f32 %v2171, %v3457
      %v3459 = vand.u32 %v3458, 4294901760
      %3460 = vmatmul.mubr.f32.gmra.mxu0 %v3459
      %v3461 = vpop.f32.mrf.mxu0
      %v3462 = vadd.f32 %v3143, %v3461
      %v3463 = vpop.f32.mrf.mxu0
      %3464 = vmatprep.mubr.f32.mxu0 0.0
      %v3465 = vand.u32 %v2172, 4294901760
      %v3466 = vsub.f32 %v2172, %v3465
      %v3467 = vand.u32 %v3466, 4294901760
      %3468 = vmatmul.mubr.f32.gmra.mxu0 %v3467
      %v3469 = vpop.f32.mrf.mxu0
      %v3470 = vadd.f32 %v3150, %v3469
      %v3471 = vpop.f32.mrf.mxu0
      %3472 = vmatprep.mubr.f32.mxu0 0.0
      %v3473 = vand.u32 %v2173, 4294901760
      %v3474 = vsub.f32 %v2173, %v3473
      %v3475 = vand.u32 %v3474, 4294901760
      %3476 = vmatmul.mubr.f32.gmra.mxu0 %v3475
      %v3477 = vpop.f32.mrf.mxu0
      %v3478 = vadd.f32 %v3157, %v3477
      %v3479 = vpop.f32.mrf.mxu0
      %3480 = vmatprep.mubr.f32.mxu0 0.0
      %v3481 = vand.u32 %v2174, 4294901760
      %v3482 = vsub.f32 %v2174, %v3481
      %v3483 = vand.u32 %v3482, 4294901760
      %3484 = vmatmul.mubr.f32.gmra.mxu0 %v3483
      %v3485 = vpop.f32.mrf.mxu0
      %v3486 = vadd.f32 %v3164, %v3485
      %v3487 = vpop.f32.mrf.mxu0
      %3488 = vmatprep.mubr.f32.mxu0 0.0
      %v3489 = vand.u32 %v2175, 4294901760
      %v3490 = vsub.f32 %v2175, %v3489
      %v3491 = vand.u32 %v3490, 4294901760
      %3492 = vmatmul.mubr.f32.gmra.mxu0 %v3491
      %v3493 = vpop.f32.mrf.mxu0
      %v3494 = vadd.f32 %v3171, %v3493
      %v3495 = vpop.f32.mrf.mxu0
      %3496 = vmatprep.mubr.f32.mxu0 0.0
      %v3497 = vand.u32 %v2176, 4294901760
      %v3498 = vsub.f32 %v2176, %v3497
      %v3499 = vand.u32 %v3498, 4294901760
      %3500 = vmatmul.mubr.f32.gmra.mxu0 %v3499
      %v3501 = vpop.f32.mrf.mxu0
      %v3502 = vadd.f32 %v3178, %v3501
      %v3503 = vpop.f32.mrf.mxu0
      %3504 = vmatprep.mubr.f32.mxu0 0.0
      %v3505 = vand.u32 %v2177, 4294901760
      %v3506 = vsub.f32 %v2177, %v3505
      %v3507 = vand.u32 %v3506, 4294901760
      %3508 = vmatmul.mubr.f32.gmra.mxu0 %v3507
      %v3509 = vpop.f32.mrf.mxu0
      %v3510 = vadd.f32 %v3185, %v3509
      %v3511 = vpop.f32.mrf.mxu0
      %3512 = vmatprep.mubr.f32.mxu0 0.0
      %v3513 = vand.u32 %v2178, 4294901760
      %v3514 = vsub.f32 %v2178, %v3513
      %v3515 = vand.u32 %v3514, 4294901760
      %3516 = vmatmul.mubr.f32.gmra.mxu0 %v3515
      %v3517 = vpop.f32.mrf.mxu0
      %v3518 = vadd.f32 %v3192, %v3517
      %v3519 = vpop.f32.mrf.mxu0
      %3520 = vmatprep.mubr.f32.mxu0 0.0
      %v3521 = vand.u32 %v2179, 4294901760
      %v3522 = vsub.f32 %v2179, %v3521
      %v3523 = vand.u32 %v3522, 4294901760
      %3524 = vmatmul.mubr.f32.gmra.mxu0 %v3523
      %v3525 = vpop.f32.mrf.mxu0
      %v3526 = vadd.f32 %v3199, %v3525
      %v3527 = vpop.f32.mrf.mxu0
      %3528 = vmatprep.mubr.f32.mxu0 0.0
      %v3529 = vand.u32 %v2180, 4294901760
      %v3530 = vsub.f32 %v2180, %v3529
      %v3531 = vand.u32 %v3530, 4294901760
      %3532 = vmatmul.mubr.f32.gmra.mxu0 %v3531
      %v3533 = vpop.f32.mrf.mxu0
      %v3534 = vadd.f32 %v3206, %v3533
      %v3535 = vpop.f32.mrf.mxu0
      %3536 = vmatprep.mubr.f32.mxu0 0.0
      %v3537 = vand.u32 %v2181, 4294901760
      %v3538 = vsub.f32 %v2181, %v3537
      %v3539 = vand.u32 %v3538, 4294901760
      %3540 = vmatmul.mubr.f32.gmra.mxu0 %v3539
      %v3541 = vpop.f32.mrf.mxu0
      %v3542 = vadd.f32 %v3213, %v3541
      %v3543 = vpop.f32.mrf.mxu0
      %3544 = vmatprep.mubr.f32.mxu0 0.0
      %v3545 = vand.u32 %v2182, 4294901760
      %v3546 = vsub.f32 %v2182, %v3545
      %v3547 = vand.u32 %v3546, 4294901760
      %3548 = vmatmul.mubr.f32.gmra.mxu0 %v3547
      %v3549 = vpop.f32.mrf.mxu0
      %v3550 = vadd.f32 %v3220, %v3549
      %v3551 = vpop.f32.mrf.mxu0
      %3552 = vmatprep.mubr.f32.mxu0 0.0
      %v3553 = vand.u32 %v2183, 4294901760
      %v3554 = vsub.f32 %v2183, %v3553
      %v3555 = vand.u32 %v3554, 4294901760
      %3556 = vmatmul.mubr.f32.gmra.mxu0 %v3555
      %v3557 = vpop.f32.mrf.mxu0
      %v3558 = vadd.f32 %v3227, %v3557
      %v3559 = vpop.f32.mrf.mxu0
      %3560 = vmatprep.mubr.f32.mxu0 0.0
      %v3561 = vand.u32 %v2184, 4294901760
      %v3562 = vsub.f32 %v2184, %v3561
      %v3563 = vand.u32 %v3562, 4294901760
      %3564 = vmatmul.mubr.f32.gmra.mxu0 %v3563
      %v3565 = vpop.f32.mrf.mxu0
      %v3566 = vadd.f32 %v3234, %v3565
      %v3567 = vpop.f32.mrf.mxu0
      %3568 = vmatprep.mubr.f32.mxu0 0.0
      %v3569 = vand.u32 %v2185, 4294901760
      %v3570 = vsub.f32 %v2185, %v3569
      %v3571 = vand.u32 %v3570, 4294901760
      %3572 = vmatmul.mubr.f32.gmra.mxu0 %v3571
      %v3573 = vpop.f32.mrf.mxu0
      %v3574 = vadd.f32 %v3241, %v3573
      %v3575 = vpop.f32.mrf.mxu0
      %3576 = vmatprep.mubr.f32.mxu0 0.0
      %v3577 = vand.u32 %v2186, 4294901760
      %v3578 = vsub.f32 %v2186, %v3577
      %v3579 = vand.u32 %v3578, 4294901760
      %3580 = vmatmul.mubr.f32.gmra.mxu0 %v3579
      %v3581 = vpop.f32.mrf.mxu0
      %v3582 = vadd.f32 %v3248, %v3581
      %v3583 = vpop.f32.mrf.mxu0
      %3584 = vmatprep.mubr.f32.mxu0 0.0
      %v3585 = vand.u32 %v2187, 4294901760
      %v3586 = vsub.f32 %v2187, %v3585
      %v3587 = vand.u32 %v3586, 4294901760
      %3588 = vmatmul.mubr.f32.gmra.mxu0 %v3587
      %v3589 = vpop.f32.mrf.mxu0
      %v3590 = vadd.f32 %v3255, %v3589
      %v3591 = vpop.f32.mrf.mxu0
      %3592 = vmatprep.mubr.f32.mxu0 0.0
      %v3593 = vand.u32 %v2188, 4294901760
      %v3594 = vsub.f32 %v2188, %v3593
      %v3595 = vand.u32 %v3594, 4294901760
      %3596 = vmatmul.mubr.f32.gmra.mxu0 %v3595
      %v3597 = vpop.f32.mrf.mxu0
      %v3598 = vadd.f32 %v3262, %v3597
      %v3599 = vpop.f32.mrf.mxu0
      %3600 = vmatprep.mubr.f32.mxu0 0.0
      %v3601 = vand.u32 %v2189, 4294901760
      %v3602 = vsub.f32 %v2189, %v3601
      %v3603 = vand.u32 %v3602, 4294901760
      %3604 = vmatmul.mubr.f32.gmra.mxu0 %v3603
      %v3605 = vpop.f32.mrf.mxu0
      %v3606 = vadd.f32 %v3269, %v3605
      %v3607 = vpop.f32.mrf.mxu0
      %3608 = vdwg.mxu0
      %3609 = vmatprep.subr.mxu0 0.0
      %v3610 = vand.u32 %v2205, 4294901760
      %v3611 = vsub.f32 %v2205, %v3610
      %v3612 = vand.u32 %v3611, 4294901760
      %3613 = vmatpush1.msra.mxu0 %v3612
      %3614 = vmatprep.subr.mxu0 0.0
      %v3615 = vand.u32 %v2204, 4294901760
      %v3616 = vsub.f32 %v2204, %v3615
      %v3617 = vand.u32 %v3616, 4294901760
      %3618 = vmatpush1.msra.mxu0 %v3617
      %3619 = vmatprep.subr.mxu0 0.0
      %v3620 = vand.u32 %v2203, 4294901760
      %v3621 = vsub.f32 %v2203, %v3620
      %v3622 = vand.u32 %v3621, 4294901760
      %3623 = vmatpush1.msra.mxu0 %v3622
      %3624 = vmatprep.subr.mxu0 0.0
      %v3625 = vand.u32 %v2202, 4294901760
      %v3626 = vsub.f32 %v2202, %v3625
      %v3627 = vand.u32 %v3626, 4294901760
      %3628 = vmatpush1.msra.mxu0 %v3627
      %3629 = vmatprep.subr.mxu0 0.0
      %v3630 = vand.u32 %v2201, 4294901760
      %v3631 = vsub.f32 %v2201, %v3630
      %v3632 = vand.u32 %v3631, 4294901760
      %3633 = vmatpush1.msra.mxu0 %v3632
      %3634 = vmatprep.subr.mxu0 0.0
      %v3635 = vand.u32 %v2200, 4294901760
      %v3636 = vsub.f32 %v2200, %v3635
      %v3637 = vand.u32 %v3636, 4294901760
      %3638 = vmatpush1.msra.mxu0 %v3637
      %3639 = vmatprep.subr.mxu0 0.0
      %v3640 = vand.u32 %v2199, 4294901760
      %v3641 = vsub.f32 %v2199, %v3640
      %v3642 = vand.u32 %v3641, 4294901760
      %3643 = vmatpush1.msra.mxu0 %v3642
      %3644 = vmatprep.subr.mxu0 0.0
      %v3645 = vand.u32 %v2198, 4294901760
      %v3646 = vsub.f32 %v2198, %v3645
      %v3647 = vand.u32 %v3646, 4294901760
      %3648 = vmatpush1.msra.mxu0 %v3647
      %3649 = vmatprep.subr.mxu0 0.0
      %v3650 = vand.u32 %v2197, 4294901760
      %v3651 = vsub.f32 %v2197, %v3650
      %v3652 = vand.u32 %v3651, 4294901760
      %3653 = vmatpush1.msra.mxu0 %v3652
      %3654 = vmatprep.subr.mxu0 0.0
      %v3655 = vand.u32 %v2196, 4294901760
      %v3656 = vsub.f32 %v2196, %v3655
      %v3657 = vand.u32 %v3656, 4294901760
      %3658 = vmatpush1.msra.mxu0 %v3657
      %3659 = vmatprep.subr.mxu0 0.0
      %v3660 = vand.u32 %v2195, 4294901760
      %v3661 = vsub.f32 %v2195, %v3660
      %v3662 = vand.u32 %v3661, 4294901760
      %3663 = vmatpush1.msra.mxu0 %v3662
      %3664 = vmatprep.subr.mxu0 0.0
      %v3665 = vand.u32 %v2194, 4294901760
      %v3666 = vsub.f32 %v2194, %v3665
      %v3667 = vand.u32 %v3666, 4294901760
      %3668 = vmatpush1.msra.mxu0 %v3667
      %3669 = vmatprep.subr.mxu0 0.0
      %v3670 = vand.u32 %v2193, 4294901760
      %v3671 = vsub.f32 %v2193, %v3670
      %v3672 = vand.u32 %v3671, 4294901760
      %3673 = vmatpush1.msra.mxu0 %v3672
      %3674 = vmatprep.subr.mxu0 0.0
      %v3675 = vand.u32 %v2192, 4294901760
      %v3676 = vsub.f32 %v2192, %v3675
      %v3677 = vand.u32 %v3676, 4294901760
      %3678 = vmatpush1.msra.mxu0 %v3677
      %3679 = vmatprep.subr.mxu0 0.0
      %v3680 = vand.u32 %v2191, 4294901760
      %v3681 = vsub.f32 %v2191, %v3680
      %v3682 = vand.u32 %v3681, 4294901760
      %3683 = vmatpush1.msra.mxu0 %v3682
      %3684 = vmatprep.subr.mxu0 0.0
      %v3685 = vand.u32 %v2190, 4294901760
      %v3686 = vsub.f32 %v2190, %v3685
      %v3687 = vand.u32 %v3686, 4294901760
      %3688 = vmatpush1.msra.mxu0 %v3687
      %3689 = vmatprep.subr.mxu0 0.0
      %3690 = vmatpush2.msra.mxu0 0.0
      %3691 = vmatprep.subr.mxu0 0.0
      %3692 = vmatpush2.msra.mxu0 0.0
      %3693 = vmatprep.subr.mxu0 0.0
      %3694 = vmatpush2.msra.mxu0 0.0
      %3695 = vmatprep.subr.mxu0 0.0
      %3696 = vmatpush2.msra.mxu0 0.0
      %3697 = vmatprep.subr.mxu0 0.0
      %3698 = vmatpush2.msra.mxu0 0.0
      %3699 = vmatprep.subr.mxu0 0.0
      %3700 = vmatpush2.msra.mxu0 0.0
      %3701 = vmatprep.subr.mxu0 0.0
      %3702 = vmatpush2.msra.mxu0 0.0
      %3703 = vmatprep.subr.mxu0 0.0
      %3704 = vmatpush2.msra.mxu0 0.0
      %3705 = vmatprep.subr.mxu0 0.0
      %3706 = vmatpush2.msra.mxu0 0.0
      %3707 = vmatprep.subr.mxu0 0.0
      %3708 = vmatpush2.msra.mxu0 0.0
      %3709 = vmatprep.subr.mxu0 0.0
      %3710 = vmatpush2.msra.mxu0 0.0
      %3711 = vmatprep.subr.mxu0 0.0
      %3712 = vmatpush2.msra.mxu0 0.0
      %3713 = vmatprep.subr.mxu0 0.0
      %3714 = vmatpush2.msra.mxu0 0.0
      %3715 = vmatprep.subr.mxu0 0.0
      %3716 = vmatpush2.msra.mxu0 0.0
      %3717 = vmatprep.subr.mxu0 0.0
      %3718 = vmatpush2.msra.mxu0 0.0
      %3719 = vmatprep.subr.mxu0 0.0
      %3720 = vmatpush2.msra.mxu0 0.0
      %3721 = vmatprep.mubr.f32.mxu0 0.0
      %v3722 = vand.u32 %v2158, 4294901760
      %3723 = vmatmul.mubr.f32.gmra.mxu0 %v3722
      %v3724 = vpop.f32.mrf.mxu0
      %v3725 = vadd.f32 %v3358, %v3724
      %v3726 = vpop.f32.mrf.mxu0
      %3727 = vmatprep.mubr.f32.mxu0 0.0
      %v3728 = vand.u32 %v2159, 4294901760
      %3729 = vmatmul.mubr.f32.gmra.mxu0 %v3728
      %v3730 = vpop.f32.mrf.mxu0
      %v3731 = vadd.f32 %v3366, %v3730
      %v3732 = vpop.f32.mrf.mxu0
      %3733 = vmatprep.mubr.f32.mxu0 0.0
      %v3734 = vand.u32 %v2160, 4294901760
      %3735 = vmatmul.mubr.f32.gmra.mxu0 %v3734
      %v3736 = vpop.f32.mrf.mxu0
      %v3737 = vadd.f32 %v3374, %v3736
      %v3738 = vpop.f32.mrf.mxu0
      %3739 = vmatprep.mubr.f32.mxu0 0.0
      %v3740 = vand.u32 %v2161, 4294901760
      %3741 = vmatmul.mubr.f32.gmra.mxu0 %v3740
      %v3742 = vpop.f32.mrf.mxu0
      %v3743 = vadd.f32 %v3382, %v3742
      %v3744 = vpop.f32.mrf.mxu0
      %3745 = vmatprep.mubr.f32.mxu0 0.0
      %v3746 = vand.u32 %v2162, 4294901760
      %3747 = vmatmul.mubr.f32.gmra.mxu0 %v3746
      %v3748 = vpop.f32.mrf.mxu0
      %v3749 = vadd.f32 %v3390, %v3748
      %v3750 = vpop.f32.mrf.mxu0
      %3751 = vmatprep.mubr.f32.mxu0 0.0
      %v3752 = vand.u32 %v2163, 4294901760
      %3753 = vmatmul.mubr.f32.gmra.mxu0 %v3752
      %v3754 = vpop.f32.mrf.mxu0
      %v3755 = vadd.f32 %v3398, %v3754
      %v3756 = vpop.f32.mrf.mxu0
      %3757 = vmatprep.mubr.f32.mxu0 0.0
      %v3758 = vand.u32 %v2164, 4294901760
      %3759 = vmatmul.mubr.f32.gmra.mxu0 %v3758
      %v3760 = vpop.f32.mrf.mxu0
      %v3761 = vadd.f32 %v3406, %v3760
      %v3762 = vpop.f32.mrf.mxu0
      %3763 = vmatprep.mubr.f32.mxu0 0.0
      %v3764 = vand.u32 %v2165, 4294901760
      %3765 = vmatmul.mubr.f32.gmra.mxu0 %v3764
      %v3766 = vpop.f32.mrf.mxu0
      %v3767 = vadd.f32 %v3414, %v3766
      %v3768 = vpop.f32.mrf.mxu0
      %3769 = vmatprep.mubr.f32.mxu0 0.0
      %v3770 = vand.u32 %v2166, 4294901760
      %3771 = vmatmul.mubr.f32.gmra.mxu0 %v3770
      %v3772 = vpop.f32.mrf.mxu0
      %v3773 = vadd.f32 %v3422, %v3772
      %v3774 = vpop.f32.mrf.mxu0
      %3775 = vmatprep.mubr.f32.mxu0 0.0
      %v3776 = vand.u32 %v2167, 4294901760
      %3777 = vmatmul.mubr.f32.gmra.mxu0 %v3776
      %v3778 = vpop.f32.mrf.mxu0
      %v3779 = vadd.f32 %v3430, %v3778
      %v3780 = vpop.f32.mrf.mxu0
      %3781 = vmatprep.mubr.f32.mxu0 0.0
      %v3782 = vand.u32 %v2168, 4294901760
      %3783 = vmatmul.mubr.f32.gmra.mxu0 %v3782
      %v3784 = vpop.f32.mrf.mxu0
      %v3785 = vadd.f32 %v3438, %v3784
      %v3786 = vpop.f32.mrf.mxu0
      %3787 = vmatprep.mubr.f32.mxu0 0.0
      %v3788 = vand.u32 %v2169, 4294901760
      %3789 = vmatmul.mubr.f32.gmra.mxu0 %v3788
      %v3790 = vpop.f32.mrf.mxu0
      %v3791 = vadd.f32 %v3446, %v3790
      %v3792 = vpop.f32.mrf.mxu0
      %3793 = vmatprep.mubr.f32.mxu0 0.0
      %v3794 = vand.u32 %v2170, 4294901760
      %3795 = vmatmul.mubr.f32.gmra.mxu0 %v3794
      %v3796 = vpop.f32.mrf.mxu0
      %v3797 = vadd.f32 %v3454, %v3796
      %v3798 = vpop.f32.mrf.mxu0
      %3799 = vmatprep.mubr.f32.mxu0 0.0
      %v3800 = vand.u32 %v2171, 4294901760
      %3801 = vmatmul.mubr.f32.gmra.mxu0 %v3800
      %v3802 = vpop.f32.mrf.mxu0
      %v3803 = vadd.f32 %v3462, %v3802
      %v3804 = vpop.f32.mrf.mxu0
      %3805 = vmatprep.mubr.f32.mxu0 0.0
      %v3806 = vand.u32 %v2172, 4294901760
      %3807 = vmatmul.mubr.f32.gmra.mxu0 %v3806
      %v3808 = vpop.f32.mrf.mxu0
      %v3809 = vadd.f32 %v3470, %v3808
      %v3810 = vpop.f32.mrf.mxu0
      %3811 = vmatprep.mubr.f32.mxu0 0.0
      %v3812 = vand.u32 %v2173, 4294901760
      %3813 = vmatmul.mubr.f32.gmra.mxu0 %v3812
      %v3814 = vpop.f32.mrf.mxu0
      %v3815 = vadd.f32 %v3478, %v3814
      %v3816 = vpop.f32.mrf.mxu0
      %3817 = vmatprep.mubr.f32.mxu0 0.0
      %v3818 = vand.u32 %v2174, 4294901760
      %3819 = vmatmul.mubr.f32.gmra.mxu0 %v3818
      %v3820 = vpop.f32.mrf.mxu0
      %v3821 = vadd.f32 %v3486, %v3820
      %v3822 = vpop.f32.mrf.mxu0
      %3823 = vmatprep.mubr.f32.mxu0 0.0
      %v3824 = vand.u32 %v2175, 4294901760
      %3825 = vmatmul.mubr.f32.gmra.mxu0 %v3824
      %v3826 = vpop.f32.mrf.mxu0
      %v3827 = vadd.f32 %v3494, %v3826
      %v3828 = vpop.f32.mrf.mxu0
      %3829 = vmatprep.mubr.f32.mxu0 0.0
      %v3830 = vand.u32 %v2176, 4294901760
      %3831 = vmatmul.mubr.f32.gmra.mxu0 %v3830
      %v3832 = vpop.f32.mrf.mxu0
      %v3833 = vadd.f32 %v3502, %v3832
      %v3834 = vpop.f32.mrf.mxu0
      %3835 = vmatprep.mubr.f32.mxu0 0.0
      %v3836 = vand.u32 %v2177, 4294901760
      %3837 = vmatmul.mubr.f32.gmra.mxu0 %v3836
      %v3838 = vpop.f32.mrf.mxu0
      %v3839 = vadd.f32 %v3510, %v3838
      %v3840 = vpop.f32.mrf.mxu0
      %3841 = vmatprep.mubr.f32.mxu0 0.0
      %v3842 = vand.u32 %v2178, 4294901760
      %3843 = vmatmul.mubr.f32.gmra.mxu0 %v3842
      %v3844 = vpop.f32.mrf.mxu0
      %v3845 = vadd.f32 %v3518, %v3844
      %v3846 = vpop.f32.mrf.mxu0
      %3847 = vmatprep.mubr.f32.mxu0 0.0
      %v3848 = vand.u32 %v2179, 4294901760
      %3849 = vmatmul.mubr.f32.gmra.mxu0 %v3848
      %v3850 = vpop.f32.mrf.mxu0
      %v3851 = vadd.f32 %v3526, %v3850
      %v3852 = vpop.f32.mrf.mxu0
      %3853 = vmatprep.mubr.f32.mxu0 0.0
      %v3854 = vand.u32 %v2180, 4294901760
      %3855 = vmatmul.mubr.f32.gmra.mxu0 %v3854
      %v3856 = vpop.f32.mrf.mxu0
      %v3857 = vadd.f32 %v3534, %v3856
      %v3858 = vpop.f32.mrf.mxu0
      %3859 = vmatprep.mubr.f32.mxu0 0.0
      %v3860 = vand.u32 %v2181, 4294901760
      %3861 = vmatmul.mubr.f32.gmra.mxu0 %v3860
      %v3862 = vpop.f32.mrf.mxu0
      %v3863 = vadd.f32 %v3542, %v3862
      %v3864 = vpop.f32.mrf.mxu0
      %3865 = vmatprep.mubr.f32.mxu0 0.0
      %v3866 = vand.u32 %v2182, 4294901760
      %3867 = vmatmul.mubr.f32.gmra.mxu0 %v3866
      %v3868 = vpop.f32.mrf.mxu0
      %v3869 = vadd.f32 %v3550, %v3868
      %v3870 = vpop.f32.mrf.mxu0
      %3871 = vmatprep.mubr.f32.mxu0 0.0
      %v3872 = vand.u32 %v2183, 4294901760
      %3873 = vmatmul.mubr.f32.gmra.mxu0 %v3872
      %v3874 = vpop.f32.mrf.mxu0
      %v3875 = vadd.f32 %v3558, %v3874
      %v3876 = vpop.f32.mrf.mxu0
      %3877 = vmatprep.mubr.f32.mxu0 0.0
      %v3878 = vand.u32 %v2184, 4294901760
      %3879 = vmatmul.mubr.f32.gmra.mxu0 %v3878
      %v3880 = vpop.f32.mrf.mxu0
      %v3881 = vadd.f32 %v3566, %v3880
      %v3882 = vpop.f32.mrf.mxu0
      %3883 = vmatprep.mubr.f32.mxu0 0.0
      %v3884 = vand.u32 %v2185, 4294901760
      %3885 = vmatmul.mubr.f32.gmra.mxu0 %v3884
      %v3886 = vpop.f32.mrf.mxu0
      %v3887 = vadd.f32 %v3574, %v3886
      %v3888 = vpop.f32.mrf.mxu0
      %3889 = vmatprep.mubr.f32.mxu0 0.0
      %v3890 = vand.u32 %v2186, 4294901760
      %3891 = vmatmul.mubr.f32.gmra.mxu0 %v3890
      %v3892 = vpop.f32.mrf.mxu0
      %v3893 = vadd.f32 %v3582, %v3892
      %v3894 = vpop.f32.mrf.mxu0
      %3895 = vmatprep.mubr.f32.mxu0 0.0
      %v3896 = vand.u32 %v2187, 4294901760
      %3897 = vmatmul.mubr.f32.gmra.mxu0 %v3896
      %v3898 = vpop.f32.mrf.mxu0
      %v3899 = vadd.f32 %v3590, %v3898
      %v3900 = vpop.f32.mrf.mxu0
      %3901 = vmatprep.mubr.f32.mxu0 0.0
      %v3902 = vand.u32 %v2188, 4294901760
      %3903 = vmatmul.mubr.f32.gmra.mxu0 %v3902
      %v3904 = vpop.f32.mrf.mxu0
      %v3905 = vadd.f32 %v3598, %v3904
      %v3906 = vpop.f32.mrf.mxu0
      %3907 = vmatprep.mubr.f32.mxu0 0.0
      %v3908 = vand.u32 %v2189, 4294901760
      %3909 = vmatmul.mubr.f32.gmra.mxu0 %v3908
      %v3910 = vpop.f32.mrf.mxu0
      %v3911 = vadd.f32 %v3606, %v3910
      %v3912 = vpop.f32.mrf.mxu0
      %3913 = vdwg.mxu0
      %3914 = vmatprep.subr.mxu0 0.0
      %v3915 = vand.u32 %v2205, 4294901760
      %3916 = vmatpush1.msra.mxu0 %v3915
      %3917 = vmatprep.subr.mxu0 0.0
      %v3918 = vand.u32 %v2204, 4294901760
      %3919 = vmatpush1.msra.mxu0 %v3918
      %3920 = vmatprep.subr.mxu0 0.0
      %v3921 = vand.u32 %v2203, 4294901760
      %3922 = vmatpush1.msra.mxu0 %v3921
      %3923 = vmatprep.subr.mxu0 0.0
      %v3924 = vand.u32 %v2202, 4294901760
      %3925 = vmatpush1.msra.mxu0 %v3924
      %3926 = vmatprep.subr.mxu0 0.0
      %v3927 = vand.u32 %v2201, 4294901760
      %3928 = vmatpush1.msra.mxu0 %v3927
      %3929 = vmatprep.subr.mxu0 0.0
      %v3930 = vand.u32 %v2200, 4294901760
      %3931 = vmatpush1.msra.mxu0 %v3930
      %3932 = vmatprep.subr.mxu0 0.0
      %v3933 = vand.u32 %v2199, 4294901760
      %3934 = vmatpush1.msra.mxu0 %v3933
      %3935 = vmatprep.subr.mxu0 0.0
      %v3936 = vand.u32 %v2198, 4294901760
      %3937 = vmatpush1.msra.mxu0 %v3936
      %3938 = vmatprep.subr.mxu0 0.0
      %v3939 = vand.u32 %v2197, 4294901760
      %3940 = vmatpush1.msra.mxu0 %v3939
      %3941 = vmatprep.subr.mxu0 0.0
      %v3942 = vand.u32 %v2196, 4294901760
      %3943 = vmatpush1.msra.mxu0 %v3942
      %3944 = vmatprep.subr.mxu0 0.0
      %v3945 = vand.u32 %v2195, 4294901760
      %3946 = vmatpush1.msra.mxu0 %v3945
      %3947 = vmatprep.subr.mxu0 0.0
      %v3948 = vand.u32 %v2194, 4294901760
      %3949 = vmatpush1.msra.mxu0 %v3948
      %3950 = vmatprep.subr.mxu0 0.0
      %v3951 = vand.u32 %v2193, 4294901760
      %3952 = vmatpush1.msra.mxu0 %v3951
      %3953 = vmatprep.subr.mxu0 0.0
      %v3954 = vand.u32 %v2192, 4294901760
      %3955 = vmatpush1.msra.mxu0 %v3954
      %3956 = vmatprep.subr.mxu0 0.0
      %v3957 = vand.u32 %v2191, 4294901760
      %3958 = vmatpush1.msra.mxu0 %v3957
      %3959 = vmatprep.subr.mxu0 0.0
      %v3960 = vand.u32 %v2190, 4294901760
      %3961 = vmatpush1.msra.mxu0 %v3960
      %3962 = vmatprep.subr.mxu0 0.0
      %3963 = vmatpush2.msra.mxu0 0.0
      %3964 = vmatprep.subr.mxu0 0.0
      %3965 = vmatpush2.msra.mxu0 0.0
      %3966 = vmatprep.subr.mxu0 0.0
      %3967 = vmatpush2.msra.mxu0 0.0
      %3968 = vmatprep.subr.mxu0 0.0
      %3969 = vmatpush2.msra.mxu0 0.0
      %3970 = vmatprep.subr.mxu0 0.0
      %3971 = vmatpush2.msra.mxu0 0.0
      %3972 = vmatprep.subr.mxu0 0.0
      %3973 = vmatpush2.msra.mxu0 0.0
      %3974 = vmatprep.subr.mxu0 0.0
      %3975 = vmatpush2.msra.mxu0 0.0
      %3976 = vmatprep.subr.mxu0 0.0
      %3977 = vmatpush2.msra.mxu0 0.0
      %3978 = vmatprep.subr.mxu0 0.0
      %3979 = vmatpush2.msra.mxu0 0.0
      %3980 = vmatprep.subr.mxu0 0.0
      %3981 = vmatpush2.msra.mxu0 0.0
      %3982 = vmatprep.subr.mxu0 0.0
      %3983 = vmatpush2.msra.mxu0 0.0
      %3984 = vmatprep.subr.mxu0 0.0
      %3985 = vmatpush2.msra.mxu0 0.0
      %3986 = vmatprep.subr.mxu0 0.0
      %3987 = vmatpush2.msra.mxu0 0.0
      %3988 = vmatprep.subr.mxu0 0.0
      %3989 = vmatpush2.msra.mxu0 0.0
      %3990 = vmatprep.subr.mxu0 0.0
      %3991 = vmatpush2.msra.mxu0 0.0
      %3992 = vmatprep.subr.mxu0 0.0
      %3993 = vmatpush2.msra.mxu0 0.0
      %3994 = vmatprep.mubr.f32.mxu0 0.0
      %v3995 = vand.u32 %v2158, 4294901760
      %3996 = vmatmul.mubr.f32.gmra.mxu0 %v3995
      %v3997 = vpop.f32.mrf.mxu0
      %v3998 = vadd.f32 %v3725, %v3997
      %v3999 = vpop.f32.mrf.mxu0
      %4000 = vmatprep.mubr.f32.mxu0 0.0
      %v4001 = vand.u32 %v2159, 4294901760
      %4002 = vmatmul.mubr.f32.gmra.mxu0 %v4001
      %v4003 = vpop.f32.mrf.mxu0
      %v4004 = vadd.f32 %v3731, %v4003
      %v4005 = vpop.f32.mrf.mxu0
      %4006 = vmatprep.mubr.f32.mxu0 0.0
      %v4007 = vand.u32 %v2160, 4294901760
      %4008 = vmatmul.mubr.f32.gmra.mxu0 %v4007
      %v4009 = vpop.f32.mrf.mxu0
      %v4010 = vadd.f32 %v3737, %v4009
      %v4011 = vpop.f32.mrf.mxu0
      %4012 = vmatprep.mubr.f32.mxu0 0.0
      %v4013 = vand.u32 %v2161, 4294901760
      %4014 = vmatmul.mubr.f32.gmra.mxu0 %v4013
      %v4015 = vpop.f32.mrf.mxu0
      %v4016 = vadd.f32 %v3743, %v4015
      %v4017 = vpop.f32.mrf.mxu0
      %4018 = vmatprep.mubr.f32.mxu0 0.0
      %v4019 = vand.u32 %v2162, 4294901760
      %4020 = vmatmul.mubr.f32.gmra.mxu0 %v4019
      %v4021 = vpop.f32.mrf.mxu0
      %v4022 = vadd.f32 %v3749, %v4021
      %v4023 = vpop.f32.mrf.mxu0
      %4024 = vmatprep.mubr.f32.mxu0 0.0
      %v4025 = vand.u32 %v2163, 4294901760
      %4026 = vmatmul.mubr.f32.gmra.mxu0 %v4025
      %v4027 = vpop.f32.mrf.mxu0
      %v4028 = vadd.f32 %v3755, %v4027
      %v4029 = vpop.f32.mrf.mxu0
      %4030 = vmatprep.mubr.f32.mxu0 0.0
      %v4031 = vand.u32 %v2164, 4294901760
      %4032 = vmatmul.mubr.f32.gmra.mxu0 %v4031
      %v4033 = vpop.f32.mrf.mxu0
      %v4034 = vadd.f32 %v3761, %v4033
      %v4035 = vpop.f32.mrf.mxu0
      %4036 = vmatprep.mubr.f32.mxu0 0.0
      %v4037 = vand.u32 %v2165, 4294901760
      %4038 = vmatmul.mubr.f32.gmra.mxu0 %v4037
      %v4039 = vpop.f32.mrf.mxu0
      %v4040 = vadd.f32 %v3767, %v4039
      %v4041 = vpop.f32.mrf.mxu0
      %4042 = vmatprep.mubr.f32.mxu0 0.0
      %v4043 = vand.u32 %v2166, 4294901760
      %4044 = vmatmul.mubr.f32.gmra.mxu0 %v4043
      %v4045 = vpop.f32.mrf.mxu0
      %v4046 = vadd.f32 %v3773, %v4045
      %v4047 = vpop.f32.mrf.mxu0
      %4048 = vmatprep.mubr.f32.mxu0 0.0
      %v4049 = vand.u32 %v2167, 4294901760
      %4050 = vmatmul.mubr.f32.gmra.mxu0 %v4049
      %v4051 = vpop.f32.mrf.mxu0
      %v4052 = vadd.f32 %v3779, %v4051
      %v4053 = vpop.f32.mrf.mxu0
      %4054 = vmatprep.mubr.f32.mxu0 0.0
      %v4055 = vand.u32 %v2168, 4294901760
      %4056 = vmatmul.mubr.f32.gmra.mxu0 %v4055
      %v4057 = vpop.f32.mrf.mxu0
      %v4058 = vadd.f32 %v3785, %v4057
      %v4059 = vpop.f32.mrf.mxu0
      %4060 = vmatprep.mubr.f32.mxu0 0.0
      %v4061 = vand.u32 %v2169, 4294901760
      %4062 = vmatmul.mubr.f32.gmra.mxu0 %v4061
      %v4063 = vpop.f32.mrf.mxu0
      %v4064 = vadd.f32 %v3791, %v4063
      %v4065 = vpop.f32.mrf.mxu0
      %4066 = vmatprep.mubr.f32.mxu0 0.0
      %v4067 = vand.u32 %v2170, 4294901760
      %4068 = vmatmul.mubr.f32.gmra.mxu0 %v4067
      %v4069 = vpop.f32.mrf.mxu0
      %v4070 = vadd.f32 %v3797, %v4069
      %v4071 = vpop.f32.mrf.mxu0
      %4072 = vmatprep.mubr.f32.mxu0 0.0
      %v4073 = vand.u32 %v2171, 4294901760
      %4074 = vmatmul.mubr.f32.gmra.mxu0 %v4073
      %v4075 = vpop.f32.mrf.mxu0
      %v4076 = vadd.f32 %v3803, %v4075
      %v4077 = vpop.f32.mrf.mxu0
      %4078 = vmatprep.mubr.f32.mxu0 0.0
      %v4079 = vand.u32 %v2172, 4294901760
      %4080 = vmatmul.mubr.f32.gmra.mxu0 %v4079
      %v4081 = vpop.f32.mrf.mxu0
      %v4082 = vadd.f32 %v3809, %v4081
      %v4083 = vpop.f32.mrf.mxu0
      %4084 = vmatprep.mubr.f32.mxu0 0.0
      %v4085 = vand.u32 %v2173, 4294901760
      %4086 = vmatmul.mubr.f32.gmra.mxu0 %v4085
      %v4087 = vpop.f32.mrf.mxu0
      %v4088 = vadd.f32 %v3815, %v4087
      %v4089 = vpop.f32.mrf.mxu0
      %4090 = vmatprep.mubr.f32.mxu0 0.0
      %v4091 = vand.u32 %v2174, 4294901760
      %4092 = vmatmul.mubr.f32.gmra.mxu0 %v4091
      %v4093 = vpop.f32.mrf.mxu0
      %v4094 = vadd.f32 %v3821, %v4093
      %v4095 = vpop.f32.mrf.mxu0
      %4096 = vmatprep.mubr.f32.mxu0 0.0
      %v4097 = vand.u32 %v2175, 4294901760
      %4098 = vmatmul.mubr.f32.gmra.mxu0 %v4097
      %v4099 = vpop.f32.mrf.mxu0
      %v4100 = vadd.f32 %v3827, %v4099
      %v4101 = vpop.f32.mrf.mxu0
      %4102 = vmatprep.mubr.f32.mxu0 0.0
      %v4103 = vand.u32 %v2176, 4294901760
      %4104 = vmatmul.mubr.f32.gmra.mxu0 %v4103
      %v4105 = vpop.f32.mrf.mxu0
      %v4106 = vadd.f32 %v3833, %v4105
      %v4107 = vpop.f32.mrf.mxu0
      %4108 = vmatprep.mubr.f32.mxu0 0.0
      %v4109 = vand.u32 %v2177, 4294901760
      %4110 = vmatmul.mubr.f32.gmra.mxu0 %v4109
      %v4111 = vpop.f32.mrf.mxu0
      %v4112 = vadd.f32 %v3839, %v4111
      %v4113 = vpop.f32.mrf.mxu0
      %4114 = vmatprep.mubr.f32.mxu0 0.0
      %v4115 = vand.u32 %v2178, 4294901760
      %4116 = vmatmul.mubr.f32.gmra.mxu0 %v4115
      %v4117 = vpop.f32.mrf.mxu0
      %v4118 = vadd.f32 %v3845, %v4117
      %v4119 = vpop.f32.mrf.mxu0
      %4120 = vmatprep.mubr.f32.mxu0 0.0
      %v4121 = vand.u32 %v2179, 4294901760
      %4122 = vmatmul.mubr.f32.gmra.mxu0 %v4121
      %v4123 = vpop.f32.mrf.mxu0
      %v4124 = vadd.f32 %v3851, %v4123
      %v4125 = vpop.f32.mrf.mxu0
      %4126 = vmatprep.mubr.f32.mxu0 0.0
      %v4127 = vand.u32 %v2180, 4294901760
      %4128 = vmatmul.mubr.f32.gmra.mxu0 %v4127
      %v4129 = vpop.f32.mrf.mxu0
      %v4130 = vadd.f32 %v3857, %v4129
      %v4131 = vpop.f32.mrf.mxu0
      %4132 = vmatprep.mubr.f32.mxu0 0.0
      %v4133 = vand.u32 %v2181, 4294901760
      %4134 = vmatmul.mubr.f32.gmra.mxu0 %v4133
      %v4135 = vpop.f32.mrf.mxu0
      %v4136 = vadd.f32 %v3863, %v4135
      %v4137 = vpop.f32.mrf.mxu0
      %4138 = vmatprep.mubr.f32.mxu0 0.0
      %v4139 = vand.u32 %v2182, 4294901760
      %4140 = vmatmul.mubr.f32.gmra.mxu0 %v4139
      %v4141 = vpop.f32.mrf.mxu0
      %v4142 = vadd.f32 %v3869, %v4141
      %v4143 = vpop.f32.mrf.mxu0
      %4144 = vmatprep.mubr.f32.mxu0 0.0
      %v4145 = vand.u32 %v2183, 4294901760
      %4146 = vmatmul.mubr.f32.gmra.mxu0 %v4145
      %v4147 = vpop.f32.mrf.mxu0
      %v4148 = vadd.f32 %v3875, %v4147
      %v4149 = vpop.f32.mrf.mxu0
      %4150 = vmatprep.mubr.f32.mxu0 0.0
      %v4151 = vand.u32 %v2184, 4294901760
      %4152 = vmatmul.mubr.f32.gmra.mxu0 %v4151
      %v4153 = vpop.f32.mrf.mxu0
      %v4154 = vadd.f32 %v3881, %v4153
      %v4155 = vpop.f32.mrf.mxu0
      %4156 = vmatprep.mubr.f32.mxu0 0.0
      %v4157 = vand.u32 %v2185, 4294901760
      %4158 = vmatmul.mubr.f32.gmra.mxu0 %v4157
      %v4159 = vpop.f32.mrf.mxu0
      %v4160 = vadd.f32 %v3887, %v4159
      %v4161 = vpop.f32.mrf.mxu0
      %4162 = vmatprep.mubr.f32.mxu0 0.0
      %v4163 = vand.u32 %v2186, 4294901760
      %4164 = vmatmul.mubr.f32.gmra.mxu0 %v4163
      %v4165 = vpop.f32.mrf.mxu0
      %v4166 = vadd.f32 %v3893, %v4165
      %v4167 = vpop.f32.mrf.mxu0
      %4168 = vmatprep.mubr.f32.mxu0 0.0
      %v4169 = vand.u32 %v2187, 4294901760
      %4170 = vmatmul.mubr.f32.gmra.mxu0 %v4169
      %v4171 = vpop.f32.mrf.mxu0
      %v4172 = vadd.f32 %v3899, %v4171
      %v4173 = vpop.f32.mrf.mxu0
      %4174 = vmatprep.mubr.f32.mxu0 0.0
      %v4175 = vand.u32 %v2188, 4294901760
      %4176 = vmatmul.mubr.f32.gmra.mxu0 %v4175
      %v4177 = vpop.f32.mrf.mxu0
      %v4178 = vadd.f32 %v3905, %v4177
      %v4179 = vpop.f32.mrf.mxu0
      %4180 = vmatprep.mubr.f32.mxu0 0.0
      %v4181 = vand.u32 %v2189, 4294901760
      %4182 = vmatmul.mubr.f32.gmra.mxu0 %v4181
      %v4183 = vpop.f32.mrf.mxu0
      %v4184 = vadd.f32 %v3911, %v4183
      %v4185 = vpop.f32.mrf.mxu0
      %4186 = vdwg.mxu0
      %4187 = vst.msk [vmem:[%s226] sm:$0xff] %vm269, %v3998
      %4188 = vst.msk [vmem:[%s226 + $0x8] sm:$0xff] %vm269, %v4004
      %4189 = vst.msk [vmem:[%s226 + $0x10] sm:$0xff] %vm269, %v4010
      %4190 = vst.msk [vmem:[%s226 + $0x18] sm:$0xff] %vm269, %v4016
      %4191 = vst.msk [vmem:[%s226 + $0x20] sm:$0xff] %vm269, %v4022
      %4192 = vst.msk [vmem:[%s226 + $0x28] sm:$0xff] %vm269, %v4028
      %4193 = vst.msk [vmem:[%s226 + $0x30] sm:$0xff] %vm269, %v4034
      %4194 = vst.msk [vmem:[%s226 + $0x38] sm:$0xff] %vm269, %v4040
      %4195 = vst.msk [vmem:[%s226 + $0x40] sm:$0xff] %vm269, %v4046
      %4196 = vst.msk [vmem:[%s226 + $0x48] sm:$0xff] %vm269, %v4052
      %4197 = vst.msk [vmem:[%s226 + $0x50] sm:$0xff] %vm269, %v4058
      %4198 = vst.msk [vmem:[%s226 + $0x58] sm:$0xff] %vm269, %v4064
      %4199 = vst.msk [vmem:[%s226 + $0x60] sm:$0xff] %vm269, %v4070
      %4200 = vst.msk [vmem:[%s226 + $0x68] sm:$0xff] %vm269, %v4076
      %4201 = vst.msk [vmem:[%s226 + $0x70] sm:$0xff] %vm269, %v4082
      %4202 = vst.msk [vmem:[%s226 + $0x78] sm:$0xff] %vm269, %v4088
      %4203 = vst.msk [vmem:[%s226 + $0x80] sm:$0xff] %vm269, %v4094
      %4204 = vst.msk [vmem:[%s226 + $0x88] sm:$0xff] %vm269, %v4100
      %4205 = vst.msk [vmem:[%s226 + $0x90] sm:$0xff] %vm269, %v4106
      %4206 = vst.msk [vmem:[%s226 + $0x98] sm:$0xff] %vm269, %v4112
      %4207 = vst.msk [vmem:[%s226 + $0xa0] sm:$0xff] %vm269, %v4118
      %4208 = vst.msk [vmem:[%s226 + $0xa8] sm:$0xff] %vm269, %v4124
      %4209 = vst.msk [vmem:[%s226 + $0xb0] sm:$0xff] %vm269, %v4130
      %4210 = vst.msk [vmem:[%s226 + $0xb8] sm:$0xff] %vm269, %v4136
      %4211 = vst.msk [vmem:[%s226 + $0xc0] sm:$0xff] %vm269, %v4142
      %4212 = vst.msk [vmem:[%s226 + $0xc8] sm:$0xff] %vm269, %v4148
      %4213 = vst.msk [vmem:[%s226 + $0xd0] sm:$0xff] %vm269, %v4154
      %4214 = vst.msk [vmem:[%s226 + $0xd8] sm:$0xff] %vm269, %v4160
      %4215 = vst.msk [vmem:[%s226 + $0xe0] sm:$0xff] %vm269, %v4166
      %4216 = vst.msk [vmem:[%s226 + $0xe8] sm:$0xff] %vm269, %v4172
      %4217 = vst.msk [vmem:[%s226 + $0xf0] sm:$0xff] %vm269, %v4178
      %4218 = vst.msk [vmem:[%s226 + $0xf8] sm:$0xff] %vm269, %v4184
      %s4219 = smul.u32 32, %s16
      %p4220 = scmp.lt.s32.totalorder %s4219, 63
      %s4221 = scalar_select %p4220, %s4219, 63
      %s4222 = smul.addr %s4221, 8
      %s4223 = scalar_lea.vmem %s5, %s4222
      // Predicated region
      $region41: #{tpu_custom_call.1} parent=39 // pred_check
        %p4224 = pneg %p144
      $region42: #{tpu_custom_call.1} parent=39 // pred_check_branch
        %4226 = sbr.rel (%p4224) target = $region44
      $region43: #{tpu_custom_call.1} parent=39 // pred_region
        %s4227 = smul.u32 32, %s16
      $region44: #{tpu_custom_call.1} parent=39 // pred_fallthru
        _
    $region40: #{tpu_custom_call.1} parent=5 // pred_fallthru
      _
    %p4228 = scmp.le.s32.totalorder 2, %s11
    // Predicated region
    $region45: #{tpu_custom_call.1} parent=5 // pred_check
      %p4229 = pneg %p4228
    $region46: #{tpu_custom_call.1} parent=5 // pred_check_branch
      %4231 = sbr.rel (%p4229) target = $region48
    $region47: #{tpu_custom_call.1} parent=5 // pred_region
      %s4232 = ssub.s32 %s11, 2
      // Predicated region
      $region49: #{tpu_custom_call.1} parent=47 // pred_check
        %p4233 = pneg %p150
      $region50: #{tpu_custom_call.1} parent=47 // pred_check_branch
        %4235 = sbr.rel (%p4233) target = $region52
      $region51: #{tpu_custom_call.1} parent=47 // pred_region
        %s4236 = smul.u32 32, %s17
        %p4237 = scmp.lt.s32.totalorder %s4236, 63
        %s4238 = scalar_select %p4237, %s4236, 63
        %s4239 = smul.addr %s4238, 8
        %s4240 = scalar_lea.vmem %s5, %s4239
      $region52: #{tpu_custom_call.1} parent=47 // pred_fallthru
        _
    $region48: #{tpu_custom_call.1} parent=5 // pred_fallthru
      _
  $region6: #{tpu_custom_call.1} parent=0 // loop_footer
    %s15 = sadd.s32 1, %s11
  $region7: #{tpu_custom_call.1} parent=0 // loop_footer_branch
    %10 = sbr.rel target = $region3
  $region8: #{tpu_custom_call.1} parent=0 // loop_exit
    _

</llo_original>
